<compile_context>
chip_gen: v5e
topology: v5e:2x2
jax: 0.10.0
libtpu: 0.0.40
codegen_flags: <defaults>
</compile_context>

<pallas_src>
import functools

import jax
import jax.numpy as jnp
from jax.experimental import pallas as pl
from jax.experimental.pallas import tpu as pltpu


def _round_up(x, m):
    return (x + m - 1) // m * m


def _pad_gate_cols(w, h, hp):
    """Pad a (..., 4*h) LSTM gate matrix to (..., 4*hp), per gate block (i,f,g,o)."""
    if h == hp:
        return w
    pads = [(0, 0)] * (w.ndim - 1) + [(0, hp - h)]
    parts = [jnp.pad(w[..., k * h:(k + 1) * h], pads) for k in range(4)]
    return jnp.concatenate(parts, axis=-1)


def _vmem_limit_bytes():
    """~96 MiB on v5e/v6e (128 MiB physical), ~48 MiB on v7x (64 MiB physical)."""
    try:
        cap = pltpu.get_tpu_info().vmem_capacity_bytes
    except Exception:
        cap = 64 << 20
    return int(max(min(0.75 * cap, 100 << 20), 32 << 20))


def _decoder_kernel(emb_ref, mem_ref, mask_ref, h0_ref, c0_ref,
                    wih_ref, bias_ref, whh_ref, wa_ref, woc_ref, woh_ref,
                    out_ref, attn_ref, hf_ref, cf_ref,
                    h_sc, c_sc, gin_sc, hs_sc,
                    *, t_block, n_blocks, n_tail):
    """One grid step == one block of t_block target positions."""
    blk = pl.program_id(0)
    B, Hp = h_sc.shape
    f32 = jnp.float32
    bf16 = jnp.bfloat16

    # Initialize recurrent state from the encoder-final state on the first block.
    @pl.when(blk == 0)
    def _():
        h_sc[...] = h0_ref[...]
        c_sc[...] = c0_ref[...]

    # --- block-wise input projection (off the serial h->h chain), f32 accum ---
    emb_bt = emb_ref[...]                                     # (B, t_block, Ep) bf16
    Ep = emb_bt.shape[-1]
    gin_bt = jnp.dot(emb_bt.reshape(B * t_block, Ep), wih_ref[...],
                     preferred_element_type=f32)              # aligned collapse (t_block%8==0)
    gin_sc[...] = (pltpu.einshape("btg->tbg", gin_bt.reshape(B, t_block, 4 * Hp))
                   + bias_ref[...])                           # (t_block, B, 4Hp) f32

    whh = whh_ref[...]                                        # (Hp, 4Hp) bf16, hoisted

    # --- sequential LSTM recurrence (PyTorch gate order i,f,g,o), f32 gate math ---
    def step(lt, carry):
        h_prev, c_prev = carry
        gates = gin_sc[lt] + jnp.dot(h_prev.astype(bf16), whh,
                                     preferred_element_type=f32)   # (B, 4Hp) f32
        i_g = jax.nn.sigmoid(gates[:, 0 * Hp:1 * Hp])
        f_g = jax.nn.sigmoid(gates[:, 1 * Hp:2 * Hp])
        g_g = jnp.tanh(gates[:, 2 * Hp:3 * Hp])
        o_g = jax.nn.sigmoid(gates[:, 3 * Hp:4 * Hp])
        c = f_g * c_prev + i_g * g_g
        h = o_g * jnp.tanh(c)
        hs_sc[lt] = h                                   # stash h_t for block attention
        return h, c

    def run_block(n_steps, is_tail):
        h_fin, c_fin = jax.lax.fori_loop(0, n_steps, step,
                                         (h_sc[...], c_sc[...]), unroll=True)
        h_sc[...] = h_fin
        c_sc[...] = c_fin
        if is_tail:
            hf_ref[...] = h_fin
            cf_ref[...] = c_fin

    # Only the last block can have padded timesteps; all other blocks run unmasked.
    if n_blocks > 1:
        @pl.when(blk < n_blocks - 1)
        def _():
            run_block(t_block, is_tail=False)

    @pl.when(blk == n_blocks - 1)
    def _():
        if n_tail < t_block:
            # Keep block attention well-defined on padded rows (sliced in the wrapper).
            hs_sc[...] = jnp.zeros_like(hs_sc)
        run_block(n_tail, is_tail=True)

    # --- GlobalAttention ("general") for the whole block, batched on the MXU ---
    hs_bth = pltpu.einshape("tbh->bth", hs_sc[...])            # (B, T, Hp) f32
    hs2 = hs_bth.reshape(B * t_block, Hp).astype(bf16)         # aligned collapse
    mem = mem_ref[...]                                         # (B, Sp, Hp) bf16

    q = jnp.dot(hs2, wa_ref[...], preferred_element_type=f32)  # linear_in
    q = q.reshape(B, t_block, Hp).astype(bf16)
    scores = jnp.einsum("bth,bsh->bts", q, mem,
                        preferred_element_type=f32)            # (B, T, Sp) f32
    scores = scores + mask_ref[...][:, None, :]
    m = jnp.max(scores, axis=-1, keepdims=True)
    e = jnp.exp(scores - m)
    denom = jnp.sum(e, axis=-1, keepdims=True)
    align = e * pl.reciprocal(denom, approx=True)              # softmax (EUP slot)
    ctx = jnp.einsum("bts,bsh->bth", align.astype(bf16), mem,
                     preferred_element_type=f32)               # (B, T, Hp) f32

    # linear_out([ctx; h]) split into two matmuls (no in-kernel concat), then tanh.
    attn_h = jnp.tanh(
        jnp.dot(ctx.reshape(B * t_block, Hp).astype(bf16), woc_ref[...],
                preferred_element_type=f32)
        + jnp.dot(hs2, woh_ref[...], preferred_element_type=f32)
    ).reshape(B, t_block, Hp)

    # Store directly in (T, B, *) layout — no wrapper-side HBM transpose round trip.
    out_ref[...] = pltpu.einshape("bth->tbh", attn_h)
    attn_ref[...] = pltpu.einshape("bts->tbs", align).astype(bf16)


def rnn_decoder_forward(tgt, memory_bank, encoder_final, memory_lengths, params,
                        *, t_block=32, single_buffer_consts=True):
    """Mirrors RNNDecoderBase.forward for the StdRNNDecoder/LSTM/general-attn case.

    Returns (decoder_outputs [T,B,H], state_dict, attns {"std": [T,B,S]}).
    """
    T, B, _ = tgt.shape
    S, mem_b, H = memory_bank.shape
    assert B == mem_b                       # aeq(tgt_batch, memory_batch)
    E = params["embedding"].shape[1]

    Hp = _round_up(H, 128)                  # lane-dense hidden
    Ep = _round_up(E, 128)                  # lane-dense embedding
    Sp = _round_up(S, 128)                  # lane-dense src
    t_block = max(8, min(_round_up(t_block, 8), _round_up(T, 8)))
    Tp = _round_up(T, t_block)
    nblk = Tp // t_block
    n_tail = T - (nblk - 1) * t_block       # valid steps in the last block (static)

    f32 = jnp.float32
    bf16 = jnp.bfloat16

    # init_decoder_state (bidirectional_encoder=False -> no _fix_enc_hidden reshuffle)
    h0 = jnp.pad(encoder_final[0][0], ((0, 0), (0, Hp - H))).astype(f32)
    c0 = jnp.pad(encoder_final[1][0], ((0, 0), (0, Hp - H))).astype(f32)

    # Zero-pad parameters to lane-aligned sizes (per-gate for the LSTM matrices);
    # all MXU operands go to bf16, bias stays f32 (added in f32 after the matmul).
    w_ih = _pad_gate_cols(jnp.pad(params["w_ih_T"], ((0, Ep - E), (0, 0))), H, Hp).astype(bf16)
    w_hh = _pad_gate_cols(jnp.pad(params["w_hh_T"], ((0, Hp - H), (0, 0))), H, Hp).astype(bf16)
    bias = _pad_gate_cols(params["bias"], H, Hp).astype(f32)                  # (1, 4Hp)
    w_a = jnp.pad(params["w_a"], ((0, Hp - H), (0, Hp - H))).astype(bf16)
    w_oc = jnp.pad(params["w_out_ctx"], ((0, Hp - H), (0, Hp - H))).astype(bf16)
    w_oh = jnp.pad(params["w_out_h"], ((0, Hp - H), (0, Hp - H))).astype(bf16)

    # Embedding lookup stays in the wrapper (gather); the 4Hp-wide input projection
    # now happens inside the kernel, so only E-wide bf16 embeddings cross HBM.
    emb = params["embedding"][tgt[:, :, 0].T].astype(bf16)                    # (B, T, E)
    emb = jnp.pad(emb, ((0, 0), (0, Tp - T), (0, Ep - E)))                    # (B, Tp, Ep)

    mem = jnp.transpose(memory_bank, (1, 0, 2))                               # (B, S, H)
    mem = jnp.pad(mem, ((0, 0), (0, Sp - S), (0, Hp - H))).astype(bf16)       # (B, Sp, Hp)
    mask = jnp.where(jnp.arange(Sp)[None, :] < memory_lengths[:, None],
                     0.0, -1e9).astype(f32)                                   # (B, Sp)

    # Constant-index (resident) operands: single-buffer to halve their VMEM footprint.
    def const_in(shape):
        if single_buffer_consts:
            return pl.BlockSpec(shape, lambda i: (0,) * len(shape),
                                pipeline_mode=pl.Buffered(buffer_count=1))
        return pl.BlockSpec(shape, lambda i: (0,) * len(shape))

    def const_out(shape):
        return pl.BlockSpec(shape, lambda i: (0,) * len(shape))

    # TODO(synk): when B*Sp*Hp (bf16) approaches ~1/4 of VMEM (v7x: 64 MiB), stream the
    # memory bank in S-chunks flash-style (pl.ANY + make_async_copy, online softmax).
    # TODO(synk): on v7x, split recurrence and attention into two pallas_calls and mark
    # the attention T-axis "parallel" to use the second TensorCore.
    # TODO(synk): for B < 8 production decode, fold beams/extra sequences into the batch
    # dim so the (B, Hp) recurrent state fills full (8,128) vregs.
    grid_spec = pltpu.PrefetchScalarGridSpec(
        num_scalar_prefetch=0,
        grid=(nblk,),
        in_specs=[
            pl.BlockSpec((B, t_block, Ep), lambda i: (0, i, 0)),  # embeddings (streamed)
            const_in((B, Sp, Hp)),                                # memory bank (resident)
            const_in((B, Sp)),                                    # additive src mask
            const_in((B, Hp)),                                    # h0
            const_in((B, Hp)),                                    # c0
            const_in((Ep, 4 * Hp)),                               # W_ih^T
            const_in((1, 4 * Hp)),                                # bias
            const_in((Hp, 4 * Hp)),                               # W_hh^T
            const_in((Hp, Hp)),                                   # W_a (linear_in)
            const_in((Hp, Hp)),                                   # linear_out ctx part
            const_in((Hp, Hp)),                                   # linear_out h part
        ],
        out_specs=[
            pl.BlockSpec((t_block, B, Hp), lambda i: (i, 0, 0)),  # decoder outputs (Tp,B,Hp)
            pl.BlockSpec((t_block, B, Sp), lambda i: (i, 0, 0)),  # attns["std"]    (Tp,B,Sp)
            const_out((B, Hp)),                                   # final h
            const_out((B, Hp)),                                   # final c
        ],
        scratch_shapes=[
            pltpu.VMEM((B, Hp), f32),                             # h state
            pltpu.VMEM((B, Hp), f32),                             # c state
            pltpu.VMEM((t_block, B, 4 * Hp), f32),                # projected gate inputs
            pltpu.VMEM((t_block, B, Hp), f32),                    # h stack for block attn
        ],
    )

    out_shapes = (
        jax.ShapeDtypeStruct((Tp, B, Hp), f32),
        jax.ShapeDtypeStruct((Tp, B, Sp), bf16),   # attention probs: bf16 writeback
        jax.ShapeDtypeStruct((B, Hp), f32),
        jax.ShapeDtypeStruct((B, Hp), f32),
    )

    kernel = functools.partial(_decoder_kernel, t_block=t_block,
                               n_blocks=nblk, n_tail=n_tail)

    out_tb, attn_tb, h_fin, c_fin = pl.pallas_call(
        kernel,
        out_shape=out_shapes,
        grid_spec=grid_spec,
        compiler_params=pltpu.CompilerParams(
            dimension_semantics=("arbitrary",),      # sequential recurrence
            vmem_limit_bytes=_vmem_limit_bytes()),
    )(emb, mem, mask, h0, c0, w_ih, bias, w_hh, w_a, w_oc, w_oh)

    dec_out = out_tb[:T, :, :H]                                  # (T, B, H) — no transpose
    attn_std = attn_tb[:T, :, :S].astype(f32)                    # (T, B, S)
    h_fin = h_fin[:, :H]
    c_fin = c_fin[:, :H]

    # state.update_state(decoder_final, final_output, coverage=None)
    state = {
        "hidden": (h_fin[None], c_fin[None]),        # (num_layers, B, H) each
        "input_feed": dec_out[-1][None],             # (1, B, H)
        "coverage": None,
    }
    attns = {"std": attn_std}
    return dec_out, state, attns


def _reference_forward(tgt, memory_bank, encoder_final, memory_lengths, params):
    """Pure-JAX f32 reference for the same forward pass (for a sanity check)."""
    emb = params["embedding"][tgt[:, :, 0]]
    mem_bsh = jnp.transpose(memory_bank, (1, 0, 2))
    src_len = memory_bank.shape[0]
    mask = jnp.where(jnp.arange(src_len)[None, :] < memory_lengths[:, None], 0.0, -1e9)
    H = params["w_hh_T"].shape[0]

    def step(carry, x_t):
        h, c = carry
        gates = x_t @ params["w_ih_T"] + h @ params["w_hh_T"] + params["bias"]
        i = jax.nn.sigmoid(gates[:, :H])
        f = jax.nn.sigmoid(gates[:, H:2 * H])
        g = jnp.tanh(gates[:, 2 * H:3 * H])
        o = jax.nn.sigmoid(gates[:, 3 * H:])
        c = f * c + i * g
        h = o * jnp.tanh(c)
        q = h @ params["w_a"]
        scores = jnp.einsum("bh,bsh->bs", q, mem_bsh) + mask
        align = jax.nn.softmax(scores, axis=-1)
        ctx = jnp.einsum("bs,bsh->bh", align, mem_bsh)
        out = jnp.tanh(ctx @ params["w_out_ctx"] + h @ params["w_out_h"])
        return (h, c), (out, align)

    (hT, cT), (outs, aligns) = jax.lax.scan(
        step, (encoder_final[0][0], encoder_final[1][0]), emb)
    return outs, aligns, hT, cT


def _make_params(key, vocab, emb_dim, hidden):
    ks = jax.random.split(key, 7)
    s = 0.1
    return {
        "embedding": (s * jax.random.normal(ks[0], (vocab, emb_dim))).astype(jnp.float32),
        "w_ih_T": (s * jax.random.normal(ks[1], (emb_dim, 4 * hidden))).astype(jnp.float32),
        "w_hh_T": (s * jax.random.normal(ks[2], (hidden, 4 * hidden))).astype(jnp.float32),
        "bias": (s * jax.random.normal(ks[3], (1, 4 * hidden))).astype(jnp.float32),
        "w_a": (s * jax.random.normal(ks[4], (hidden, hidden))).astype(jnp.float32),
        "w_out_ctx": (s * jax.random.normal(ks[5], (hidden, hidden))).astype(jnp.float32),
        "w_out_h": (s * jax.random.normal(ks[6], (hidden, hidden))).astype(jnp.float32),
    }


if __name__ == "__main__":
    # TODO(synk): coverage_attn / context_gate / copy_attn / hier_attn branches are
    # off by default in the module config and are not implemented here.
    vocab, emb_dim, hidden = 50, 32, 32
    tgt_len, batch, src_len = 8, 2, 10

    key = jax.random.PRNGKey(0)
    k_p, k_tgt, k_mem, k_h, k_c = jax.random.split(key, 5)

    params = _make_params(k_p, vocab, emb_dim, hidden)
    tgt = jax.random.randint(k_tgt, (tgt_len, batch, 1), 0, vocab, dtype=jnp.int32)
    memory_bank = (0.1 * jax.random.normal(k_mem, (src_len, batch, hidden))).astype(jnp.float32)
    encoder_final = (
        (0.1 * jax.random.normal(k_h, (1, batch, hidden))).astype(jnp.float32),
        (0.1 * jax.random.normal(k_c, (1, batch, hidden))).astype(jnp.float32),
    )
    memory_lengths = jnp.array([src_len, 7], dtype=jnp.int32)

    def run(single_buffer_consts):
        fn = jax.jit(functools.partial(rnn_decoder_forward,
                                       single_buffer_consts=single_buffer_consts))
        dec_out, state, attns = fn(tgt, memory_bank, encoder_final,
                                   memory_lengths, params)
        jax.block_until_ready(dec_out)
        return dec_out, state, attns

    try:
        dec_out, state, attns = run(True)
    except Exception:
        # Fallback if this JAX build rejects single-buffered (pl.Buffered(1)) operands.
        dec_out, state, attns = run(False)

    # Sanity check against a pure-JAX f32 reference of the same math.
    ref_out, ref_attn, ref_h, ref_c = jax.jit(_reference_forward)(
        tgt, memory_bank, encoder_final, memory_lengths, params)
    assert dec_out.shape == (tgt_len, batch, hidden)
    assert attns["std"].shape == (tgt_len, batch, src_len)
    assert jnp.allclose(dec_out, ref_out, atol=2e-2, rtol=2e-2)
    assert jnp.allclose(attns["std"], ref_attn, atol=2e-2, rtol=2e-2)
    assert jnp.allclose(state["hidden"][0][0], ref_h, atol=2e-2, rtol=2e-2)
    assert jnp.allclose(state["hidden"][1][0], ref_c, atol=2e-2, rtol=2e-2)

    print("KERNEL_OK")
</pallas_src>

<mosaic_0001>
module attributes {stable_mosaic.version = 11 : i64} {
  func.func @_decoder_kernel(%arg0: i32, %arg1: memref<2x8x128xbf16, #tpu.memory_space<vmem>>, %arg2: memref<2x128x128xbf16, #tpu.memory_space<vmem>>, %arg3: memref<2x128xf32, #tpu.memory_space<vmem>>, %arg4: memref<2x128xf32, #tpu.memory_space<vmem>>, %arg5: memref<2x128xf32, #tpu.memory_space<vmem>>, %arg6: memref<128x512xbf16, #tpu.memory_space<vmem>>, %arg7: memref<1x512xf32, #tpu.memory_space<vmem>>, %arg8: memref<128x512xbf16, #tpu.memory_space<vmem>>, %arg9: memref<128x128xbf16, #tpu.memory_space<vmem>>, %arg10: memref<128x128xbf16, #tpu.memory_space<vmem>>, %arg11: memref<128x128xbf16, #tpu.memory_space<vmem>>, %arg12: memref<8x2x128xf32, #tpu.memory_space<vmem>>, %arg13: memref<8x2x128xbf16, #tpu.memory_space<vmem>>, %arg14: memref<2x128xf32, #tpu.memory_space<vmem>>, %arg15: memref<2x128xf32, #tpu.memory_space<vmem>>, %arg16: memref<2x128xf32, #tpu.memory_space<vmem>>, %arg17: memref<2x128xf32, #tpu.memory_space<vmem>>, %arg18: memref<8x2x512xf32, #tpu.memory_space<vmem>>, %arg19: memref<8x2x128xf32, #tpu.memory_space<vmem>>) attributes {dimension_semantics = [#tpu.dimension_semantics<arbitrary>], iteration_bounds = array<i64: 1>, scalar_prefetch = 0 : i64, scratch_operands = 4 : i64, tpu.core_type = #tpu.core_type<tc>, window_params = [{transform_indices = @transform_0, window_bounds = array<i64: 2, 8, 128>}, {pipeline_mode = #tpu.pipeline_mode<synchronous>, transform_indices = @transform_1, window_bounds = array<i64: 2, 128, 128>}, {pipeline_mode = #tpu.pipeline_mode<synchronous>, transform_indices = @transform_2, window_bounds = array<i64: 2, 128>}, {pipeline_mode = #tpu.pipeline_mode<synchronous>, transform_indices = @transform_3, window_bounds = array<i64: 2, 128>}, {pipeline_mode = #tpu.pipeline_mode<synchronous>, transform_indices = @transform_4, window_bounds = array<i64: 2, 128>}, {pipeline_mode = #tpu.pipeline_mode<synchronous>, transform_indices = @transform_5, window_bounds = array<i64: 128, 512>}, {pipeline_mode = #tpu.pipeline_mode<synchronous>, transform_indices = @transform_6, window_bounds = array<i64: 1, 512>}, {pipeline_mode = #tpu.pipeline_mode<synchronous>, transform_indices = @transform_7, window_bounds = array<i64: 128, 512>}, {pipeline_mode = #tpu.pipeline_mode<synchronous>, transform_indices = @transform_8, window_bounds = array<i64: 128, 128>}, {pipeline_mode = #tpu.pipeline_mode<synchronous>, transform_indices = @transform_9, window_bounds = array<i64: 128, 128>}, {pipeline_mode = #tpu.pipeline_mode<synchronous>, transform_indices = @transform_10, window_bounds = array<i64: 128, 128>}, {transform_indices = @transform_11, window_bounds = array<i64: 8, 2, 128>}, {transform_indices = @transform_12, window_bounds = array<i64: 8, 2, 128>}, {pipeline_mode = #tpu.pipeline_mode<synchronous>, transform_indices = @transform_13, window_bounds = array<i64: 2, 128>}, {pipeline_mode = #tpu.pipeline_mode<synchronous>, transform_indices = @transform_14, window_bounds = array<i64: 2, 128>}]} {
    %c0_i32 = arith.constant 0 : i32
    %0 = arith.cmpi eq, %arg0, %c0_i32 : i32
    %1 = arith.extui %0 : i1 to i32
    %c0_i32_0 = arith.constant 0 : i32
    %2 = arith.cmpi ne, %1, %c0_i32_0 : i32
    scf.if %2 {
      %c0_41 = arith.constant 0 : index
      %c0_42 = arith.constant 0 : index
      %58 = vector.load %arg4[%c0_41, %c0_42] : memref<2x128xf32, #tpu.memory_space<vmem>>, vector<2x128xf32>
      %c0_43 = arith.constant 0 : index
      %c0_44 = arith.constant 0 : index
      %59 = vector.load %arg16[%c0_43, %c0_44] : memref<2x128xf32, #tpu.memory_space<vmem>>, vector<2x128xf32>
      tpu.vector_store %arg16[%c0_43, %c0_44], %58 {strides = array<i32>} : memref<2x128xf32, #tpu.memory_space<vmem>>, vector<2x128xf32>,
      %c0_45 = arith.constant 0 : index
      %c0_46 = arith.constant 0 : index
      %60 = vector.load %arg5[%c0_45, %c0_46] : memref<2x128xf32, #tpu.memory_space<vmem>>, vector<2x128xf32>
      %c0_47 = arith.constant 0 : index
      %c0_48 = arith.constant 0 : index
      %61 = vector.load %arg17[%c0_47, %c0_48] : memref<2x128xf32, #tpu.memory_space<vmem>>, vector<2x128xf32>
      tpu.vector_store %arg17[%c0_47, %c0_48], %60 {strides = array<i32>} : memref<2x128xf32, #tpu.memory_space<vmem>>, vector<2x128xf32>,
    } else {
    }
    %c0 = arith.constant 0 : index
    %c0_1 = arith.constant 0 : index
    %c0_2 = arith.constant 0 : index
    %3 = vector.load %arg1[%c0, %c0_1, %c0_2] : memref<2x8x128xbf16, #tpu.memory_space<vmem>>, vector<2x8x128xbf16>
    %4 = vector.shape_cast %3 : vector<2x8x128xbf16> to vector<16x128xbf16>
    %c0_3 = arith.constant 0 : index
    %c0_4 = arith.constant 0 : index
    %5 = vector.load %arg6[%c0_3, %c0_4] : memref<128x512xbf16, #tpu.memory_space<vmem>>, vector<128x512xbf16>
    %cst = arith.constant dense<0.000000e+00> : vector<16x512xf32>
    %6 = tpu.matmul %4, %5, %cst {dimension_numbers = #tpu.dot_dimension_numbers<[1], [0], [0], [1], [0, 0, 1, 1], [], []>} : vector<16x128xbf16>, vector<128x512xbf16>, vector<16x512xf32> -> vector<16x512xf32>
    %7 = vector.shape_cast %6 : vector<16x512xf32> to vector<2x8x512xf32>
    %8 = tpu.transpose %7, [1, 0, 2] : vector<2x8x512xf32> -> vector<8x2x512xf32>
    %c0_5 = arith.constant 0 : index
    %c0_6 = arith.constant 0 : index
    %9 = vector.load %arg7[%c0_5, %c0_6] : memref<1x512xf32, #tpu.memory_space<vmem>>, vector<1x512xf32>
    %10 = vector.shape_cast %9 : vector<1x512xf32> to vector<1x1x512xf32>
    %11 = vector.broadcast %10 : vector<1x1x512xf32> to vector<8x2x512xf32>
    %12 = arith.addf %8, %11 : vector<8x2x512xf32>
    %c0_7 = arith.constant 0 : index
    %c0_8 = arith.constant 0 : index
    %c0_9 = arith.constant 0 : index
    %13 = vector.load %arg18[%c0_7, %c0_8, %c0_9] : memref<8x2x512xf32, #tpu.memory_space<vmem>>, vector<8x2x512xf32>
    tpu.vector_store %arg18[%c0_7, %c0_8, %c0_9], %12 {strides = array<i32>} : memref<8x2x512xf32, #tpu.memory_space<vmem>>, vector<8x2x512xf32>,
    %c0_10 = arith.constant 0 : index
    %c0_11 = arith.constant 0 : index
    %14 = vector.load %arg8[%c0_10, %c0_11] : memref<128x512xbf16, #tpu.memory_space<vmem>>, vector<128x512xbf16>
    %c0_i32_12 = arith.constant 0 : i32
    %15 = arith.cmpi eq, %arg0, %c0_i32_12 : i32
    %16 = arith.extui %15 : i1 to i32
    %c0_i32_13 = arith.constant 0 : i32
    %17 = arith.cmpi ne, %16, %c0_i32_13 : i32
    scf.if %17 {
      %c0_41 = arith.constant 0 : index
      %c0_42 = arith.constant 0 : index
      %58 = vector.load %arg16[%c0_41, %c0_42] : memref<2x128xf32, #tpu.memory_space<vmem>>, vector<2x128xf32>
      %c0_43 = arith.constant 0 : index
      %c0_44 = arith.constant 0 : index
      %59 = vector.load %arg17[%c0_43, %c0_44] : memref<2x128xf32, #tpu.memory_space<vmem>>, vector<2x128xf32>
      %c0_i32_45 = arith.constant 0 : i32
      %60 = arith.index_cast %c0_i32_45 : i32 to index
      %c0_46 = arith.constant 0 : index
      %c0_47 = arith.constant 0 : index
      %61 = vector.load %arg18[%60, %c0_46, %c0_47] : memref<8x2x512xf32, #tpu.memory_space<vmem>>, vector<1x2x512xf32>
      %62 = vector.shape_cast %61 : vector<1x2x512xf32> to vector<2x512xf32>
      %63 = arith.truncf %58 : vector<2x128xf32> to vector<2x128xbf16>
      %cst_48 = arith.constant dense<0.000000e+00> : vector<2x512xf32>
      %64 = tpu.matmul %63, %14, %cst_48 {dimension_numbers = #tpu.dot_dimension_numbers<[1], [0], [0], [1], [0, 0, 1, 1], [], []>} : vector<2x128xbf16>, vector<128x512xbf16>, vector<2x512xf32> -> vector<2x512xf32>
      %65 = arith.addf %62, %64 : vector<2x512xf32>
      %66 = vector.extract_strided_slice %65 {offsets = [0, 0], sizes = [2, 128], strides = [1, 1]} : vector<2x512xf32> to vector<2x128xf32>
      %67 = arith.negf %66 : vector<2x128xf32>
      %68 = math.exp %67 : vector<2x128xf32>
      %cst_49 = arith.constant 1.000000e+00 : f32
      %69 = vector.broadcast %cst_49 : f32 to vector<2x128xf32>
      %70 = arith.addf %69, %68 : vector<2x128xf32>
      %71 = arith.divf %69, %70 : vector<2x128xf32>
      %72 = vector.extract_strided_slice %65 {offsets = [0, 128], sizes = [2, 128], strides = [1, 1]} : vector<2x512xf32> to vector<2x128xf32>
      %73 = arith.negf %72 : vector<2x128xf32>
      %74 = math.exp %73 : vector<2x128xf32>
      %cst_50 = arith.constant 1.000000e+00 : f32
      %75 = vector.broadcast %cst_50 : f32 to vector<2x128xf32>
      %76 = arith.addf %75, %74 : vector<2x128xf32>
      %77 = arith.divf %75, %76 : vector<2x128xf32>
      %78 = vector.extract_strided_slice %65 {offsets = [0, 256], sizes = [2, 128], strides = [1, 1]} : vector<2x512xf32> to vector<2x128xf32>
      %79 = math.tanh %78 : vector<2x128xf32>
      %80 = vector.extract_strided_slice %65 {offsets = [0, 384], sizes = [2, 128], strides = [1, 1]} : vector<2x512xf32> to vector<2x128xf32>
      %81 = arith.negf %80 : vector<2x128xf32>
      %82 = math.exp %81 : vector<2x128xf32>
      %cst_51 = arith.constant 1.000000e+00 : f32
      %83 = vector.broadcast %cst_51 : f32 to vector<2x128xf32>
      %84 = arith.addf %83, %82 : vector<2x128xf32>
      %85 = arith.divf %83, %84 : vector<2x128xf32>
      %86 = arith.mulf %77, %59 : vector<2x128xf32>
      %87 = arith.mulf %71, %79 : vector<2x128xf32>
      %88 = arith.addf %86, %87 : vector<2x128xf32>
      %89 = math.tanh %88 : vector<2x128xf32>
      %90 = arith.mulf %85, %89 : vector<2x128xf32>
      %91 = arith.index_cast %c0_i32_45 : i32 to index
      %c0_52 = arith.constant 0 : index
      %c0_53 = arith.constant 0 : index
      %92 = vector.load %arg19[%91, %c0_52, %c0_53] : memref<8x2x128xf32, #tpu.memory_space<vmem>>, vector<1x2x128xf32>
      %93 = vector.shape_cast %92 : vector<1x2x128xf32> to vector<2x128xf32>
      %94 = vector.shape_cast %90 : vector<2x128xf32> to vector<1x2x128xf32>
      tpu.vector_store %arg19[%91, %c0_52, %c0_53], %94 {strides = array<i32>} : memref<8x2x128xf32, #tpu.memory_space<vmem>>, vector<1x2x128xf32>,
      %c1_i32 = arith.constant 1 : i32
      %95 = arith.index_cast %c1_i32 : i32 to index
      %c0_54 = arith.constant 0 : index
      %c0_55 = arith.constant 0 : index
      %96 = vector.load %arg18[%95, %c0_54, %c0_55] : memref<8x2x512xf32, #tpu.memory_space<vmem>>, vector<1x2x512xf32>
      %97 = vector.shape_cast %96 : vector<1x2x512xf32> to vector<2x512xf32>
      %98 = arith.truncf %90 : vector<2x128xf32> to vector<2x128xbf16>
      %cst_56 = arith.constant dense<0.000000e+00> : vector<2x512xf32>
      %99 = tpu.matmul %98, %14, %cst_56 {dimension_numbers = #tpu.dot_dimension_numbers<[1], [0], [0], [1], [0, 0, 1, 1], [], []>} : vector<2x128xbf16>, vector<128x512xbf16>, vector<2x512xf32> -> vector<2x512xf32>
      %100 = arith.addf %97, %99 : vector<2x512xf32>
      %101 = vector.extract_strided_slice %100 {offsets = [0, 0], sizes = [2, 128], strides = [1, 1]} : vector<2x512xf32> to vector<2x128xf32>
      %102 = arith.negf %101 : vector<2x128xf32>
      %103 = math.exp %102 : vector<2x128xf32>
      %cst_57 = arith.constant 1.000000e+00 : f32
      %104 = vector.broadcast %cst_57 : f32 to vector<2x128xf32>
      %105 = arith.addf %104, %103 : vector<2x128xf32>
      %106 = arith.divf %104, %105 : vector<2x128xf32>
      %107 = vector.extract_strided_slice %100 {offsets = [0, 128], sizes = [2, 128], strides = [1, 1]} : vector<2x512xf32> to vector<2x128xf32>
      %108 = arith.negf %107 : vector<2x128xf32>
      %109 = math.exp %108 : vector<2x128xf32>
      %cst_58 = arith.constant 1.000000e+00 : f32
      %110 = vector.broadcast %cst_58 : f32 to vector<2x128xf32>
      %111 = arith.addf %110, %109 : vector<2x128xf32>
      %112 = arith.divf %110, %111 : vector<2x128xf32>
      %113 = vector.extract_strided_slice %100 {offsets = [0, 256], sizes = [2, 128], strides = [1, 1]} : vector<2x512xf32> to vector<2x128xf32>
      %114 = math.tanh %113 : vector<2x128xf32>
      %115 = vector.extract_strided_slice %100 {offsets = [0, 384], sizes = [2, 128], strides = [1, 1]} : vector<2x512xf32> to vector<2x128xf32>
      %116 = arith.negf %115 : vector<2x128xf32>
      %117 = math.exp %116 : vector<2x128xf32>
      %cst_59 = arith.constant 1.000000e+00 : f32
      %118 = vector.broadcast %cst_59 : f32 to vector<2x128xf32>
      %119 = arith.addf %118, %117 : vector<2x128xf32>
      %120 = arith.divf %118, %119 : vector<2x128xf32>
      %121 = arith.mulf %112, %88 : vector<2x128xf32>
      %122 = arith.mulf %106, %114 : vector<2x128xf32>
      %123 = arith.addf %121, %122 : vector<2x128xf32>
      %124 = math.tanh %123 : vector<2x128xf32>
      %125 = arith.mulf %120, %124 : vector<2x128xf32>
      %126 = arith.index_cast %c1_i32 : i32 to index
      %c0_60 = arith.constant 0 : index
      %c0_61 = arith.constant 0 : index
      %127 = vector.load %arg19[%126, %c0_60, %c0_61] : memref<8x2x128xf32, #tpu.memory_space<vmem>>, vector<1x2x128xf32>
      %128 = vector.shape_cast %127 : vector<1x2x128xf32> to vector<2x128xf32>
      %129 = vector.shape_cast %125 : vector<2x128xf32> to vector<1x2x128xf32>
      tpu.vector_store %arg19[%126, %c0_60, %c0_61], %129 {strides = array<i32>} : memref<8x2x128xf32, #tpu.memory_space<vmem>>, vector<1x2x128xf32>,
      %c2_i32 = arith.constant 2 : i32
      %130 = arith.index_cast %c2_i32 : i32 to index
      %c0_62 = arith.constant 0 : index
      %c0_63 = arith.constant 0 : index
      %131 = vector.load %arg18[%130, %c0_62, %c0_63] : memref<8x2x512xf32, #tpu.memory_space<vmem>>, vector<1x2x512xf32>
      %132 = vector.shape_cast %131 : vector<1x2x512xf32> to vector<2x512xf32>
      %133 = arith.truncf %125 : vector<2x128xf32> to vector<2x128xbf16>
      %cst_64 = arith.constant dense<0.000000e+00> : vector<2x512xf32>
      %134 = tpu.matmul %133, %14, %cst_64 {dimension_numbers = #tpu.dot_dimension_numbers<[1], [0], [0], [1], [0, 0, 1, 1], [], []>} : vector<2x128xbf16>, vector<128x512xbf16>, vector<2x512xf32> -> vector<2x512xf32>
      %135 = arith.addf %132, %134 : vector<2x512xf32>
      %136 = vector.extract_strided_slice %135 {offsets = [0, 0], sizes = [2, 128], strides = [1, 1]} : vector<2x512xf32> to vector<2x128xf32>
      %137 = arith.negf %136 : vector<2x128xf32>
      %138 = math.exp %137 : vector<2x128xf32>
      %cst_65 = arith.constant 1.000000e+00 : f32
      %139 = vector.broadcast %cst_65 : f32 to vector<2x128xf32>
      %140 = arith.addf %139, %138 : vector<2x128xf32>
      %141 = arith.divf %139, %140 : vector<2x128xf32>
      %142 = vector.extract_strided_slice %135 {offsets = [0, 128], sizes = [2, 128], strides = [1, 1]} : vector<2x512xf32> to vector<2x128xf32>
      %143 = arith.negf %142 : vector<2x128xf32>
      %144 = math.exp %143 : vector<2x128xf32>
      %cst_66 = arith.constant 1.000000e+00 : f32
      %145 = vector.broadcast %cst_66 : f32 to vector<2x128xf32>
      %146 = arith.addf %145, %144 : vector<2x128xf32>
      %147 = arith.divf %145, %146 : vector<2x128xf32>
      %148 = vector.extract_strided_slice %135 {offsets = [0, 256], sizes = [2, 128], strides = [1, 1]} : vector<2x512xf32> to vector<2x128xf32>
      %149 = math.tanh %148 : vector<2x128xf32>
      %150 = vector.extract_strided_slice %135 {offsets = [0, 384], sizes = [2, 128], strides = [1, 1]} : vector<2x512xf32> to vector<2x128xf32>
      %151 = arith.negf %150 : vector<2x128xf32>
      %152 = math.exp %151 : vector<2x128xf32>
      %cst_67 = arith.constant 1.000000e+00 : f32
      %153 = vector.broadcast %cst_67 : f32 to vector<2x128xf32>
      %154 = arith.addf %153, %152 : vector<2x128xf32>
      %155 = arith.divf %153, %154 : vector<2x128xf32>
      %156 = arith.mulf %147, %123 : vector<2x128xf32>
      %157 = arith.mulf %141, %149 : vector<2x128xf32>
      %158 = arith.addf %156, %157 : vector<2x128xf32>
      %159 = math.tanh %158 : vector<2x128xf32>
      %160 = arith.mulf %155, %159 : vector<2x128xf32>
      %161 = arith.index_cast %c2_i32 : i32 to index
      %c0_68 = arith.constant 0 : index
      %c0_69 = arith.constant 0 : index
      %162 = vector.load %arg19[%161, %c0_68, %c0_69] : memref<8x2x128xf32, #tpu.memory_space<vmem>>, vector<1x2x128xf32>
      %163 = vector.shape_cast %162 : vector<1x2x128xf32> to vector<2x128xf32>
      %164 = vector.shape_cast %160 : vector<2x128xf32> to vector<1x2x128xf32>
      tpu.vector_store %arg19[%161, %c0_68, %c0_69], %164 {strides = array<i32>} : memref<8x2x128xf32, #tpu.memory_space<vmem>>, vector<1x2x128xf32>,
      %c3_i32 = arith.constant 3 : i32
      %165 = arith.index_cast %c3_i32 : i32 to index
      %c0_70 = arith.constant 0 : index
      %c0_71 = arith.constant 0 : index
      %166 = vector.load %arg18[%165, %c0_70, %c0_71] : memref<8x2x512xf32, #tpu.memory_space<vmem>>, vector<1x2x512xf32>
      %167 = vector.shape_cast %166 : vector<1x2x512xf32> to vector<2x512xf32>
      %168 = arith.truncf %160 : vector<2x128xf32> to vector<2x128xbf16>
      %cst_72 = arith.constant dense<0.000000e+00> : vector<2x512xf32>
      %169 = tpu.matmul %168, %14, %cst_72 {dimension_numbers = #tpu.dot_dimension_numbers<[1], [0], [0], [1], [0, 0, 1, 1], [], []>} : vector<2x128xbf16>, vector<128x512xbf16>, vector<2x512xf32> -> vector<2x512xf32>
      %170 = arith.addf %167, %169 : vector<2x512xf32>
      %171 = vector.extract_strided_slice %170 {offsets = [0, 0], sizes = [2, 128], strides = [1, 1]} : vector<2x512xf32> to vector<2x128xf32>
      %172 = arith.negf %171 : vector<2x128xf32>
      %173 = math.exp %172 : vector<2x128xf32>
      %cst_73 = arith.constant 1.000000e+00 : f32
      %174 = vector.broadcast %cst_73 : f32 to vector<2x128xf32>
      %175 = arith.addf %174, %173 : vector<2x128xf32>
      %176 = arith.divf %174, %175 : vector<2x128xf32>
      %177 = vector.extract_strided_slice %170 {offsets = [0, 128], sizes = [2, 128], strides = [1, 1]} : vector<2x512xf32> to vector<2x128xf32>
      %178 = arith.negf %177 : vector<2x128xf32>
      %179 = math.exp %178 : vector<2x128xf32>
      %cst_74 = arith.constant 1.000000e+00 : f32
      %180 = vector.broadcast %cst_74 : f32 to vector<2x128xf32>
      %181 = arith.addf %180, %179 : vector<2x128xf32>
      %182 = arith.divf %180, %181 : vector<2x128xf32>
      %183 = vector.extract_strided_slice %170 {offsets = [0, 256], sizes = [2, 128], strides = [1, 1]} : vector<2x512xf32> to vector<2x128xf32>
      %184 = math.tanh %183 : vector<2x128xf32>
      %185 = vector.extract_strided_slice %170 {offsets = [0, 384], sizes = [2, 128], strides = [1, 1]} : vector<2x512xf32> to vector<2x128xf32>
      %186 = arith.negf %185 : vector<2x128xf32>
      %187 = math.exp %186 : vector<2x128xf32>
      %cst_75 = arith.constant 1.000000e+00 : f32
      %188 = vector.broadcast %cst_75 : f32 to vector<2x128xf32>
      %189 = arith.addf %188, %187 : vector<2x128xf32>
      %190 = arith.divf %188, %189 : vector<2x128xf32>
      %191 = arith.mulf %182, %158 : vector<2x128xf32>
      %192 = arith.mulf %176, %184 : vector<2x128xf32>
      %193 = arith.addf %191, %192 : vector<2x128xf32>
      %194 = math.tanh %193 : vector<2x128xf32>
      %195 = arith.mulf %190, %194 : vector<2x128xf32>
      %196 = arith.index_cast %c3_i32 : i32 to index
      %c0_76 = arith.constant 0 : index
      %c0_77 = arith.constant 0 : index
      %197 = vector.load %arg19[%196, %c0_76, %c0_77] : memref<8x2x128xf32, #tpu.memory_space<vmem>>, vector<1x2x128xf32>
      %198 = vector.shape_cast %197 : vector<1x2x128xf32> to vector<2x128xf32>
      %199 = vector.shape_cast %195 : vector<2x128xf32> to vector<1x2x128xf32>
      tpu.vector_store %arg19[%196, %c0_76, %c0_77], %199 {strides = array<i32>} : memref<8x2x128xf32, #tpu.memory_space<vmem>>, vector<1x2x128xf32>,
      %c4_i32 = arith.constant 4 : i32
      %200 = arith.index_cast %c4_i32 : i32 to index
      %c0_78 = arith.constant 0 : index
      %c0_79 = arith.constant 0 : index
      %201 = vector.load %arg18[%200, %c0_78, %c0_79] : memref<8x2x512xf32, #tpu.memory_space<vmem>>, vector<1x2x512xf32>
      %202 = vector.shape_cast %201 : vector<1x2x512xf32> to vector<2x512xf32>
      %203 = arith.truncf %195 : vector<2x128xf32> to vector<2x128xbf16>
      %cst_80 = arith.constant dense<0.000000e+00> : vector<2x512xf32>
      %204 = tpu.matmul %203, %14, %cst_80 {dimension_numbers = #tpu.dot_dimension_numbers<[1], [0], [0], [1], [0, 0, 1, 1], [], []>} : vector<2x128xbf16>, vector<128x512xbf16>, vector<2x512xf32> -> vector<2x512xf32>
      %205 = arith.addf %202, %204 : vector<2x512xf32>
      %206 = vector.extract_strided_slice %205 {offsets = [0, 0], sizes = [2, 128], strides = [1, 1]} : vector<2x512xf32> to vector<2x128xf32>
      %207 = arith.negf %206 : vector<2x128xf32>
      %208 = math.exp %207 : vector<2x128xf32>
      %cst_81 = arith.constant 1.000000e+00 : f32
      %209 = vector.broadcast %cst_81 : f32 to vector<2x128xf32>
      %210 = arith.addf %209, %208 : vector<2x128xf32>
      %211 = arith.divf %209, %210 : vector<2x128xf32>
      %212 = vector.extract_strided_slice %205 {offsets = [0, 128], sizes = [2, 128], strides = [1, 1]} : vector<2x512xf32> to vector<2x128xf32>
      %213 = arith.negf %212 : vector<2x128xf32>
      %214 = math.exp %213 : vector<2x128xf32>
      %cst_82 = arith.constant 1.000000e+00 : f32
      %215 = vector.broadcast %cst_82 : f32 to vector<2x128xf32>
      %216 = arith.addf %215, %214 : vector<2x128xf32>
      %217 = arith.divf %215, %216 : vector<2x128xf32>
      %218 = vector.extract_strided_slice %205 {offsets = [0, 256], sizes = [2, 128], strides = [1, 1]} : vector<2x512xf32> to vector<2x128xf32>
      %219 = math.tanh %218 : vector<2x128xf32>
      %220 = vector.extract_strided_slice %205 {offsets = [0, 384], sizes = [2, 128], strides = [1, 1]} : vector<2x512xf32> to vector<2x128xf32>
      %221 = arith.negf %220 : vector<2x128xf32>
      %222 = math.exp %221 : vector<2x128xf32>
      %cst_83 = arith.constant 1.000000e+00 : f32
      %223 = vector.broadcast %cst_83 : f32 to vector<2x128xf32>
      %224 = arith.addf %223, %222 : vector<2x128xf32>
      %225 = arith.divf %223, %224 : vector<2x128xf32>
      %226 = arith.mulf %217, %193 : vector<2x128xf32>
      %227 = arith.mulf %211, %219 : vector<2x128xf32>
      %228 = arith.addf %226, %227 : vector<2x128xf32>
      %229 = math.tanh %228 : vector<2x128xf32>
      %230 = arith.mulf %225, %229 : vector<2x128xf32>
      %231 = arith.index_cast %c4_i32 : i32 to index
      %c0_84 = arith.constant 0 : index
      %c0_85 = arith.constant 0 : index
      %232 = vector.load %arg19[%231, %c0_84, %c0_85] : memref<8x2x128xf32, #tpu.memory_space<vmem>>, vector<1x2x128xf32>
      %233 = vector.shape_cast %232 : vector<1x2x128xf32> to vector<2x128xf32>
      %234 = vector.shape_cast %230 : vector<2x128xf32> to vector<1x2x128xf32>
      tpu.vector_store %arg19[%231, %c0_84, %c0_85], %234 {strides = array<i32>} : memref<8x2x128xf32, #tpu.memory_space<vmem>>, vector<1x2x128xf32>,
      %c5_i32 = arith.constant 5 : i32
      %235 = arith.index_cast %c5_i32 : i32 to index
      %c0_86 = arith.constant 0 : index
      %c0_87 = arith.constant 0 : index
      %236 = vector.load %arg18[%235, %c0_86, %c0_87] : memref<8x2x512xf32, #tpu.memory_space<vmem>>, vector<1x2x512xf32>
      %237 = vector.shape_cast %236 : vector<1x2x512xf32> to vector<2x512xf32>
      %238 = arith.truncf %230 : vector<2x128xf32> to vector<2x128xbf16>
      %cst_88 = arith.constant dense<0.000000e+00> : vector<2x512xf32>
      %239 = tpu.matmul %238, %14, %cst_88 {dimension_numbers = #tpu.dot_dimension_numbers<[1], [0], [0], [1], [0, 0, 1, 1], [], []>} : vector<2x128xbf16>, vector<128x512xbf16>, vector<2x512xf32> -> vector<2x512xf32>
      %240 = arith.addf %237, %239 : vector<2x512xf32>
      %241 = vector.extract_strided_slice %240 {offsets = [0, 0], sizes = [2, 128], strides = [1, 1]} : vector<2x512xf32> to vector<2x128xf32>
      %242 = arith.negf %241 : vector<2x128xf32>
      %243 = math.exp %242 : vector<2x128xf32>
      %cst_89 = arith.constant 1.000000e+00 : f32
      %244 = vector.broadcast %cst_89 : f32 to vector<2x128xf32>
      %245 = arith.addf %244, %243 : vector<2x128xf32>
      %246 = arith.divf %244, %245 : vector<2x128xf32>
      %247 = vector.extract_strided_slice %240 {offsets = [0, 128], sizes = [2, 128], strides = [1, 1]} : vector<2x512xf32> to vector<2x128xf32>
      %248 = arith.negf %247 : vector<2x128xf32>
      %249 = math.exp %248 : vector<2x128xf32>
      %cst_90 = arith.constant 1.000000e+00 : f32
      %250 = vector.broadcast %cst_90 : f32 to vector<2x128xf32>
      %251 = arith.addf %250, %249 : vector<2x128xf32>
      %252 = arith.divf %250, %251 : vector<2x128xf32>
      %253 = vector.extract_strided_slice %240 {offsets = [0, 256], sizes = [2, 128], strides = [1, 1]} : vector<2x512xf32> to vector<2x128xf32>
      %254 = math.tanh %253 : vector<2x128xf32>
      %255 = vector.extract_strided_slice %240 {offsets = [0, 384], sizes = [2, 128], strides = [1, 1]} : vector<2x512xf32> to vector<2x128xf32>
      %256 = arith.negf %255 : vector<2x128xf32>
      %257 = math.exp %256 : vector<2x128xf32>
      %cst_91 = arith.constant 1.000000e+00 : f32
      %258 = vector.broadcast %cst_91 : f32 to vector<2x128xf32>
      %259 = arith.addf %258, %257 : vector<2x128xf32>
      %260 = arith.divf %258, %259 : vector<2x128xf32>
      %261 = arith.mulf %252, %228 : vector<2x128xf32>
      %262 = arith.mulf %246, %254 : vector<2x128xf32>
      %263 = arith.addf %261, %262 : vector<2x128xf32>
      %264 = math.tanh %263 : vector<2x128xf32>
      %265 = arith.mulf %260, %264 : vector<2x128xf32>
      %266 = arith.index_cast %c5_i32 : i32 to index
      %c0_92 = arith.constant 0 : index
      %c0_93 = arith.constant 0 : index
      %267 = vector.load %arg19[%266, %c0_92, %c0_93] : memref<8x2x128xf32, #tpu.memory_space<vmem>>, vector<1x2x128xf32>
      %268 = vector.shape_cast %267 : vector<1x2x128xf32> to vector<2x128xf32>
      %269 = vector.shape_cast %265 : vector<2x128xf32> to vector<1x2x128xf32>
      tpu.vector_store %arg19[%266, %c0_92, %c0_93], %269 {strides = array<i32>} : memref<8x2x128xf32, #tpu.memory_space<vmem>>, vector<1x2x128xf32>,
      %c6_i32 = arith.constant 6 : i32
      %270 = arith.index_cast %c6_i32 : i32 to index
      %c0_94 = arith.constant 0 : index
      %c0_95 = arith.constant 0 : index
      %271 = vector.load %arg18[%270, %c0_94, %c0_95] : memref<8x2x512xf32, #tpu.memory_space<vmem>>, vector<1x2x512xf32>
      %272 = vector.shape_cast %271 : vector<1x2x512xf32> to vector<2x512xf32>
      %273 = arith.truncf %265 : vector<2x128xf32> to vector<2x128xbf16>
      %cst_96 = arith.constant dense<0.000000e+00> : vector<2x512xf32>
      %274 = tpu.matmul %273, %14, %cst_96 {dimension_numbers = #tpu.dot_dimension_numbers<[1], [0], [0], [1], [0, 0, 1, 1], [], []>} : vector<2x128xbf16>, vector<128x512xbf16>, vector<2x512xf32> -> vector<2x512xf32>
      %275 = arith.addf %272, %274 : vector<2x512xf32>
      %276 = vector.extract_strided_slice %275 {offsets = [0, 0], sizes = [2, 128], strides = [1, 1]} : vector<2x512xf32> to vector<2x128xf32>
      %277 = arith.negf %276 : vector<2x128xf32>
      %278 = math.exp %277 : vector<2x128xf32>
      %cst_97 = arith.constant 1.000000e+00 : f32
      %279 = vector.broadcast %cst_97 : f32 to vector<2x128xf32>
      %280 = arith.addf %279, %278 : vector<2x128xf32>
      %281 = arith.divf %279, %280 : vector<2x128xf32>
      %282 = vector.extract_strided_slice %275 {offsets = [0, 128], sizes = [2, 128], strides = [1, 1]} : vector<2x512xf32> to vector<2x128xf32>
      %283 = arith.negf %282 : vector<2x128xf32>
      %284 = math.exp %283 : vector<2x128xf32>
      %cst_98 = arith.constant 1.000000e+00 : f32
      %285 = vector.broadcast %cst_98 : f32 to vector<2x128xf32>
      %286 = arith.addf %285, %284 : vector<2x128xf32>
      %287 = arith.divf %285, %286 : vector<2x128xf32>
      %288 = vector.extract_strided_slice %275 {offsets = [0, 256], sizes = [2, 128], strides = [1, 1]} : vector<2x512xf32> to vector<2x128xf32>
      %289 = math.tanh %288 : vector<2x128xf32>
      %290 = vector.extract_strided_slice %275 {offsets = [0, 384], sizes = [2, 128], strides = [1, 1]} : vector<2x512xf32> to vector<2x128xf32>
      %291 = arith.negf %290 : vector<2x128xf32>
      %292 = math.exp %291 : vector<2x128xf32>
      %cst_99 = arith.constant 1.000000e+00 : f32
      %293 = vector.broadcast %cst_99 : f32 to vector<2x128xf32>
      %294 = arith.addf %293, %292 : vector<2x128xf32>
      %295 = arith.divf %293, %294 : vector<2x128xf32>
      %296 = arith.mulf %287, %263 : vector<2x128xf32>
      %297 = arith.mulf %281, %289 : vector<2x128xf32>
      %298 = arith.addf %296, %297 : vector<2x128xf32>
      %299 = math.tanh %298 : vector<2x128xf32>
      %300 = arith.mulf %295, %299 : vector<2x128xf32>
      %301 = arith.index_cast %c6_i32 : i32 to index
      %c0_100 = arith.constant 0 : index
      %c0_101 = arith.constant 0 : index
      %302 = vector.load %arg19[%301, %c0_100, %c0_101] : memref<8x2x128xf32, #tpu.memory_space<vmem>>, vector<1x2x128xf32>
      %303 = vector.shape_cast %302 : vector<1x2x128xf32> to vector<2x128xf32>
      %304 = vector.shape_cast %300 : vector<2x128xf32> to vector<1x2x128xf32>
      tpu.vector_store %arg19[%301, %c0_100, %c0_101], %304 {strides = array<i32>} : memref<8x2x128xf32, #tpu.memory_space<vmem>>, vector<1x2x128xf32>,
      %c7_i32 = arith.constant 7 : i32
      %305 = arith.index_cast %c7_i32 : i32 to index
      %c0_102 = arith.constant 0 : index
      %c0_103 = arith.constant 0 : index
      %306 = vector.load %arg18[%305, %c0_102, %c0_103] : memref<8x2x512xf32, #tpu.memory_space<vmem>>, vector<1x2x512xf32>
      %307 = vector.shape_cast %306 : vector<1x2x512xf32> to vector<2x512xf32>
      %308 = arith.truncf %300 : vector<2x128xf32> to vector<2x128xbf16>
      %cst_104 = arith.constant dense<0.000000e+00> : vector<2x512xf32>
      %309 = tpu.matmul %308, %14, %cst_104 {dimension_numbers = #tpu.dot_dimension_numbers<[1], [0], [0], [1], [0, 0, 1, 1], [], []>} : vector<2x128xbf16>, vector<128x512xbf16>, vector<2x512xf32> -> vector<2x512xf32>
      %310 = arith.addf %307, %309 : vector<2x512xf32>
      %311 = vector.extract_strided_slice %310 {offsets = [0, 0], sizes = [2, 128], strides = [1, 1]} : vector<2x512xf32> to vector<2x128xf32>
      %312 = arith.negf %311 : vector<2x128xf32>
      %313 = math.exp %312 : vector<2x128xf32>
      %cst_105 = arith.constant 1.000000e+00 : f32
      %314 = vector.broadcast %cst_105 : f32 to vector<2x128xf32>
      %315 = arith.addf %314, %313 : vector<2x128xf32>
      %316 = arith.divf %314, %315 : vector<2x128xf32>
      %317 = vector.extract_strided_slice %310 {offsets = [0, 128], sizes = [2, 128], strides = [1, 1]} : vector<2x512xf32> to vector<2x128xf32>
      %318 = arith.negf %317 : vector<2x128xf32>
      %319 = math.exp %318 : vector<2x128xf32>
      %cst_106 = arith.constant 1.000000e+00 : f32
      %320 = vector.broadcast %cst_106 : f32 to vector<2x128xf32>
      %321 = arith.addf %320, %319 : vector<2x128xf32>
      %322 = arith.divf %320, %321 : vector<2x128xf32>
      %323 = vector.extract_strided_slice %310 {offsets = [0, 256], sizes = [2, 128], strides = [1, 1]} : vector<2x512xf32> to vector<2x128xf32>
      %324 = math.tanh %323 : vector<2x128xf32>
      %325 = vector.extract_strided_slice %310 {offsets = [0, 384], sizes = [2, 128], strides = [1, 1]} : vector<2x512xf32> to vector<2x128xf32>
      %326 = arith.negf %325 : vector<2x128xf32>
      %327 = math.exp %326 : vector<2x128xf32>
      %cst_107 = arith.constant 1.000000e+00 : f32
      %328 = vector.broadcast %cst_107 : f32 to vector<2x128xf32>
      %329 = arith.addf %328, %327 : vector<2x128xf32>
      %330 = arith.divf %328, %329 : vector<2x128xf32>
      %331 = arith.mulf %322, %298 : vector<2x128xf32>
      %332 = arith.mulf %316, %324 : vector<2x128xf32>
      %333 = arith.addf %331, %332 : vector<2x128xf32>
      %334 = math.tanh %333 : vector<2x128xf32>
      %335 = arith.mulf %330, %334 : vector<2x128xf32>
      %336 = arith.index_cast %c7_i32 : i32 to index
      %c0_108 = arith.constant 0 : index
      %c0_109 = arith.constant 0 : index
      %337 = vector.load %arg19[%336, %c0_108, %c0_109] : memref<8x2x128xf32, #tpu.memory_space<vmem>>, vector<1x2x128xf32>
      %338 = vector.shape_cast %337 : vector<1x2x128xf32> to vector<2x128xf32>
      %339 = vector.shape_cast %335 : vector<2x128xf32> to vector<1x2x128xf32>
      tpu.vector_store %arg19[%336, %c0_108, %c0_109], %339 {strides = array<i32>} : memref<8x2x128xf32, #tpu.memory_space<vmem>>, vector<1x2x128xf32>,
      %c8_i32 = arith.constant 8 : i32
      %c0_110 = arith.constant 0 : index
      %c0_111 = arith.constant 0 : index
      %340 = vector.load %arg16[%c0_110, %c0_111] : memref<2x128xf32, #tpu.memory_space<vmem>>, vector<2x128xf32>
      tpu.vector_store %arg16[%c0_110, %c0_111], %335 {strides = array<i32>} : memref<2x128xf32, #tpu.memory_space<vmem>>, vector<2x128xf32>,
      %c0_112 = arith.constant 0 : index
      %c0_113 = arith.constant 0 : index
      %341 = vector.load %arg17[%c0_112, %c0_113] : memref<2x128xf32, #tpu.memory_space<vmem>>, vector<2x128xf32>
      tpu.vector_store %arg17[%c0_112, %c0_113], %333 {strides = array<i32>} : memref<2x128xf32, #tpu.memory_space<vmem>>, vector<2x128xf32>,
      %c0_114 = arith.constant 0 : index
      %c0_115 = arith.constant 0 : index
      %342 = vector.load %arg14[%c0_114, %c0_115] : memref<2x128xf32, #tpu.memory_space<vmem>>, vector<2x128xf32>
      tpu.vector_store %arg14[%c0_114, %c0_115], %335 {strides = array<i32>} : memref<2x128xf32, #tpu.memory_space<vmem>>, vector<2x128xf32>,
      %c0_116 = arith.constant 0 : index
      %c0_117 = arith.constant 0 : index
      %343 = vector.load %arg15[%c0_116, %c0_117] : memref<2x128xf32, #tpu.memory_space<vmem>>, vector<2x128xf32>
      tpu.vector_store %arg15[%c0_116, %c0_117], %333 {strides = array<i32>} : memref<2x128xf32, #tpu.memory_space<vmem>>, vector<2x128xf32>,
    } else {
    }
    %c0_14 = arith.constant 0 : index
    %c0_15 = arith.constant 0 : index
    %c0_16 = arith.constant 0 : index
    %18 = vector.load %arg19[%c0_14, %c0_15, %c0_16] : memref<8x2x128xf32, #tpu.memory_space<vmem>>, vector<8x2x128xf32>
    %19 = tpu.transpose %18, [1, 0, 2] : vector<8x2x128xf32> -> vector<2x8x128xf32>
    %20 = vector.shape_cast %19 : vector<2x8x128xf32> to vector<16x128xf32>
    %21 = arith.truncf %20 : vector<16x128xf32> to vector<16x128xbf16>
    %c0_17 = arith.constant 0 : index
    %c0_18 = arith.constant 0 : index
    %c0_19 = arith.constant 0 : index
    %22 = vector.load %arg2[%c0_17, %c0_18, %c0_19] : memref<2x128x128xbf16, #tpu.memory_space<vmem>>, vector<2x128x128xbf16>
    %c0_20 = arith.constant 0 : index
    %c0_21 = arith.constant 0 : index
    %23 = vector.load %arg9[%c0_20, %c0_21] : memref<128x128xbf16, #tpu.memory_space<vmem>>, vector<128x128xbf16>
    %cst_22 = arith.constant dense<0.000000e+00> : vector<16x128xf32>
    %24 = tpu.matmul %21, %23, %cst_22 {dimension_numbers = #tpu.dot_dimension_numbers<[1], [0], [0], [1], [0, 0, 1, 1], [], []>} : vector<16x128xbf16>, vector<128x128xbf16>, vector<16x128xf32> -> vector<16x128xf32>
    %25 = vector.shape_cast %24 : vector<16x128xf32> to vector<2x8x128xf32>
    %26 = arith.truncf %25 : vector<2x8x128xf32> to vector<2x8x128xbf16>
    "tpu.trace_start"() <{level = 10 : i32, message = "bth,bsh->bts"}> : () -> ()
    %cst_23 = arith.constant dense<0.000000e+00> : vector<2x8x128xf32>
    %27 = tpu.matmul %26, %22, %cst_23 {dimension_numbers = #tpu.dot_dimension_numbers<[2], [2], [1], [1], [0, 0, 0, 1, 1, 1], [0], [0]>} : vector<2x8x128xbf16>, vector<2x128x128xbf16>, vector<2x8x128xf32> -> vector<2x8x128xf32>
    "tpu.trace_stop"() : () -> ()
    %c0_24 = arith.constant 0 : index
    %c0_25 = arith.constant 0 : index
    %28 = vector.load %arg3[%c0_24, %c0_25] : memref<2x128xf32, #tpu.memory_space<vmem>>, vector<2x128xf32>
    %29 = vector.shape_cast %28 : vector<2x128xf32> to vector<2x1x128xf32>
    %30 = vector.broadcast %29 : vector<2x1x128xf32> to vector<2x8x128xf32>
    %31 = arith.addf %27, %30 : vector<2x8x128xf32>
    %cst_26 = arith.constant dense<0xFF800000> : vector<2x8xf32>
    %32 = vector.multi_reduction <maximumf>, %31, %cst_26 [2] : vector<2x8x128xf32> to vector<2x8xf32>
    %33 = vector.shape_cast %32 : vector<2x8xf32> to vector<2x8x1xf32>
    %34 = vector.broadcast %33 : vector<2x8x1xf32> to vector<2x8x128xf32>
    %35 = arith.subf %31, %34 : vector<2x8x128xf32>
    %36 = math.exp %35 : vector<2x8x128xf32>
    %cst_27 = arith.constant dense<0.000000e+00> : vector<2x8xf32>
    %37 = vector.multi_reduction <add>, %36, %cst_27 [2] : vector<2x8x128xf32> to vector<2x8xf32>
    %38 = vector.shape_cast %37 : vector<2x8xf32> to vector<2x8x1xf32>
    %39 = tpu.reciprocal %38 {approx = true} : vector<2x8x1xf32> -> vector<2x8x1xf32>
    %40 = vector.broadcast %39 : vector<2x8x1xf32> to vector<2x8x128xf32>
    %41 = arith.mulf %36, %40 : vector<2x8x128xf32>
    %42 = arith.truncf %41 : vector<2x8x128xf32> to vector<2x8x128xbf16>
    "tpu.trace_start"() <{level = 10 : i32, message = "bts,bsh->bth"}> : () -> ()
    %cst_28 = arith.constant dense<0.000000e+00> : vector<2x8x128xf32>
    %43 = tpu.matmul %42, %22, %cst_28 {dimension_numbers = #tpu.dot_dimension_numbers<[2], [1], [1], [2], [0, 0, 0, 1, 1, 2], [0], [0]>} : vector<2x8x128xbf16>, vector<2x128x128xbf16>, vector<2x8x128xf32> -> vector<2x8x128xf32>
    "tpu.trace_stop"() : () -> ()
    %44 = vector.shape_cast %43 : vector<2x8x128xf32> to vector<16x128xf32>
    %45 = arith.truncf %44 : vector<16x128xf32> to vector<16x128xbf16>
    %c0_29 = arith.constant 0 : index
    %c0_30 = arith.constant 0 : index
    %46 = vector.load %arg10[%c0_29, %c0_30] : memref<128x128xbf16, #tpu.memory_space<vmem>>, vector<128x128xbf16>
    %cst_31 = arith.constant dense<0.000000e+00> : vector<16x128xf32>
    %47 = tpu.matmul %45, %46, %cst_31 {dimension_numbers = #tpu.dot_dimension_numbers<[1], [0], [0], [1], [0, 0, 1, 1], [], []>} : vector<16x128xbf16>, vector<128x128xbf16>, vector<16x128xf32> -> vector<16x128xf32>
    %c0_32 = arith.constant 0 : index
    %c0_33 = arith.constant 0 : index
    %48 = vector.load %arg11[%c0_32, %c0_33] : memref<128x128xbf16, #tpu.memory_space<vmem>>, vector<128x128xbf16>
    %cst_34 = arith.constant dense<0.000000e+00> : vector<16x128xf32>
    %49 = tpu.matmul %21, %48, %cst_34 {dimension_numbers = #tpu.dot_dimension_numbers<[1], [0], [0], [1], [0, 0, 1, 1], [], []>} : vector<16x128xbf16>, vector<128x128xbf16>, vector<16x128xf32> -> vector<16x128xf32>
    %50 = arith.addf %47, %49 : vector<16x128xf32>
    %51 = math.tanh %50 : vector<16x128xf32>
    %52 = vector.shape_cast %51 : vector<16x128xf32> to vector<2x8x128xf32>
    %53 = tpu.transpose %52, [1, 0, 2] : vector<2x8x128xf32> -> vector<8x2x128xf32>
    %c0_35 = arith.constant 0 : index
    %c0_36 = arith.constant 0 : index
    %c0_37 = arith.constant 0 : index
    %54 = vector.load %arg12[%c0_35, %c0_36, %c0_37] : memref<8x2x128xf32, #tpu.memory_space<vmem>>, vector<8x2x128xf32>
    tpu.vector_store %arg12[%c0_35, %c0_36, %c0_37], %53 {strides = array<i32>} : memref<8x2x128xf32, #tpu.memory_space<vmem>>, vector<8x2x128xf32>,
    %55 = tpu.transpose %41, [1, 0, 2] : vector<2x8x128xf32> -> vector<8x2x128xf32>
    %56 = arith.truncf %55 : vector<8x2x128xf32> to vector<8x2x128xbf16>
    %c0_38 = arith.constant 0 : index
    %c0_39 = arith.constant 0 : index
    %c0_40 = arith.constant 0 : index
    %57 = vector.load %arg13[%c0_38, %c0_39, %c0_40] : memref<8x2x128xbf16, #tpu.memory_space<vmem>>, vector<8x2x128xbf16>
    tpu.vector_store %arg13[%c0_38, %c0_39, %c0_40], %56 {strides = array<i32>} : memref<8x2x128xbf16, #tpu.memory_space<vmem>>, vector<8x2x128xbf16>,
    return
  }
  func.func @transform_0(%arg0: i32) -> (i32, i32, i32) {
    %c0_i32 = arith.constant 0 : i32
    %c0_i32_0 = arith.constant 0 : i32
    %c0_i32_1 = arith.constant 0 : i32
    return %c0_i32, %arg0, %c0_i32_0 : i32, i32, i32
  }
  func.func @transform_1(%arg0: i32) -> (i32, i32, i32) {
    %c0_i32 = arith.constant 0 : i32
    %c0_i32_0 = arith.constant 0 : i32
    %c0_i32_1 = arith.constant 0 : i32
    %c0_i32_2 = arith.constant 0 : i32
    return %c0_i32, %c0_i32_0, %c0_i32_1 : i32, i32, i32
  }
  func.func @transform_2(%arg0: i32) -> (i32, i32) {
    %c0_i32 = arith.constant 0 : i32
    %c0_i32_0 = arith.constant 0 : i32
    %c0_i32_1 = arith.constant 0 : i32
    return %c0_i32, %c0_i32_0 : i32, i32
  }
  func.func @transform_3(%arg0: i32) -> (i32, i32) {
    %c0_i32 = arith.constant 0 : i32
    %c0_i32_0 = arith.constant 0 : i32
    %c0_i32_1 = arith.constant 0 : i32
    return %c0_i32, %c0_i32_0 : i32, i32
  }
  func.func @transform_4(%arg0: i32) -> (i32, i32) {
    %c0_i32 = arith.constant 0 : i32
    %c0_i32_0 = arith.constant 0 : i32
    %c0_i32_1 = arith.constant 0 : i32
    return %c0_i32, %c0_i32_0 : i32, i32
  }
  func.func @transform_5(%arg0: i32) -> (i32, i32) {
    %c0_i32 = arith.constant 0 : i32
    %c0_i32_0 = arith.constant 0 : i32
    %c0_i32_1 = arith.constant 0 : i32
    return %c0_i32, %c0_i32_0 : i32, i32
  }
  func.func @transform_6(%arg0: i32) -> (i32, i32) {
    %c0_i32 = arith.constant 0 : i32
    %c0_i32_0 = arith.constant 0 : i32
    %c0_i32_1 = arith.constant 0 : i32
    return %c0_i32, %c0_i32_0 : i32, i32
  }
  func.func @transform_7(%arg0: i32) -> (i32, i32) {
    %c0_i32 = arith.constant 0 : i32
    %c0_i32_0 = arith.constant 0 : i32
    %c0_i32_1 = arith.constant 0 : i32
    return %c0_i32, %c0_i32_0 : i32, i32
  }
  func.func @transform_8(%arg0: i32) -> (i32, i32) {
    %c0_i32 = arith.constant 0 : i32
    %c0_i32_0 = arith.constant 0 : i32
    %c0_i32_1 = arith.constant 0 : i32
    return %c0_i32, %c0_i32_0 : i32, i32
  }
  func.func @transform_9(%arg0: i32) -> (i32, i32) {
    %c0_i32 = arith.constant 0 : i32
    %c0_i32_0 = arith.constant 0 : i32
    %c0_i32_1 = arith.constant 0 : i32
    return %c0_i32, %c0_i32_0 : i32, i32
  }
  func.func @transform_10(%arg0: i32) -> (i32, i32) {
    %c0_i32 = arith.constant 0 : i32
    %c0_i32_0 = arith.constant 0 : i32
    %c0_i32_1 = arith.constant 0 : i32
    return %c0_i32, %c0_i32_0 : i32, i32
  }
  func.func @transform_11(%arg0: i32) -> (i32, i32, i32) {
    %c0_i32 = arith.constant 0 : i32
    %c0_i32_0 = arith.constant 0 : i32
    %c0_i32_1 = arith.constant 0 : i32
    return %arg0, %c0_i32, %c0_i32_0 : i32, i32, i32
  }
  func.func @transform_12(%arg0: i32) -> (i32, i32, i32) {
    %c0_i32 = arith.constant 0 : i32
    %c0_i32_0 = arith.constant 0 : i32
    %c0_i32_1 = arith.constant 0 : i32
    return %arg0, %c0_i32, %c0_i32_0 : i32, i32, i32
  }
  func.func @transform_13(%arg0: i32) -> (i32, i32) {
    %c0_i32 = arith.constant 0 : i32
    %c0_i32_0 = arith.constant 0 : i32
    %c0_i32_1 = arith.constant 0 : i32
    return %c0_i32, %c0_i32_0 : i32, i32
  }
  func.func @transform_14(%arg0: i32) -> (i32, i32) {
    %c0_i32 = arith.constant 0 : i32
    %c0_i32_0 = arith.constant 0 : i32
    %c0_i32_1 = arith.constant 0 : i32
    return %c0_i32, %c0_i32_0 : i32, i32
  }
}

module attributes {stable_mosaic.version = 11 : i64} {
  func.func @_decoder_kernel(%arg0: i32, %arg1: memref<2x8x128xbf16, #tpu.memory_space<vmem>>, %arg2: memref<2x128x128xbf16, #tpu.memory_space<vmem>>, %arg3: memref<2x128xf32, #tpu.memory_space<vmem>>, %arg4: memref<2x128xf32, #tpu.memory_space<vmem>>, %arg5: memref<2x128xf32, #tpu.memory_space<vmem>>, %arg6: memref<128x512xbf16, #tpu.memory_space<vmem>>, %arg7: memref<1x512xf32, #tpu.memory_space<vmem>>, %arg8: memref<128x512xbf16, #tpu.memory_space<vmem>>, %arg9: memref<128x128xbf16, #tpu.memory_space<vmem>>, %arg10: memref<128x128xbf16, #tpu.memory_space<vmem>>, %arg11: memref<128x128xbf16, #tpu.memory_space<vmem>>, %arg12: memref<8x2x128xf32, #tpu.memory_space<vmem>>, %arg13: memref<8x2x128xbf16, #tpu.memory_space<vmem>>, %arg14: memref<2x128xf32, #tpu.memory_space<vmem>>, %arg15: memref<2x128xf32, #tpu.memory_space<vmem>>, %arg16: memref<2x128xf32, #tpu.memory_space<vmem>>, %arg17: memref<2x128xf32, #tpu.memory_space<vmem>>, %arg18: memref<8x2x512xf32, #tpu.memory_space<vmem>>, %arg19: memref<8x2x128xf32, #tpu.memory_space<vmem>>) attributes {dimension_semantics = [#tpu.dimension_semantics<arbitrary>], iteration_bounds = array<i64: 1>, scalar_prefetch = 0 : i64, scratch_operands = 4 : i64, tpu.core_type = #tpu.core_type<tc>, window_params = [{transform_indices = @transform_0, window_bounds = array<i64: 2, 8, 128>}, {pipeline_mode = #tpu.pipeline_mode<synchronous>, transform_indices = @transform_1, window_bounds = array<i64: 2, 128, 128>}, {pipeline_mode = #tpu.pipeline_mode<synchronous>, transform_indices = @transform_2, window_bounds = array<i64: 2, 128>}, {pipeline_mode = #tpu.pipeline_mode<synchronous>, transform_indices = @transform_3, window_bounds = array<i64: 2, 128>}, {pipeline_mode = #tpu.pipeline_mode<synchronous>, transform_indices = @transform_4, window_bounds = array<i64: 2, 128>}, {pipeline_mode = #tpu.pipeline_mode<synchronous>, transform_indices = @transform_5, window_bounds = array<i64: 128, 512>}, {pipeline_mode = #tpu.pipeline_mode<synchronous>, transform_indices = @transform_6, window_bounds = array<i64: 1, 512>}, {pipeline_mode = #tpu.pipeline_mode<synchronous>, transform_indices = @transform_7, window_bounds = array<i64: 128, 512>}, {pipeline_mode = #tpu.pipeline_mode<synchronous>, transform_indices = @transform_8, window_bounds = array<i64: 128, 128>}, {pipeline_mode = #tpu.pipeline_mode<synchronous>, transform_indices = @transform_9, window_bounds = array<i64: 128, 128>}, {pipeline_mode = #tpu.pipeline_mode<synchronous>, transform_indices = @transform_10, window_bounds = array<i64: 128, 128>}, {transform_indices = @transform_11, window_bounds = array<i64: 8, 2, 128>}, {transform_indices = @transform_12, window_bounds = array<i64: 8, 2, 128>}, {pipeline_mode = #tpu.pipeline_mode<synchronous>, transform_indices = @transform_13, window_bounds = array<i64: 2, 128>}, {pipeline_mode = #tpu.pipeline_mode<synchronous>, transform_indices = @transform_14, window_bounds = array<i64: 2, 128>}]} {
    %c0_i32 = arith.constant 0 : i32
    %0 = arith.cmpi eq, %arg0, %c0_i32 : i32
    %1 = arith.extui %0 : i1 to i32
    %c0_i32_0 = arith.constant 0 : i32
    %2 = arith.cmpi ne, %1, %c0_i32_0 : i32
    scf.if %2 {
      %c0_41 = arith.constant 0 : index
      %c0_42 = arith.constant 0 : index
      %58 = vector.load %arg4[%c0_41, %c0_42] : memref<2x128xf32, #tpu.memory_space<vmem>>, vector<2x128xf32>
      %c0_43 = arith.constant 0 : index
      %c0_44 = arith.constant 0 : index
      %59 = vector.load %arg16[%c0_43, %c0_44] : memref<2x128xf32, #tpu.memory_space<vmem>>, vector<2x128xf32>
      tpu.vector_store %arg16[%c0_43, %c0_44], %58 {strides = array<i32>} : memref<2x128xf32, #tpu.memory_space<vmem>>, vector<2x128xf32>,
      %c0_45 = arith.constant 0 : index
      %c0_46 = arith.constant 0 : index
      %60 = vector.load %arg5[%c0_45, %c0_46] : memref<2x128xf32, #tpu.memory_space<vmem>>, vector<2x128xf32>
      %c0_47 = arith.constant 0 : index
      %c0_48 = arith.constant 0 : index
      %61 = vector.load %arg17[%c0_47, %c0_48] : memref<2x128xf32, #tpu.memory_space<vmem>>, vector<2x128xf32>
      tpu.vector_store %arg17[%c0_47, %c0_48], %60 {strides = array<i32>} : memref<2x128xf32, #tpu.memory_space<vmem>>, vector<2x128xf32>,
    } else {
    }
    %c0 = arith.constant 0 : index
    %c0_1 = arith.constant 0 : index
    %c0_2 = arith.constant 0 : index
    %3 = vector.load %arg1[%c0, %c0_1, %c0_2] : memref<2x8x128xbf16, #tpu.memory_space<vmem>>, vector<2x8x128xbf16>
    %4 = vector.shape_cast %3 : vector<2x8x128xbf16> to vector<16x128xbf16>
    %c0_3 = arith.constant 0 : index
    %c0_4 = arith.constant 0 : index
    %5 = vector.load %arg6[%c0_3, %c0_4] : memref<128x512xbf16, #tpu.memory_space<vmem>>, vector<128x512xbf16>
    %cst = arith.constant dense<0.000000e+00> : vector<16x512xf32>
    %6 = tpu.matmul %4, %5, %cst {dimension_numbers = #tpu.dot_dimension_numbers<[1], [0], [0], [1], [0, 0, 1, 1], [], []>} : vector<16x128xbf16>, vector<128x512xbf16>, vector<16x512xf32> -> vector<16x512xf32>
    %7 = vector.shape_cast %6 : vector<16x512xf32> to vector<2x8x512xf32>
    %8 = tpu.transpose %7, [1, 0, 2] : vector<2x8x512xf32> -> vector<8x2x512xf32>
    %c0_5 = arith.constant 0 : index
    %c0_6 = arith.constant 0 : index
    %9 = vector.load %arg7[%c0_5, %c0_6] : memref<1x512xf32, #tpu.memory_space<vmem>>, vector<1x512xf32>
    %10 = vector.shape_cast %9 : vector<1x512xf32> to vector<1x1x512xf32>
    %11 = vector.broadcast %10 : vector<1x1x512xf32> to vector<8x2x512xf32>
    %12 = arith.addf %8, %11 : vector<8x2x512xf32>
    %c0_7 = arith.constant 0 : index
    %c0_8 = arith.constant 0 : index
    %c0_9 = arith.constant 0 : index
    %13 = vector.load %arg18[%c0_7, %c0_8, %c0_9] : memref<8x2x512xf32, #tpu.memory_space<vmem>>, vector<8x2x512xf32>
    tpu.vector_store %arg18[%c0_7, %c0_8, %c0_9], %12 {strides = array<i32>} : memref<8x2x512xf32, #tpu.memory_space<vmem>>, vector<8x2x512xf32>,
    %c0_10 = arith.constant 0 : index
    %c0_11 = arith.constant 0 : index
    %14 = vector.load %arg8[%c0_10, %c0_11] : memref<128x512xbf16, #tpu.memory_space<vmem>>, vector<128x512xbf16>
    %c0_i32_12 = arith.constant 0 : i32
    %15 = arith.cmpi eq, %arg0, %c0_i32_12 : i32
    %16 = arith.extui %15 : i1 to i32
    %c0_i32_13 = arith.constant 0 : i32
    %17 = arith.cmpi ne, %16, %c0_i32_13 : i32
    scf.if %17 {
      %c0_41 = arith.constant 0 : index
      %c0_42 = arith.constant 0 : index
      %58 = vector.load %arg16[%c0_41, %c0_42] : memref<2x128xf32, #tpu.memory_space<vmem>>, vector<2x128xf32>
      %c0_43 = arith.constant 0 : index
      %c0_44 = arith.constant 0 : index
      %59 = vector.load %arg17[%c0_43, %c0_44] : memref<2x128xf32, #tpu.memory_space<vmem>>, vector<2x128xf32>
      %c0_i32_45 = arith.constant 0 : i32
      %60 = arith.index_cast %c0_i32_45 : i32 to index
      %c0_46 = arith.constant 0 : index
      %c0_47 = arith.constant 0 : index
      %61 = vector.load %arg18[%60, %c0_46, %c0_47] : memref<8x2x512xf32, #tpu.memory_space<vmem>>, vector<1x2x512xf32>
      %62 = vector.shape_cast %61 : vector<1x2x512xf32> to vector<2x512xf32>
      %63 = arith.truncf %58 : vector<2x128xf32> to vector<2x128xbf16>
      %cst_48 = arith.constant dense<0.000000e+00> : vector<2x512xf32>
      %64 = tpu.matmul %63, %14, %cst_48 {dimension_numbers = #tpu.dot_dimension_numbers<[1], [0], [0], [1], [0, 0, 1, 1], [], []>} : vector<2x128xbf16>, vector<128x512xbf16>, vector<2x512xf32> -> vector<2x512xf32>
      %65 = arith.addf %62, %64 : vector<2x512xf32>
      %66 = vector.extract_strided_slice %65 {offsets = [0, 0], sizes = [2, 128], strides = [1, 1]} : vector<2x512xf32> to vector<2x128xf32>
      %67 = arith.negf %66 : vector<2x128xf32>
      %68 = math.exp %67 : vector<2x128xf32>
      %cst_49 = arith.constant 1.000000e+00 : f32
      %69 = vector.broadcast %cst_49 : f32 to vector<2x128xf32>
      %70 = arith.addf %69, %68 : vector<2x128xf32>
      %71 = arith.divf %69, %70 : vector<2x128xf32>
      %72 = vector.extract_strided_slice %65 {offsets = [0, 128], sizes = [2, 128], strides = [1, 1]} : vector<2x512xf32> to vector<2x128xf32>
      %73 = arith.negf %72 : vector<2x128xf32>
      %74 = math.exp %73 : vector<2x128xf32>
      %cst_50 = arith.constant 1.000000e+00 : f32
      %75 = vector.broadcast %cst_50 : f32 to vector<2x128xf32>
      %76 = arith.addf %75, %74 : vector<2x128xf32>
      %77 = arith.divf %75, %76 : vector<2x128xf32>
      %78 = vector.extract_strided_slice %65 {offsets = [0, 256], sizes = [2, 128], strides = [1, 1]} : vector<2x512xf32> to vector<2x128xf32>
      %79 = math.tanh %78 : vector<2x128xf32>
      %80 = vector.extract_strided_slice %65 {offsets = [0, 384], sizes = [2, 128], strides = [1, 1]} : vector<2x512xf32> to vector<2x128xf32>
      %81 = arith.negf %80 : vector<2x128xf32>
      %82 = math.exp %81 : vector<2x128xf32>
      %cst_51 = arith.constant 1.000000e+00 : f32
      %83 = vector.broadcast %cst_51 : f32 to vector<2x128xf32>
      %84 = arith.addf %83, %82 : vector<2x128xf32>
      %85 = arith.divf %83, %84 : vector<2x128xf32>
      %86 = arith.mulf %77, %59 : vector<2x128xf32>
      %87 = arith.mulf %71, %79 : vector<2x128xf32>
      %88 = arith.addf %86, %87 : vector<2x128xf32>
      %89 = math.tanh %88 : vector<2x128xf32>
      %90 = arith.mulf %85, %89 : vector<2x128xf32>
      %91 = arith.index_cast %c0_i32_45 : i32 to index
      %c0_52 = arith.constant 0 : index
      %c0_53 = arith.constant 0 : index
      %92 = vector.load %arg19[%91, %c0_52, %c0_53] : memref<8x2x128xf32, #tpu.memory_space<vmem>>, vector<1x2x128xf32>
      %93 = vector.shape_cast %92 : vector<1x2x128xf32> to vector<2x128xf32>
      %94 = vector.shape_cast %90 : vector<2x128xf32> to vector<1x2x128xf32>
      tpu.vector_store %arg19[%91, %c0_52, %c0_53], %94 {strides = array<i32>} : memref<8x2x128xf32, #tpu.memory_space<vmem>>, vector<1x2x128xf32>,
      %c1_i32 = arith.constant 1 : i32
      %95 = arith.index_cast %c1_i32 : i32 to index
      %c0_54 = arith.constant 0 : index
      %c0_55 = arith.constant 0 : index
      %96 = vector.load %arg18[%95, %c0_54, %c0_55] : memref<8x2x512xf32, #tpu.memory_space<vmem>>, vector<1x2x512xf32>
      %97 = vector.shape_cast %96 : vector<1x2x512xf32> to vector<2x512xf32>
      %98 = arith.truncf %90 : vector<2x128xf32> to vector<2x128xbf16>
      %cst_56 = arith.constant dense<0.000000e+00> : vector<2x512xf32>
      %99 = tpu.matmul %98, %14, %cst_56 {dimension_numbers = #tpu.dot_dimension_numbers<[1], [0], [0], [1], [0, 0, 1, 1], [], []>} : vector<2x128xbf16>, vector<128x512xbf16>, vector<2x512xf32> -> vector<2x512xf32>
      %100 = arith.addf %97, %99 : vector<2x512xf32>
      %101 = vector.extract_strided_slice %100 {offsets = [0, 0], sizes = [2, 128], strides = [1, 1]} : vector<2x512xf32> to vector<2x128xf32>
      %102 = arith.negf %101 : vector<2x128xf32>
      %103 = math.exp %102 : vector<2x128xf32>
      %cst_57 = arith.constant 1.000000e+00 : f32
      %104 = vector.broadcast %cst_57 : f32 to vector<2x128xf32>
      %105 = arith.addf %104, %103 : vector<2x128xf32>
      %106 = arith.divf %104, %105 : vector<2x128xf32>
      %107 = vector.extract_strided_slice %100 {offsets = [0, 128], sizes = [2, 128], strides = [1, 1]} : vector<2x512xf32> to vector<2x128xf32>
      %108 = arith.negf %107 : vector<2x128xf32>
      %109 = math.exp %108 : vector<2x128xf32>
      %cst_58 = arith.constant 1.000000e+00 : f32
      %110 = vector.broadcast %cst_58 : f32 to vector<2x128xf32>
      %111 = arith.addf %110, %109 : vector<2x128xf32>
      %112 = arith.divf %110, %111 : vector<2x128xf32>
      %113 = vector.extract_strided_slice %100 {offsets = [0, 256], sizes = [2, 128], strides = [1, 1]} : vector<2x512xf32> to vector<2x128xf32>
      %114 = math.tanh %113 : vector<2x128xf32>
      %115 = vector.extract_strided_slice %100 {offsets = [0, 384], sizes = [2, 128], strides = [1, 1]} : vector<2x512xf32> to vector<2x128xf32>
      %116 = arith.negf %115 : vector<2x128xf32>
      %117 = math.exp %116 : vector<2x128xf32>
      %cst_59 = arith.constant 1.000000e+00 : f32
      %118 = vector.broadcast %cst_59 : f32 to vector<2x128xf32>
      %119 = arith.addf %118, %117 : vector<2x128xf32>
      %120 = arith.divf %118, %119 : vector<2x128xf32>
      %121 = arith.mulf %112, %88 : vector<2x128xf32>
      %122 = arith.mulf %106, %114 : vector<2x128xf32>
      %123 = arith.addf %121, %122 : vector<2x128xf32>
      %124 = math.tanh %123 : vector<2x128xf32>
      %125 = arith.mulf %120, %124 : vector<2x128xf32>
      %126 = arith.index_cast %c1_i32 : i32 to index
      %c0_60 = arith.constant 0 : index
      %c0_61 = arith.constant 0 : index
      %127 = vector.load %arg19[%126, %c0_60, %c0_61] : memref<8x2x128xf32, #tpu.memory_space<vmem>>, vector<1x2x128xf32>
      %128 = vector.shape_cast %127 : vector<1x2x128xf32> to vector<2x128xf32>
      %129 = vector.shape_cast %125 : vector<2x128xf32> to vector<1x2x128xf32>
      tpu.vector_store %arg19[%126, %c0_60, %c0_61], %129 {strides = array<i32>} : memref<8x2x128xf32, #tpu.memory_space<vmem>>, vector<1x2x128xf32>,
      %c2_i32 = arith.constant 2 : i32
      %130 = arith.index_cast %c2_i32 : i32 to index
      %c0_62 = arith.constant 0 : index
      %c0_63 = arith.constant 0 : index
      %131 = vector.load %arg18[%130, %c0_62, %c0_63] : memref<8x2x512xf32, #tpu.memory_space<vmem>>, vector<1x2x512xf32>
      %132 = vector.shape_cast %131 : vector<1x2x512xf32> to vector<2x512xf32>
      %133 = arith.truncf %125 : vector<2x128xf32> to vector<2x128xbf16>
      %cst_64 = arith.constant dense<0.000000e+00> : vector<2x512xf32>
      %134 = tpu.matmul %133, %14, %cst_64 {dimension_numbers = #tpu.dot_dimension_numbers<[1], [0], [0], [1], [0, 0, 1, 1], [], []>} : vector<2x128xbf16>, vector<128x512xbf16>, vector<2x512xf32> -> vector<2x512xf32>
      %135 = arith.addf %132, %134 : vector<2x512xf32>
      %136 = vector.extract_strided_slice %135 {offsets = [0, 0], sizes = [2, 128], strides = [1, 1]} : vector<2x512xf32> to vector<2x128xf32>
      %137 = arith.negf %136 : vector<2x128xf32>
      %138 = math.exp %137 : vector<2x128xf32>
      %cst_65 = arith.constant 1.000000e+00 : f32
      %139 = vector.broadcast %cst_65 : f32 to vector<2x128xf32>
      %140 = arith.addf %139, %138 : vector<2x128xf32>
      %141 = arith.divf %139, %140 : vector<2x128xf32>
      %142 = vector.extract_strided_slice %135 {offsets = [0, 128], sizes = [2, 128], strides = [1, 1]} : vector<2x512xf32> to vector<2x128xf32>
      %143 = arith.negf %142 : vector<2x128xf32>
      %144 = math.exp %143 : vector<2x128xf32>
      %cst_66 = arith.constant 1.000000e+00 : f32
      %145 = vector.broadcast %cst_66 : f32 to vector<2x128xf32>
      %146 = arith.addf %145, %144 : vector<2x128xf32>
      %147 = arith.divf %145, %146 : vector<2x128xf32>
      %148 = vector.extract_strided_slice %135 {offsets = [0, 256], sizes = [2, 128], strides = [1, 1]} : vector<2x512xf32> to vector<2x128xf32>
      %149 = math.tanh %148 : vector<2x128xf32>
      %150 = vector.extract_strided_slice %135 {offsets = [0, 384], sizes = [2, 128], strides = [1, 1]} : vector<2x512xf32> to vector<2x128xf32>
      %151 = arith.negf %150 : vector<2x128xf32>
      %152 = math.exp %151 : vector<2x128xf32>
      %cst_67 = arith.constant 1.000000e+00 : f32
      %153 = vector.broadcast %cst_67 : f32 to vector<2x128xf32>
      %154 = arith.addf %153, %152 : vector<2x128xf32>
      %155 = arith.divf %153, %154 : vector<2x128xf32>
      %156 = arith.mulf %147, %123 : vector<2x128xf32>
      %157 = arith.mulf %141, %149 : vector<2x128xf32>
      %158 = arith.addf %156, %157 : vector<2x128xf32>
      %159 = math.tanh %158 : vector<2x128xf32>
      %160 = arith.mulf %155, %159 : vector<2x128xf32>
      %161 = arith.index_cast %c2_i32 : i32 to index
      %c0_68 = arith.constant 0 : index
      %c0_69 = arith.constant 0 : index
      %162 = vector.load %arg19[%161, %c0_68, %c0_69] : memref<8x2x128xf32, #tpu.memory_space<vmem>>, vector<1x2x128xf32>
      %163 = vector.shape_cast %162 : vector<1x2x128xf32> to vector<2x128xf32>
      %164 = vector.shape_cast %160 : vector<2x128xf32> to vector<1x2x128xf32>
      tpu.vector_store %arg19[%161, %c0_68, %c0_69], %164 {strides = array<i32>} : memref<8x2x128xf32, #tpu.memory_space<vmem>>, vector<1x2x128xf32>,
      %c3_i32 = arith.constant 3 : i32
      %165 = arith.index_cast %c3_i32 : i32 to index
      %c0_70 = arith.constant 0 : index
      %c0_71 = arith.constant 0 : index
      %166 = vector.load %arg18[%165, %c0_70, %c0_71] : memref<8x2x512xf32, #tpu.memory_space<vmem>>, vector<1x2x512xf32>
      %167 = vector.shape_cast %166 : vector<1x2x512xf32> to vector<2x512xf32>
      %168 = arith.truncf %160 : vector<2x128xf32> to vector<2x128xbf16>
      %cst_72 = arith.constant dense<0.000000e+00> : vector<2x512xf32>
      %169 = tpu.matmul %168, %14, %cst_72 {dimension_numbers = #tpu.dot_dimension_numbers<[1], [0], [0], [1], [0, 0, 1, 1], [], []>} : vector<2x128xbf16>, vector<128x512xbf16>, vector<2x512xf32> -> vector<2x512xf32>
      %170 = arith.addf %167, %169 : vector<2x512xf32>
      %171 = vector.extract_strided_slice %170 {offsets = [0, 0], sizes = [2, 128], strides = [1, 1]} : vector<2x512xf32> to vector<2x128xf32>
      %172 = arith.negf %171 : vector<2x128xf32>
      %173 = math.exp %172 : vector<2x128xf32>
      %cst_73 = arith.constant 1.000000e+00 : f32
      %174 = vector.broadcast %cst_73 : f32 to vector<2x128xf32>
      %175 = arith.addf %174, %173 : vector<2x128xf32>
      %176 = arith.divf %174, %175 : vector<2x128xf32>
      %177 = vector.extract_strided_slice %170 {offsets = [0, 128], sizes = [2, 128], strides = [1, 1]} : vector<2x512xf32> to vector<2x128xf32>
      %178 = arith.negf %177 : vector<2x128xf32>
      %179 = math.exp %178 : vector<2x128xf32>
      %cst_74 = arith.constant 1.000000e+00 : f32
      %180 = vector.broadcast %cst_74 : f32 to vector<2x128xf32>
      %181 = arith.addf %180, %179 : vector<2x128xf32>
      %182 = arith.divf %180, %181 : vector<2x128xf32>
      %183 = vector.extract_strided_slice %170 {offsets = [0, 256], sizes = [2, 128], strides = [1, 1]} : vector<2x512xf32> to vector<2x128xf32>
      %184 = math.tanh %183 : vector<2x128xf32>
      %185 = vector.extract_strided_slice %170 {offsets = [0, 384], sizes = [2, 128], strides = [1, 1]} : vector<2x512xf32> to vector<2x128xf32>
      %186 = arith.negf %185 : vector<2x128xf32>
      %187 = math.exp %186 : vector<2x128xf32>
      %cst_75 = arith.constant 1.000000e+00 : f32
      %188 = vector.broadcast %cst_75 : f32 to vector<2x128xf32>
      %189 = arith.addf %188, %187 : vector<2x128xf32>
      %190 = arith.divf %188, %189 : vector<2x128xf32>
      %191 = arith.mulf %182, %158 : vector<2x128xf32>
      %192 = arith.mulf %176, %184 : vector<2x128xf32>
      %193 = arith.addf %191, %192 : vector<2x128xf32>
      %194 = math.tanh %193 : vector<2x128xf32>
      %195 = arith.mulf %190, %194 : vector<2x128xf32>
      %196 = arith.index_cast %c3_i32 : i32 to index
      %c0_76 = arith.constant 0 : index
      %c0_77 = arith.constant 0 : index
      %197 = vector.load %arg19[%196, %c0_76, %c0_77] : memref<8x2x128xf32, #tpu.memory_space<vmem>>, vector<1x2x128xf32>
      %198 = vector.shape_cast %197 : vector<1x2x128xf32> to vector<2x128xf32>
      %199 = vector.shape_cast %195 : vector<2x128xf32> to vector<1x2x128xf32>
      tpu.vector_store %arg19[%196, %c0_76, %c0_77], %199 {strides = array<i32>} : memref<8x2x128xf32, #tpu.memory_space<vmem>>, vector<1x2x128xf32>,
      %c4_i32 = arith.constant 4 : i32
      %200 = arith.index_cast %c4_i32 : i32 to index
      %c0_78 = arith.constant 0 : index
      %c0_79 = arith.constant 0 : index
      %201 = vector.load %arg18[%200, %c0_78, %c0_79] : memref<8x2x512xf32, #tpu.memory_space<vmem>>, vector<1x2x512xf32>
      %202 = vector.shape_cast %201 : vector<1x2x512xf32> to vector<2x512xf32>
      %203 = arith.truncf %195 : vector<2x128xf32> to vector<2x128xbf16>
      %cst_80 = arith.constant dense<0.000000e+00> : vector<2x512xf32>
      %204 = tpu.matmul %203, %14, %cst_80 {dimension_numbers = #tpu.dot_dimension_numbers<[1], [0], [0], [1], [0, 0, 1, 1], [], []>} : vector<2x128xbf16>, vector<128x512xbf16>, vector<2x512xf32> -> vector<2x512xf32>
      %205 = arith.addf %202, %204 : vector<2x512xf32>
      %206 = vector.extract_strided_slice %205 {offsets = [0, 0], sizes = [2, 128], strides = [1, 1]} : vector<2x512xf32> to vector<2x128xf32>
      %207 = arith.negf %206 : vector<2x128xf32>
      %208 = math.exp %207 : vector<2x128xf32>
      %cst_81 = arith.constant 1.000000e+00 : f32
      %209 = vector.broadcast %cst_81 : f32 to vector<2x128xf32>
      %210 = arith.addf %209, %208 : vector<2x128xf32>
      %211 = arith.divf %209, %210 : vector<2x128xf32>
      %212 = vector.extract_strided_slice %205 {offsets = [0, 128], sizes = [2, 128], strides = [1, 1]} : vector<2x512xf32> to vector<2x128xf32>
      %213 = arith.negf %212 : vector<2x128xf32>
      %214 = math.exp %213 : vector<2x128xf32>
      %cst_82 = arith.constant 1.000000e+00 : f32
      %215 = vector.broadcast %cst_82 : f32 to vector<2x128xf32>
      %216 = arith.addf %215, %214 : vector<2x128xf32>
      %217 = arith.divf %215, %216 : vector<2x128xf32>
      %218 = vector.extract_strided_slice %205 {offsets = [0, 256], sizes = [2, 128], strides = [1, 1]} : vector<2x512xf32> to vector<2x128xf32>
      %219 = math.tanh %218 : vector<2x128xf32>
      %220 = vector.extract_strided_slice %205 {offsets = [0, 384], sizes = [2, 128], strides = [1, 1]} : vector<2x512xf32> to vector<2x128xf32>
      %221 = arith.negf %220 : vector<2x128xf32>
      %222 = math.exp %221 : vector<2x128xf32>
      %cst_83 = arith.constant 1.000000e+00 : f32
      %223 = vector.broadcast %cst_83 : f32 to vector<2x128xf32>
      %224 = arith.addf %223, %222 : vector<2x128xf32>
      %225 = arith.divf %223, %224 : vector<2x128xf32>
      %226 = arith.mulf %217, %193 : vector<2x128xf32>
      %227 = arith.mulf %211, %219 : vector<2x128xf32>
      %228 = arith.addf %226, %227 : vector<2x128xf32>
      %229 = math.tanh %228 : vector<2x128xf32>
      %230 = arith.mulf %225, %229 : vector<2x128xf32>
      %231 = arith.index_cast %c4_i32 : i32 to index
      %c0_84 = arith.constant 0 : index
      %c0_85 = arith.constant 0 : index
      %232 = vector.load %arg19[%231, %c0_84, %c0_85] : memref<8x2x128xf32, #tpu.memory_space<vmem>>, vector<1x2x128xf32>
      %233 = vector.shape_cast %232 : vector<1x2x128xf32> to vector<2x128xf32>
      %234 = vector.shape_cast %230 : vector<2x128xf32> to vector<1x2x128xf32>
      tpu.vector_store %arg19[%231, %c0_84, %c0_85], %234 {strides = array<i32>} : memref<8x2x128xf32, #tpu.memory_space<vmem>>, vector<1x2x128xf32>,
      %c5_i32 = arith.constant 5 : i32
      %235 = arith.index_cast %c5_i32 : i32 to index
      %c0_86 = arith.constant 0 : index
      %c0_87 = arith.constant 0 : index
      %236 = vector.load %arg18[%235, %c0_86, %c0_87] : memref<8x2x512xf32, #tpu.memory_space<vmem>>, vector<1x2x512xf32>
      %237 = vector.shape_cast %236 : vector<1x2x512xf32> to vector<2x512xf32>
      %238 = arith.truncf %230 : vector<2x128xf32> to vector<2x128xbf16>
      %cst_88 = arith.constant dense<0.000000e+00> : vector<2x512xf32>
      %239 = tpu.matmul %238, %14, %cst_88 {dimension_numbers = #tpu.dot_dimension_numbers<[1], [0], [0], [1], [0, 0, 1, 1], [], []>} : vector<2x128xbf16>, vector<128x512xbf16>, vector<2x512xf32> -> vector<2x512xf32>
      %240 = arith.addf %237, %239 : vector<2x512xf32>
      %241 = vector.extract_strided_slice %240 {offsets = [0, 0], sizes = [2, 128], strides = [1, 1]} : vector<2x512xf32> to vector<2x128xf32>
      %242 = arith.negf %241 : vector<2x128xf32>
      %243 = math.exp %242 : vector<2x128xf32>
      %cst_89 = arith.constant 1.000000e+00 : f32
      %244 = vector.broadcast %cst_89 : f32 to vector<2x128xf32>
      %245 = arith.addf %244, %243 : vector<2x128xf32>
      %246 = arith.divf %244, %245 : vector<2x128xf32>
      %247 = vector.extract_strided_slice %240 {offsets = [0, 128], sizes = [2, 128], strides = [1, 1]} : vector<2x512xf32> to vector<2x128xf32>
      %248 = arith.negf %247 : vector<2x128xf32>
      %249 = math.exp %248 : vector<2x128xf32>
      %cst_90 = arith.constant 1.000000e+00 : f32
      %250 = vector.broadcast %cst_90 : f32 to vector<2x128xf32>
      %251 = arith.addf %250, %249 : vector<2x128xf32>
      %252 = arith.divf %250, %251 : vector<2x128xf32>
      %253 = vector.extract_strided_slice %240 {offsets = [0, 256], sizes = [2, 128], strides = [1, 1]} : vector<2x512xf32> to vector<2x128xf32>
      %254 = math.tanh %253 : vector<2x128xf32>
      %255 = vector.extract_strided_slice %240 {offsets = [0, 384], sizes = [2, 128], strides = [1, 1]} : vector<2x512xf32> to vector<2x128xf32>
      %256 = arith.negf %255 : vector<2x128xf32>
      %257 = math.exp %256 : vector<2x128xf32>
      %cst_91 = arith.constant 1.000000e+00 : f32
      %258 = vector.broadcast %cst_91 : f32 to vector<2x128xf32>
      %259 = arith.addf %258, %257 : vector<2x128xf32>
      %260 = arith.divf %258, %259 : vector<2x128xf32>
      %261 = arith.mulf %252, %228 : vector<2x128xf32>
      %262 = arith.mulf %246, %254 : vector<2x128xf32>
      %263 = arith.addf %261, %262 : vector<2x128xf32>
      %264 = math.tanh %263 : vector<2x128xf32>
      %265 = arith.mulf %260, %264 : vector<2x128xf32>
      %266 = arith.index_cast %c5_i32 : i32 to index
      %c0_92 = arith.constant 0 : index
      %c0_93 = arith.constant 0 : index
      %267 = vector.load %arg19[%266, %c0_92, %c0_93] : memref<8x2x128xf32, #tpu.memory_space<vmem>>, vector<1x2x128xf32>
      %268 = vector.shape_cast %267 : vector<1x2x128xf32> to vector<2x128xf32>
      %269 = vector.shape_cast %265 : vector<2x128xf32> to vector<1x2x128xf32>
      tpu.vector_store %arg19[%266, %c0_92, %c0_93], %269 {strides = array<i32>} : memref<8x2x128xf32, #tpu.memory_space<vmem>>, vector<1x2x128xf32>,
      %c6_i32 = arith.constant 6 : i32
      %270 = arith.index_cast %c6_i32 : i32 to index
      %c0_94 = arith.constant 0 : index
      %c0_95 = arith.constant 0 : index
      %271 = vector.load %arg18[%270, %c0_94, %c0_95] : memref<8x2x512xf32, #tpu.memory_space<vmem>>, vector<1x2x512xf32>
      %272 = vector.shape_cast %271 : vector<1x2x512xf32> to vector<2x512xf32>
      %273 = arith.truncf %265 : vector<2x128xf32> to vector<2x128xbf16>
      %cst_96 = arith.constant dense<0.000000e+00> : vector<2x512xf32>
      %274 = tpu.matmul %273, %14, %cst_96 {dimension_numbers = #tpu.dot_dimension_numbers<[1], [0], [0], [1], [0, 0, 1, 1], [], []>} : vector<2x128xbf16>, vector<128x512xbf16>, vector<2x512xf32> -> vector<2x512xf32>
      %275 = arith.addf %272, %274 : vector<2x512xf32>
      %276 = vector.extract_strided_slice %275 {offsets = [0, 0], sizes = [2, 128], strides = [1, 1]} : vector<2x512xf32> to vector<2x128xf32>
      %277 = arith.negf %276 : vector<2x128xf32>
      %278 = math.exp %277 : vector<2x128xf32>
      %cst_97 = arith.constant 1.000000e+00 : f32
      %279 = vector.broadcast %cst_97 : f32 to vector<2x128xf32>
      %280 = arith.addf %279, %278 : vector<2x128xf32>
      %281 = arith.divf %279, %280 : vector<2x128xf32>
      %282 = vector.extract_strided_slice %275 {offsets = [0, 128], sizes = [2, 128], strides = [1, 1]} : vector<2x512xf32> to vector<2x128xf32>
      %283 = arith.negf %282 : vector<2x128xf32>
      %284 = math.exp %283 : vector<2x128xf32>
      %cst_98 = arith.constant 1.000000e+00 : f32
      %285 = vector.broadcast %cst_98 : f32 to vector<2x128xf32>
      %286 = arith.addf %285, %284 : vector<2x128xf32>
      %287 = arith.divf %285, %286 : vector<2x128xf32>
      %288 = vector.extract_strided_slice %275 {offsets = [0, 256], sizes = [2, 128], strides = [1, 1]} : vector<2x512xf32> to vector<2x128xf32>
      %289 = math.tanh %288 : vector<2x128xf32>
      %290 = vector.extract_strided_slice %275 {offsets = [0, 384], sizes = [2, 128], strides = [1, 1]} : vector<2x512xf32> to vector<2x128xf32>
      %291 = arith.negf %290 : vector<2x128xf32>
      %292 = math.exp %291 : vector<2x128xf32>
      %cst_99 = arith.constant 1.000000e+00 : f32
      %293 = vector.broadcast %cst_99 : f32 to vector<2x128xf32>
      %294 = arith.addf %293, %292 : vector<2x128xf32>
      %295 = arith.divf %293, %294 : vector<2x128xf32>
      %296 = arith.mulf %287, %263 : vector<2x128xf32>
      %297 = arith.mulf %281, %289 : vector<2x128xf32>
      %298 = arith.addf %296, %297 : vector<2x128xf32>
      %299 = math.tanh %298 : vector<2x128xf32>
      %300 = arith.mulf %295, %299 : vector<2x128xf32>
      %301 = arith.index_cast %c6_i32 : i32 to index
      %c0_100 = arith.constant 0 : index
      %c0_101 = arith.constant 0 : index
      %302 = vector.load %arg19[%301, %c0_100, %c0_101] : memref<8x2x128xf32, #tpu.memory_space<vmem>>, vector<1x2x128xf32>
      %303 = vector.shape_cast %302 : vector<1x2x128xf32> to vector<2x128xf32>
      %304 = vector.shape_cast %300 : vector<2x128xf32> to vector<1x2x128xf32>
      tpu.vector_store %arg19[%301, %c0_100, %c0_101], %304 {strides = array<i32>} : memref<8x2x128xf32, #tpu.memory_space<vmem>>, vector<1x2x128xf32>,
      %c7_i32 = arith.constant 7 : i32
      %305 = arith.index_cast %c7_i32 : i32 to index
      %c0_102 = arith.constant 0 : index
      %c0_103 = arith.constant 0 : index
      %306 = vector.load %arg18[%305, %c0_102, %c0_103] : memref<8x2x512xf32, #tpu.memory_space<vmem>>, vector<1x2x512xf32>
      %307 = vector.shape_cast %306 : vector<1x2x512xf32> to vector<2x512xf32>
      %308 = arith.truncf %300 : vector<2x128xf32> to vector<2x128xbf16>
      %cst_104 = arith.constant dense<0.000000e+00> : vector<2x512xf32>
      %309 = tpu.matmul %308, %14, %cst_104 {dimension_numbers = #tpu.dot_dimension_numbers<[1], [0], [0], [1], [0, 0, 1, 1], [], []>} : vector<2x128xbf16>, vector<128x512xbf16>, vector<2x512xf32> -> vector<2x512xf32>
      %310 = arith.addf %307, %309 : vector<2x512xf32>
      %311 = vector.extract_strided_slice %310 {offsets = [0, 0], sizes = [2, 128], strides = [1, 1]} : vector<2x512xf32> to vector<2x128xf32>
      %312 = arith.negf %311 : vector<2x128xf32>
      %313 = math.exp %312 : vector<2x128xf32>
      %cst_105 = arith.constant 1.000000e+00 : f32
      %314 = vector.broadcast %cst_105 : f32 to vector<2x128xf32>
      %315 = arith.addf %314, %313 : vector<2x128xf32>
      %316 = arith.divf %314, %315 : vector<2x128xf32>
      %317 = vector.extract_strided_slice %310 {offsets = [0, 128], sizes = [2, 128], strides = [1, 1]} : vector<2x512xf32> to vector<2x128xf32>
      %318 = arith.negf %317 : vector<2x128xf32>
      %319 = math.exp %318 : vector<2x128xf32>
      %cst_106 = arith.constant 1.000000e+00 : f32
      %320 = vector.broadcast %cst_106 : f32 to vector<2x128xf32>
      %321 = arith.addf %320, %319 : vector<2x128xf32>
      %322 = arith.divf %320, %321 : vector<2x128xf32>
      %323 = vector.extract_strided_slice %310 {offsets = [0, 256], sizes = [2, 128], strides = [1, 1]} : vector<2x512xf32> to vector<2x128xf32>
      %324 = math.tanh %323 : vector<2x128xf32>
      %325 = vector.extract_strided_slice %310 {offsets = [0, 384], sizes = [2, 128], strides = [1, 1]} : vector<2x512xf32> to vector<2x128xf32>
      %326 = arith.negf %325 : vector<2x128xf32>
      %327 = math.exp %326 : vector<2x128xf32>
      %cst_107 = arith.constant 1.000000e+00 : f32
      %328 = vector.broadcast %cst_107 : f32 to vector<2x128xf32>
      %329 = arith.addf %328, %327 : vector<2x128xf32>
      %330 = arith.divf %328, %329 : vector<2x128xf32>
      %331 = arith.mulf %322, %298 : vector<2x128xf32>
      %332 = arith.mulf %316, %324 : vector<2x128xf32>
      %333 = arith.addf %331, %332 : vector<2x128xf32>
      %334 = math.tanh %333 : vector<2x128xf32>
      %335 = arith.mulf %330, %334 : vector<2x128xf32>
      %336 = arith.index_cast %c7_i32 : i32 to index
      %c0_108 = arith.constant 0 : index
      %c0_109 = arith.constant 0 : index
      %337 = vector.load %arg19[%336, %c0_108, %c0_109] : memref<8x2x128xf32, #tpu.memory_space<vmem>>, vector<1x2x128xf32>
      %338 = vector.shape_cast %337 : vector<1x2x128xf32> to vector<2x128xf32>
      %339 = vector.shape_cast %335 : vector<2x128xf32> to vector<1x2x128xf32>
      tpu.vector_store %arg19[%336, %c0_108, %c0_109], %339 {strides = array<i32>} : memref<8x2x128xf32, #tpu.memory_space<vmem>>, vector<1x2x128xf32>,
      %c8_i32 = arith.constant 8 : i32
      %c0_110 = arith.constant 0 : index
      %c0_111 = arith.constant 0 : index
      %340 = vector.load %arg16[%c0_110, %c0_111] : memref<2x128xf32, #tpu.memory_space<vmem>>, vector<2x128xf32>
      tpu.vector_store %arg16[%c0_110, %c0_111], %335 {strides = array<i32>} : memref<2x128xf32, #tpu.memory_space<vmem>>, vector<2x128xf32>,
      %c0_112 = arith.constant 0 : index
      %c0_113 = arith.constant 0 : index
      %341 = vector.load %arg17[%c0_112, %c0_113] : memref<2x128xf32, #tpu.memory_space<vmem>>, vector<2x128xf32>
      tpu.vector_store %arg17[%c0_112, %c0_113], %333 {strides = array<i32>} : memref<2x128xf32, #tpu.memory_space<vmem>>, vector<2x128xf32>,
      %c0_114 = arith.constant 0 : index
      %c0_115 = arith.constant 0 : index
      %342 = vector.load %arg14[%c0_114, %c0_115] : memref<2x128xf32, #tpu.memory_space<vmem>>, vector<2x128xf32>
      tpu.vector_store %arg14[%c0_114, %c0_115], %335 {strides = array<i32>} : memref<2x128xf32, #tpu.memory_space<vmem>>, vector<2x128xf32>,
      %c0_116 = arith.constant 0 : index
      %c0_117 = arith.constant 0 : index
      %343 = vector.load %arg15[%c0_116, %c0_117] : memref<2x128xf32, #tpu.memory_space<vmem>>, vector<2x128xf32>
      tpu.vector_store %arg15[%c0_116, %c0_117], %333 {strides = array<i32>} : memref<2x128xf32, #tpu.memory_space<vmem>>, vector<2x128xf32>,
    } else {
    }
    %c0_14 = arith.constant 0 : index
    %c0_15 = arith.constant 0 : index
    %c0_16 = arith.constant 0 : index
    %18 = vector.load %arg19[%c0_14, %c0_15, %c0_16] : memref<8x2x128xf32, #tpu.memory_space<vmem>>, vector<8x2x128xf32>
    %19 = tpu.transpose %18, [1, 0, 2] : vector<8x2x128xf32> -> vector<2x8x128xf32>
    %20 = vector.shape_cast %19 : vector<2x8x128xf32> to vector<16x128xf32>
    %21 = arith.truncf %20 : vector<16x128xf32> to vector<16x128xbf16>
    %c0_17 = arith.constant 0 : index
    %c0_18 = arith.constant 0 : index
    %c0_19 = arith.constant 0 : index
    %22 = vector.load %arg2[%c0_17, %c0_18, %c0_19] : memref<2x128x128xbf16, #tpu.memory_space<vmem>>, vector<2x128x128xbf16>
    %c0_20 = arith.constant 0 : index
    %c0_21 = arith.constant 0 : index
    %23 = vector.load %arg9[%c0_20, %c0_21] : memref<128x128xbf16, #tpu.memory_space<vmem>>, vector<128x128xbf16>
    %cst_22 = arith.constant dense<0.000000e+00> : vector<16x128xf32>
    %24 = tpu.matmul %21, %23, %cst_22 {dimension_numbers = #tpu.dot_dimension_numbers<[1], [0], [0], [1], [0, 0, 1, 1], [], []>} : vector<16x128xbf16>, vector<128x128xbf16>, vector<16x128xf32> -> vector<16x128xf32>
    %25 = vector.shape_cast %24 : vector<16x128xf32> to vector<2x8x128xf32>
    %26 = arith.truncf %25 : vector<2x8x128xf32> to vector<2x8x128xbf16>
    "tpu.trace_start"() <{level = 10 : i32, message = "bth,bsh->bts"}> : () -> ()
    %cst_23 = arith.constant dense<0.000000e+00> : vector<2x8x128xf32>
    %27 = tpu.matmul %26, %22, %cst_23 {dimension_numbers = #tpu.dot_dimension_numbers<[2], [2], [1], [1], [0, 0, 0, 1, 1, 1], [0], [0]>} : vector<2x8x128xbf16>, vector<2x128x128xbf16>, vector<2x8x128xf32> -> vector<2x8x128xf32>
    "tpu.trace_stop"() : () -> ()
    %c0_24 = arith.constant 0 : index
    %c0_25 = arith.constant 0 : index
    %28 = vector.load %arg3[%c0_24, %c0_25] : memref<2x128xf32, #tpu.memory_space<vmem>>, vector<2x128xf32>
    %29 = vector.shape_cast %28 : vector<2x128xf32> to vector<2x1x128xf32>
    %30 = vector.broadcast %29 : vector<2x1x128xf32> to vector<2x8x128xf32>
    %31 = arith.addf %27, %30 : vector<2x8x128xf32>
    %cst_26 = arith.constant dense<0xFF800000> : vector<2x8xf32>
    %32 = vector.multi_reduction <maximumf>, %31, %cst_26 [2] : vector<2x8x128xf32> to vector<2x8xf32>
    %33 = vector.shape_cast %32 : vector<2x8xf32> to vector<2x8x1xf32>
    %34 = vector.broadcast %33 : vector<2x8x1xf32> to vector<2x8x128xf32>
    %35 = arith.subf %31, %34 : vector<2x8x128xf32>
    %36 = math.exp %35 : vector<2x8x128xf32>
    %cst_27 = arith.constant dense<0.000000e+00> : vector<2x8xf32>
    %37 = vector.multi_reduction <add>, %36, %cst_27 [2] : vector<2x8x128xf32> to vector<2x8xf32>
    %38 = vector.shape_cast %37 : vector<2x8xf32> to vector<2x8x1xf32>
    %39 = tpu.reciprocal %38 {approx = true} : vector<2x8x1xf32> -> vector<2x8x1xf32>
    %40 = vector.broadcast %39 : vector<2x8x1xf32> to vector<2x8x128xf32>
    %41 = arith.mulf %36, %40 : vector<2x8x128xf32>
    %42 = arith.truncf %41 : vector<2x8x128xf32> to vector<2x8x128xbf16>
    "tpu.trace_start"() <{level = 10 : i32, message = "bts,bsh->bth"}> : () -> ()
    %cst_28 = arith.constant dense<0.000000e+00> : vector<2x8x128xf32>
    %43 = tpu.matmul %42, %22, %cst_28 {dimension_numbers = #tpu.dot_dimension_numbers<[2], [1], [1], [2], [0, 0, 0, 1, 1, 2], [0], [0]>} : vector<2x8x128xbf16>, vector<2x128x128xbf16>, vector<2x8x128xf32> -> vector<2x8x128xf32>
    "tpu.trace_stop"() : () -> ()
    %44 = vector.shape_cast %43 : vector<2x8x128xf32> to vector<16x128xf32>
    %45 = arith.truncf %44 : vector<16x128xf32> to vector<16x128xbf16>
    %c0_29 = arith.constant 0 : index
    %c0_30 = arith.constant 0 : index
    %46 = vector.load %arg10[%c0_29, %c0_30] : memref<128x128xbf16, #tpu.memory_space<vmem>>, vector<128x128xbf16>
    %cst_31 = arith.constant dense<0.000000e+00> : vector<16x128xf32>
    %47 = tpu.matmul %45, %46, %cst_31 {dimension_numbers = #tpu.dot_dimension_numbers<[1], [0], [0], [1], [0, 0, 1, 1], [], []>} : vector<16x128xbf16>, vector<128x128xbf16>, vector<16x128xf32> -> vector<16x128xf32>
    %c0_32 = arith.constant 0 : index
    %c0_33 = arith.constant 0 : index
    %48 = vector.load %arg11[%c0_32, %c0_33] : memref<128x128xbf16, #tpu.memory_space<vmem>>, vector<128x128xbf16>
    %cst_34 = arith.constant dense<0.000000e+00> : vector<16x128xf32>
    %49 = tpu.matmul %21, %48, %cst_34 {dimension_numbers = #tpu.dot_dimension_numbers<[1], [0], [0], [1], [0, 0, 1, 1], [], []>} : vector<16x128xbf16>, vector<128x128xbf16>, vector<16x128xf32> -> vector<16x128xf32>
    %50 = arith.addf %47, %49 : vector<16x128xf32>
    %51 = math.tanh %50 : vector<16x128xf32>
    %52 = vector.shape_cast %51 : vector<16x128xf32> to vector<2x8x128xf32>
    %53 = tpu.transpose %52, [1, 0, 2] : vector<2x8x128xf32> -> vector<8x2x128xf32>
    %c0_35 = arith.constant 0 : index
    %c0_36 = arith.constant 0 : index
    %c0_37 = arith.constant 0 : index
    %54 = vector.load %arg12[%c0_35, %c0_36, %c0_37] : memref<8x2x128xf32, #tpu.memory_space<vmem>>, vector<8x2x128xf32>
    tpu.vector_store %arg12[%c0_35, %c0_36, %c0_37], %53 {strides = array<i32>} : memref<8x2x128xf32, #tpu.memory_space<vmem>>, vector<8x2x128xf32>,
    %55 = tpu.transpose %41, [1, 0, 2] : vector<2x8x128xf32> -> vector<8x2x128xf32>
    %56 = arith.truncf %55 : vector<8x2x128xf32> to vector<8x2x128xbf16>
    %c0_38 = arith.constant 0 : index
    %c0_39 = arith.constant 0 : index
    %c0_40 = arith.constant 0 : index
    %57 = vector.load %arg13[%c0_38, %c0_39, %c0_40] : memref<8x2x128xbf16, #tpu.memory_space<vmem>>, vector<8x2x128xbf16>
    tpu.vector_store %arg13[%c0_38, %c0_39, %c0_40], %56 {strides = array<i32>} : memref<8x2x128xbf16, #tpu.memory_space<vmem>>, vector<8x2x128xbf16>,
    return
  }
  func.func @transform_0(%arg0: i32) -> (i32, i32, i32) {
    %c0_i32 = arith.constant 0 : i32
    %c0_i32_0 = arith.constant 0 : i32
    %c0_i32_1 = arith.constant 0 : i32
    return %c0_i32, %arg0, %c0_i32_0 : i32, i32, i32
  }
  func.func @transform_1(%arg0: i32) -> (i32, i32, i32) {
    %c0_i32 = arith.constant 0 : i32
    %c0_i32_0 = arith.constant 0 : i32
    %c0_i32_1 = arith.constant 0 : i32
    %c0_i32_2 = arith.constant 0 : i32
    return %c0_i32, %c0_i32_0, %c0_i32_1 : i32, i32, i32
  }
  func.func @transform_2(%arg0: i32) -> (i32, i32) {
    %c0_i32 = arith.constant 0 : i32
    %c0_i32_0 = arith.constant 0 : i32
    %c0_i32_1 = arith.constant 0 : i32
    return %c0_i32, %c0_i32_0 : i32, i32
  }
  func.func @transform_3(%arg0: i32) -> (i32, i32) {
    %c0_i32 = arith.constant 0 : i32
    %c0_i32_0 = arith.constant 0 : i32
    %c0_i32_1 = arith.constant 0 : i32
    return %c0_i32, %c0_i32_0 : i32, i32
  }
  func.func @transform_4(%arg0: i32) -> (i32, i32) {
    %c0_i32 = arith.constant 0 : i32
    %c0_i32_0 = arith.constant 0 : i32
    %c0_i32_1 = arith.constant 0 : i32
    return %c0_i32, %c0_i32_0 : i32, i32
  }
  func.func @transform_5(%arg0: i32) -> (i32, i32) {
    %c0_i32 = arith.constant 0 : i32
    %c0_i32_0 = arith.constant 0 : i32
    %c0_i32_1 = arith.constant 0 : i32
    return %c0_i32, %c0_i32_0 : i32, i32
  }
  func.func @transform_6(%arg0: i32) -> (i32, i32) {
    %c0_i32 = arith.constant 0 : i32
    %c0_i32_0 = arith.constant 0 : i32
    %c0_i32_1 = arith.constant 0 : i32
    return %c0_i32, %c0_i32_0 : i32, i32
  }
  func.func @transform_7(%arg0: i32) -> (i32, i32) {
    %c0_i32 = arith.constant 0 : i32
    %c0_i32_0 = arith.constant 0 : i32
    %c0_i32_1 = arith.constant 0 : i32
    return %c0_i32, %c0_i32_0 : i32, i32
  }
  func.func @transform_8(%arg0: i32) -> (i32, i32) {
    %c0_i32 = arith.constant 0 : i32
    %c0_i32_0 = arith.constant 0 : i32
    %c0_i32_1 = arith.constant 0 : i32
    return %c0_i32, %c0_i32_0 : i32, i32
  }
  func.func @transform_9(%arg0: i32) -> (i32, i32) {
    %c0_i32 = arith.constant 0 : i32
    %c0_i32_0 = arith.constant 0 : i32
    %c0_i32_1 = arith.constant 0 : i32
    return %c0_i32, %c0_i32_0 : i32, i32
  }
  func.func @transform_10(%arg0: i32) -> (i32, i32) {
    %c0_i32 = arith.constant 0 : i32
    %c0_i32_0 = arith.constant 0 : i32
    %c0_i32_1 = arith.constant 0 : i32
    return %c0_i32, %c0_i32_0 : i32, i32
  }
  func.func @transform_11(%arg0: i32) -> (i32, i32, i32) {
    %c0_i32 = arith.constant 0 : i32
    %c0_i32_0 = arith.constant 0 : i32
    %c0_i32_1 = arith.constant 0 : i32
    return %arg0, %c0_i32, %c0_i32_0 : i32, i32, i32
  }
  func.func @transform_12(%arg0: i32) -> (i32, i32, i32) {
    %c0_i32 = arith.constant 0 : i32
    %c0_i32_0 = arith.constant 0 : i32
    %c0_i32_1 = arith.constant 0 : i32
    return %arg0, %c0_i32, %c0_i32_0 : i32, i32, i32
  }
  func.func @transform_13(%arg0: i32) -> (i32, i32) {
    %c0_i32 = arith.constant 0 : i32
    %c0_i32_0 = arith.constant 0 : i32
    %c0_i32_1 = arith.constant 0 : i32
    return %c0_i32, %c0_i32_0 : i32, i32
  }
  func.func @transform_14(%arg0: i32) -> (i32, i32) {
    %c0_i32 = arith.constant 0 : i32
    %c0_i32_0 = arith.constant 0 : i32
    %c0_i32_1 = arith.constant 0 : i32
    return %c0_i32, %c0_i32_0 : i32, i32
  }
}

</mosaic_0001>

<llo_original>
// kernel: rnn_decoder_forward.1
$region0: #{rnn_decoder_forward.1}
  #allocation0 [shape = 'u32[]', space=smem, size = 0x4, offset = 0x4, fixed_abs, tag = 'smem constant byte address 0x4 - core index']
  #allocation1 [shape = 'u32[72,128]{1,0:T(1,128)}', space=vmem, size = 0x9000, scoped, tag = 'internal scratch']
  #allocation2 [shape = 'f32[2,128]{1,0:T(2,128)}', space=vmem, size = 0x400, scoped, tag = 'scratch operand']
  #allocation3 [shape = 'f32[2,128]{1,0:T(2,128)}', space=vmem, size = 0x400, scoped, tag = 'scratch operand']
  #allocation4 [shape = 'f32[8,2,512]{2,1,0:T(2,128)}', space=vmem, size = 0x8000, scoped, tag = 'scratch operand']
  #allocation5 [shape = 'f32[8,2,128]{2,1,0:T(2,128)}', space=vmem, size = 0x2000, scoped, tag = 'scratch operand']
  %s0 = inlined_call_operand.vmem [shape: bf16[2,8,128], index: 0, kind: input, shape index: {}]
  %s1 = inlined_call_operand.vmem [shape: bf16[2,128,128], index: 1, kind: input, shape index: {}]
  %s2 = inlined_call_operand.vmem [shape: f32[2,128], index: 2, kind: input, shape index: {}]
  %s3 = inlined_call_operand.vmem [shape: f32[2,128], index: 3, kind: input, shape index: {}]
  %s4 = inlined_call_operand.vmem [shape: f32[2,128], index: 4, kind: input, shape index: {}]
  %s5 = inlined_call_operand.vmem [shape: bf16[128,512], index: 5, kind: input, shape index: {}]
  %s6 = inlined_call_operand.vmem [shape: f32[1,512], index: 6, kind: input, shape index: {}]
  %s7 = inlined_call_operand.vmem [shape: bf16[128,512], index: 7, kind: input, shape index: {}]
  %s8 = inlined_call_operand.vmem [shape: bf16[128,128], index: 8, kind: input, shape index: {}]
  %s9 = inlined_call_operand.vmem [shape: bf16[128,128], index: 9, kind: input, shape index: {}]
  %s10 = inlined_call_operand.vmem [shape: bf16[128,128], index: 10, kind: input, shape index: {}]
  %s11 = inlined_call_operand.vmem [shape: f32[8,2,128], index: 11, kind: output, shape index: {0}]
  %s12 = inlined_call_operand.vmem [shape: bf16[8,2,128], index: 12, kind: output, shape index: {1}]
  %s13 = inlined_call_operand.vmem [shape: f32[2,128], index: 13, kind: output, shape index: {2}]
  %s14 = inlined_call_operand.vmem [shape: f32[2,128], index: 14, kind: output, shape index: {3}]
  %15 = xla_tuple %s11, %s12, %s13, %s14
  %s16 = sld [smem:[#allocation0]]
  $region86: #{rnn_decoder_forward.1} parent=0
    _
  %s18 = ssub.s32 1, %s16
  %s19 = scalar_select 0, %s18, %s16
  // Predicated region
  $region2: #{rnn_decoder_forward.1} parent=0 // pred_check
    _
  $region3: #{rnn_decoder_forward.1} parent=0 // pred_check_branch
    %21 = sbr.rel (0) target = $region5
  $region4: #{rnn_decoder_forward.1} parent=0 // pred_region
    _
  $region5: #{rnn_decoder_forward.1} parent=0 // pred_fallthru
    _
  // Predicated region
  $region6: #{rnn_decoder_forward.1} parent=0 // pred_check
    _
  $region7: #{rnn_decoder_forward.1} parent=0 // pred_check_branch
    %23 = sbr.rel (0) target = $region9
  $region8: #{rnn_decoder_forward.1} parent=0 // pred_region
    _
  $region9: #{rnn_decoder_forward.1} parent=0 // pred_fallthru
    _
  // Predicated region
  $region10: #{rnn_decoder_forward.1} parent=0 // pred_check
    _
  $region11: #{rnn_decoder_forward.1} parent=0 // pred_check_branch
    %25 = sbr.rel (0) target = $region13
  $region12: #{rnn_decoder_forward.1} parent=0 // pred_region
    _
  $region13: #{rnn_decoder_forward.1} parent=0 // pred_fallthru
    _
  // Predicated region
  $region14: #{rnn_decoder_forward.1} parent=0 // pred_check
    _
  $region15: #{rnn_decoder_forward.1} parent=0 // pred_check_branch
    %27 = sbr.rel (0) target = $region17
  $region16: #{rnn_decoder_forward.1} parent=0 // pred_region
    _
  $region17: #{rnn_decoder_forward.1} parent=0 // pred_fallthru
    _
  // Predicated region
  $region18: #{rnn_decoder_forward.1} parent=0 // pred_check
    _
  $region19: #{rnn_decoder_forward.1} parent=0 // pred_check_branch
    %29 = sbr.rel (0) target = $region21
  $region20: #{rnn_decoder_forward.1} parent=0 // pred_region
    _
  $region21: #{rnn_decoder_forward.1} parent=0 // pred_fallthru
    _
  // Predicated region
  $region22: #{rnn_decoder_forward.1} parent=0 // pred_check
    _
  $region23: #{rnn_decoder_forward.1} parent=0 // pred_check_branch
    %31 = sbr.rel (0) target = $region25
  $region24: #{rnn_decoder_forward.1} parent=0 // pred_region
    _
  $region25: #{rnn_decoder_forward.1} parent=0 // pred_fallthru
    _
  // Predicated region
  $region26: #{rnn_decoder_forward.1} parent=0 // pred_check
    _
  $region27: #{rnn_decoder_forward.1} parent=0 // pred_check_branch
    %33 = sbr.rel (0) target = $region29
  $region28: #{rnn_decoder_forward.1} parent=0 // pred_region
    _
  $region29: #{rnn_decoder_forward.1} parent=0 // pred_fallthru
    _
  // Predicated region
  $region30: #{rnn_decoder_forward.1} parent=0 // pred_check
    _
  $region31: #{rnn_decoder_forward.1} parent=0 // pred_check_branch
    %35 = sbr.rel (0) target = $region33
  $region32: #{rnn_decoder_forward.1} parent=0 // pred_region
    _
  $region33: #{rnn_decoder_forward.1} parent=0 // pred_fallthru
    _
  // Predicated region
  $region34: #{rnn_decoder_forward.1} parent=0 // pred_check
    _
  $region35: #{rnn_decoder_forward.1} parent=0 // pred_check_branch
    %37 = sbr.rel (0) target = $region37
  $region36: #{rnn_decoder_forward.1} parent=0 // pred_region
    _
  $region37: #{rnn_decoder_forward.1} parent=0 // pred_fallthru
    _
  // Predicated region
  $region38: #{rnn_decoder_forward.1} parent=0 // pred_check
    _
  $region39: #{rnn_decoder_forward.1} parent=0 // pred_check_branch
    %39 = sbr.rel (0) target = $region41
  $region40: #{rnn_decoder_forward.1} parent=0 // pred_region
    _
  $region41: #{rnn_decoder_forward.1} parent=0 // pred_fallthru
    _
  // Predicated region
  $region42: #{rnn_decoder_forward.1} parent=0 // pred_check
    _
  $region43: #{rnn_decoder_forward.1} parent=0 // pred_check_branch
    %41 = sbr.rel (0) target = $region45
  $region44: #{rnn_decoder_forward.1} parent=0 // pred_region
    _
  $region45: #{rnn_decoder_forward.1} parent=0 // pred_fallthru
    _
  %p42 = scmp.eq.s32.totalorder 0, 0
  // Predicated region
  $region46: #{rnn_decoder_forward.1} parent=0 // pred_check
    %p43 = pneg %p42
  $region47: #{rnn_decoder_forward.1} parent=0 // pred_check_branch
    %45 = sbr.rel (%p43) target = $region49
  $region48: #{rnn_decoder_forward.1} parent=0 // pred_region
    %v46 = vld [vmem:[%s3] sm:$0x3]
    %47 = vst [vmem:[#allocation2] sm:$0x3] %v46
    %v48 = vld [vmem:[%s4] sm:$0x3]
    %49 = vst [vmem:[#allocation3] sm:$0x3] %v48
  $region49: #{rnn_decoder_forward.1} parent=0 // pred_fallthru
    _
  %v50 = vld [vmem:[%s0] sm:$0xf]
  %v51 = vld [vmem:[%s0 + $0x4] sm:$0xf]
  %v52 = vld [vmem:[%s5] sm:$0xff]
  %v53 = vld [vmem:[%s5 + $0x8] sm:$0xff]
  %v54 = vld [vmem:[%s5 + $0x10] sm:$0xff]
  %v55 = vld [vmem:[%s5 + $0x18] sm:$0xff]
  %v56 = vld [vmem:[%s5 + $0x20] sm:$0xff]
  %v57 = vld [vmem:[%s5 + $0x28] sm:$0xff]
  %v58 = vld [vmem:[%s5 + $0x30] sm:$0xff]
  %v59 = vld [vmem:[%s5 + $0x38] sm:$0xff]
  %v60 = vld [vmem:[%s5 + $0x40] sm:$0xff]
  %v61 = vld [vmem:[%s5 + $0x48] sm:$0xff]
  %v62 = vld [vmem:[%s5 + $0x50] sm:$0xff]
  %v63 = vld [vmem:[%s5 + $0x58] sm:$0xff]
  %v64 = vld [vmem:[%s5 + $0x60] sm:$0xff]
  %v65 = vld [vmem:[%s5 + $0x68] sm:$0xff]
  %v66 = vld [vmem:[%s5 + $0x70] sm:$0xff]
  %v67 = vld [vmem:[%s5 + $0x78] sm:$0xff]
  %v68 = vld [vmem:[%s5 + $0x80] sm:$0xff]
  %v69 = vld [vmem:[%s5 + $0x88] sm:$0xff]
  %v70 = vld [vmem:[%s5 + $0x90] sm:$0xff]
  %v71 = vld [vmem:[%s5 + $0x98] sm:$0xff]
  %v72 = vld [vmem:[%s5 + $0xa0] sm:$0xff]
  %v73 = vld [vmem:[%s5 + $0xa8] sm:$0xff]
  %v74 = vld [vmem:[%s5 + $0xb0] sm:$0xff]
  %v75 = vld [vmem:[%s5 + $0xb8] sm:$0xff]
  %v76 = vld [vmem:[%s5 + $0xc0] sm:$0xff]
  %v77 = vld [vmem:[%s5 + $0xc8] sm:$0xff]
  %v78 = vld [vmem:[%s5 + $0xd0] sm:$0xff]
  %v79 = vld [vmem:[%s5 + $0xd8] sm:$0xff]
  %v80 = vld [vmem:[%s5 + $0xe0] sm:$0xff]
  %v81 = vld [vmem:[%s5 + $0xe8] sm:$0xff]
  %v82 = vld [vmem:[%s5 + $0xf0] sm:$0xff]
  %v83 = vld [vmem:[%s5 + $0xf8] sm:$0xff]
  %v86 = vunpack.c.l.b16 %v50
  %v87 = vunpack.c.l.b16 %v51
  %v88 = vpack.c.b16 %v87, %v86
  %v122 = vunpack.c.l.b16 %v52
  %v123 = vunpack.c.h.b16 %v52
  %v124 = vunpack.c.l.b16 %v53
  %v125 = vunpack.c.h.b16 %v53
  %v126 = vunpack.c.l.b16 %v54
  %v127 = vunpack.c.h.b16 %v54
  %v128 = vunpack.c.l.b16 %v55
  %v129 = vunpack.c.h.b16 %v55
  %v130 = vunpack.c.l.b16 %v56
  %v131 = vunpack.c.h.b16 %v56
  %v132 = vunpack.c.l.b16 %v57
  %v133 = vunpack.c.h.b16 %v57
  %v134 = vunpack.c.l.b16 %v58
  %v135 = vunpack.c.h.b16 %v58
  %v136 = vunpack.c.l.b16 %v59
  %v137 = vunpack.c.h.b16 %v59
  %v138 = vunpack.c.l.b16 %v60
  %v139 = vunpack.c.h.b16 %v60
  %v140 = vunpack.c.l.b16 %v61
  %v141 = vunpack.c.h.b16 %v61
  %v142 = vunpack.c.l.b16 %v62
  %v143 = vunpack.c.h.b16 %v62
  %v144 = vunpack.c.l.b16 %v63
  %v145 = vunpack.c.h.b16 %v63
  %v146 = vunpack.c.l.b16 %v64
  %v147 = vunpack.c.h.b16 %v64
  %v148 = vunpack.c.l.b16 %v65
  %v149 = vunpack.c.h.b16 %v65
  %v150 = vunpack.c.l.b16 %v66
  %v151 = vunpack.c.h.b16 %v66
  %v152 = vunpack.c.l.b16 %v67
  %v153 = vunpack.c.h.b16 %v67
  %v154 = vunpack.c.l.b16 %v68
  %v155 = vunpack.c.h.b16 %v68
  %v156 = vunpack.c.l.b16 %v69
  %v157 = vunpack.c.h.b16 %v69
  %v158 = vunpack.c.l.b16 %v70
  %v159 = vunpack.c.h.b16 %v70
  %v160 = vunpack.c.l.b16 %v71
  %v161 = vunpack.c.h.b16 %v71
  %v162 = vunpack.c.l.b16 %v72
  %v163 = vunpack.c.h.b16 %v72
  %v164 = vunpack.c.l.b16 %v73
  %v165 = vunpack.c.h.b16 %v73
  %v166 = vunpack.c.l.b16 %v74
  %v167 = vunpack.c.h.b16 %v74
  %v168 = vunpack.c.l.b16 %v75
  %v169 = vunpack.c.h.b16 %v75
  %v170 = vunpack.c.l.b16 %v76
  %v171 = vunpack.c.h.b16 %v76
  %v172 = vunpack.c.l.b16 %v77
  %v173 = vunpack.c.h.b16 %v77
  %v174 = vunpack.c.l.b16 %v78
  %v175 = vunpack.c.h.b16 %v78
  %v176 = vunpack.c.l.b16 %v79
  %v177 = vunpack.c.h.b16 %v79
  %v178 = vunpack.c.l.b16 %v80
  %v179 = vunpack.c.h.b16 %v80
  %v180 = vunpack.c.l.b16 %v81
  %v181 = vunpack.c.h.b16 %v81
  %v182 = vunpack.c.l.b16 %v82
  %v183 = vunpack.c.h.b16 %v82
  %v184 = vunpack.c.l.b16 %v83
  %v185 = vunpack.c.h.b16 %v83
  %v186 = vpack.c.b16 %v126, %v122
  %v187 = vpack.c.b16 %v127, %v123
  %v188 = vpack.c.b16 %v128, %v124
  %v189 = vpack.c.b16 %v129, %v125
  %v190 = vpack.c.b16 %v134, %v130
  %v191 = vpack.c.b16 %v135, %v131
  %v192 = vpack.c.b16 %v136, %v132
  %v193 = vpack.c.b16 %v137, %v133
  %v194 = vpack.c.b16 %v142, %v138
  %v195 = vpack.c.b16 %v143, %v139
  %v196 = vpack.c.b16 %v144, %v140
  %v197 = vpack.c.b16 %v145, %v141
  %v198 = vpack.c.b16 %v150, %v146
  %v199 = vpack.c.b16 %v151, %v147
  %v200 = vpack.c.b16 %v152, %v148
  %v201 = vpack.c.b16 %v153, %v149
  %v202 = vpack.c.b16 %v158, %v154
  %v203 = vpack.c.b16 %v159, %v155
  %v204 = vpack.c.b16 %v160, %v156
  %v205 = vpack.c.b16 %v161, %v157
  %v206 = vpack.c.b16 %v166, %v162
  %v207 = vpack.c.b16 %v167, %v163
  %v208 = vpack.c.b16 %v168, %v164
  %v209 = vpack.c.b16 %v169, %v165
  %v210 = vpack.c.b16 %v174, %v170
  %v211 = vpack.c.b16 %v175, %v171
  %v212 = vpack.c.b16 %v176, %v172
  %v213 = vpack.c.b16 %v177, %v173
  %v214 = vpack.c.b16 %v182, %v178
  %v215 = vpack.c.b16 %v183, %v179
  %v216 = vpack.c.b16 %v184, %v180
  %v217 = vpack.c.b16 %v185, %v181
  %250 = vmatpush.bf16.msra.mxu0 %v214
  %251 = vmatpush.bf16.msra.mxu0 %v210
  %252 = vmatpush.bf16.msra.mxu0 %v206
  %253 = vmatpush.bf16.msra.mxu0 %v202
  %254 = vmatpush.bf16.msra.mxu0 %v198
  %255 = vmatpush.bf16.msra.mxu0 %v194
  %256 = vmatpush.bf16.msra.mxu0 %v190
  %257 = vmatpush.bf16.msra.mxu0 %v186
  %258 = vmatmul.bf16.gmra.mxu0 %v88
  %v259 = vpop.f32.mrf.mxu0
  %v260 = vadd.f32 0.0, %v259
  %v261 = vpop.f32.mrf.mxu0
  %v262 = vadd.f32 0.0, %v261
  %263 = vdwg.mxu0
  %264 = vmatpush.bf16.msra.mxu0 %v215
  %265 = vmatpush.bf16.msra.mxu0 %v211
  %266 = vmatpush.bf16.msra.mxu0 %v207
  %267 = vmatpush.bf16.msra.mxu0 %v203
  %268 = vmatpush.bf16.msra.mxu0 %v199
  %269 = vmatpush.bf16.msra.mxu0 %v195
  %270 = vmatpush.bf16.msra.mxu0 %v191
  %271 = vmatpush.bf16.msra.mxu0 %v187
  %272 = vmatmul.bf16.gmra.mxu0 %v88
  %v273 = vpop.f32.mrf.mxu0
  %v274 = vadd.f32 0.0, %v273
  %v275 = vpop.f32.mrf.mxu0
  %v276 = vadd.f32 0.0, %v275
  %277 = vdwg.mxu0
  %278 = vmatpush.bf16.msra.mxu0 %v216
  %279 = vmatpush.bf16.msra.mxu0 %v212
  %280 = vmatpush.bf16.msra.mxu0 %v208
  %281 = vmatpush.bf16.msra.mxu0 %v204
  %282 = vmatpush.bf16.msra.mxu0 %v200
  %283 = vmatpush.bf16.msra.mxu0 %v196
  %284 = vmatpush.bf16.msra.mxu0 %v192
  %285 = vmatpush.bf16.msra.mxu0 %v188
  %286 = vmatmul.bf16.gmra.mxu0 %v88
  %v287 = vpop.f32.mrf.mxu0
  %v288 = vadd.f32 0.0, %v287
  %v289 = vpop.f32.mrf.mxu0
  %v290 = vadd.f32 0.0, %v289
  %291 = vdwg.mxu0
  %292 = vmatpush.bf16.msra.mxu0 %v217
  %293 = vmatpush.bf16.msra.mxu0 %v213
  %294 = vmatpush.bf16.msra.mxu0 %v209
  %295 = vmatpush.bf16.msra.mxu0 %v205
  %296 = vmatpush.bf16.msra.mxu0 %v201
  %297 = vmatpush.bf16.msra.mxu0 %v197
  %298 = vmatpush.bf16.msra.mxu0 %v193
  %299 = vmatpush.bf16.msra.mxu0 %v189
  %300 = vmatmul.bf16.gmra.mxu0 %v88
  %v301 = vpop.f32.mrf.mxu0
  %v302 = vadd.f32 0.0, %v301
  %v303 = vpop.f32.mrf.mxu0
  %v304 = vadd.f32 0.0, %v303
  %305 = vdwg.mxu0
  %v314 = vrot.slane %v274, 6
  %v315 = vrot.slane %v288, 4
  %v316 = vrot.slane %v302, 2
  %v317 = vrot.slane %v276, 6
  %v318 = vrot.slane %v290, 4
  %v319 = vrot.slane %v304, 2
  %vm320 = vcmask 1041408
  %v321 = vsel %vm320, %v260, %v314
  %vm322 = vcmask 1045508
  %v323 = vsel %vm322, %v315, %v316
  %vm324 = vcmask 1043456
  %v325 = vsel %vm324, %v321, %v323
  %vm326 = vcmask 1043458
  %v327 = vsel %vm326, %v260, %v314
  %vm328 = vcmask 1045504
  %v329 = vsel %vm328, %v316, %v315
  %vm330 = vcmask 1045506
  %v331 = vsel %vm330, %v327, %v329
  %v332 = vrot.slane %v331, 2
  %v333 = vsel %vm322, %v260, %v314
  %v334 = vsel %vm320, %v315, %v316
  %v335 = vsel %vm324, %v334, %v333
  %v336 = vrot.slane %v335, 4
  %v337 = vsel %vm328, %v314, %v260
  %v338 = vsel %vm326, %v315, %v316
  %v339 = vsel %vm330, %v338, %v337
  %v340 = vrot.slane %v339, 6
  %v341 = vsel %vm320, %v262, %v317
  %v342 = vsel %vm322, %v318, %v319
  %v343 = vsel %vm324, %v341, %v342
  %v344 = vsel %vm326, %v262, %v317
  %v345 = vsel %vm328, %v319, %v318
  %v346 = vsel %vm330, %v344, %v345
  %v347 = vrot.slane %v346, 2
  %v348 = vsel %vm322, %v262, %v317
  %v349 = vsel %vm320, %v318, %v319
  %v350 = vsel %vm324, %v349, %v348
  %v351 = vrot.slane %v350, 4
  %v352 = vsel %vm328, %v317, %v262
  %v353 = vsel %vm326, %v318, %v319
  %v354 = vsel %vm330, %v353, %v352
  %v355 = vrot.slane %v354, 6
  %v364 = vrot.slane %v343, 4
  %vm365 = vcmask 1047556
  %v366 = vsel %vm365, %v364, %v325
  %v367 = vrot.slane %v325, 4
  %v368 = vsel %vm365, %v343, %v367
  %v370 = vunpack.c.l.s4 1934713408
  %v371 = vunpack.c.0.s8 %v370
  %v372 = vperm.slane %v366, %v371
  %v374 = vunpack.c.l.s4 1934713408
  %v375 = vunpack.c.0.s8 %v374
  %v376 = vperm.slane %v368, %v375
  %v377 = vrot.slane %v376, 4
  %v378 = vsel %vm365, %v377, %v372
  %v379 = vrot.slane %v372, 4
  %v380 = vsel %vm365, %v376, %v379
  %v381 = vrot.slane %v347, 4
  %v382 = vsel %vm365, %v381, %v332
  %v383 = vrot.slane %v332, 4
  %v384 = vsel %vm365, %v347, %v383
  %v386 = vunpack.c.l.s4 1934713408
  %v387 = vunpack.c.0.s8 %v386
  %v388 = vperm.slane %v382, %v387
  %v390 = vunpack.c.l.s4 1934713408
  %v391 = vunpack.c.0.s8 %v390
  %v392 = vperm.slane %v384, %v391
  %v393 = vrot.slane %v392, 4
  %v394 = vsel %vm365, %v393, %v388
  %v395 = vrot.slane %v388, 4
  %v396 = vsel %vm365, %v392, %v395
  %v397 = vrot.slane %v351, 4
  %v398 = vsel %vm365, %v397, %v336
  %v399 = vrot.slane %v336, 4
  %v400 = vsel %vm365, %v351, %v399
  %v402 = vunpack.c.l.s4 1934713408
  %v403 = vunpack.c.0.s8 %v402
  %v404 = vperm.slane %v398, %v403
  %v406 = vunpack.c.l.s4 1934713408
  %v407 = vunpack.c.0.s8 %v406
  %v408 = vperm.slane %v400, %v407
  %v409 = vrot.slane %v408, 4
  %v410 = vsel %vm365, %v409, %v404
  %v411 = vrot.slane %v404, 4
  %v412 = vsel %vm365, %v408, %v411
  %v413 = vrot.slane %v355, 4
  %v414 = vsel %vm365, %v413, %v340
  %v415 = vrot.slane %v340, 4
  %v416 = vsel %vm365, %v355, %v415
  %v418 = vunpack.c.l.s4 1934713408
  %v419 = vunpack.c.0.s8 %v418
  %v420 = vperm.slane %v414, %v419
  %v422 = vunpack.c.l.s4 1934713408
  %v423 = vunpack.c.0.s8 %v422
  %v424 = vperm.slane %v416, %v423
  %v425 = vrot.slane %v424, 4
  %v426 = vsel %vm365, %v425, %v420
  %v427 = vrot.slane %v420, 4
  %v428 = vsel %vm365, %v424, %v427
  %v429 = vld [vmem:[%s6] sm:$0xf]
  %v431 = vperm.slane %v429, 0
  %v432 = vperm.slane %v429, 1
  %v433 = vperm.slane %v429, 2
  %v434 = vperm.slane %v429, 3
  %v435 = vrot.slane %v432, 6
  %v436 = vrot.slane %v433, 4
  %v437 = vrot.slane %v434, 2
  %v438 = vsel %vm320, %v431, %v435
  %v439 = vsel %vm322, %v436, %v437
  %v440 = vsel %vm324, %v438, %v439
  %v442 = vadd.f32 %v378, %v440
  %v443 = vadd.f32 %v380, %v440
  %v444 = vadd.f32 %v394, %v440
  %v445 = vadd.f32 %v396, %v440
  %v446 = vadd.f32 %v410, %v440
  %v447 = vadd.f32 %v412, %v440
  %v448 = vadd.f32 %v426, %v440
  %v449 = vadd.f32 %v428, %v440
  %450 = vst [vmem:[#allocation4] sm:$0xff] %v442
  %451 = vst [vmem:[#allocation4 + $0x8] sm:$0xff] %v443
  %452 = vst [vmem:[#allocation4 + $0x10] sm:$0xff] %v444
  %453 = vst [vmem:[#allocation4 + $0x18] sm:$0xff] %v445
  %454 = vst [vmem:[#allocation4 + $0x20] sm:$0xff] %v446
  %455 = vst [vmem:[#allocation4 + $0x28] sm:$0xff] %v447
  %456 = vst [vmem:[#allocation4 + $0x30] sm:$0xff] %v448
  %457 = vst [vmem:[#allocation4 + $0x38] sm:$0xff] %v449
  %v458 = vld [vmem:[%s7] sm:$0xff]
  %v459 = vld [vmem:[%s7 + $0x8] sm:$0xff]
  %v460 = vld [vmem:[%s7 + $0x10] sm:$0xff]
  %v461 = vld [vmem:[%s7 + $0x18] sm:$0xff]
  %v462 = vld [vmem:[%s7 + $0x20] sm:$0xff]
  %v463 = vld [vmem:[%s7 + $0x28] sm:$0xff]
  %v464 = vld [vmem:[%s7 + $0x30] sm:$0xff]
  %v465 = vld [vmem:[%s7 + $0x38] sm:$0xff]
  %v466 = vld [vmem:[%s7 + $0x40] sm:$0xff]
  %v467 = vld [vmem:[%s7 + $0x48] sm:$0xff]
  %v468 = vld [vmem:[%s7 + $0x50] sm:$0xff]
  %v469 = vld [vmem:[%s7 + $0x58] sm:$0xff]
  %v470 = vld [vmem:[%s7 + $0x60] sm:$0xff]
  %v471 = vld [vmem:[%s7 + $0x68] sm:$0xff]
  %v472 = vld [vmem:[%s7 + $0x70] sm:$0xff]
  %v473 = vld [vmem:[%s7 + $0x78] sm:$0xff]
  %v474 = vld [vmem:[%s7 + $0x80] sm:$0xff]
  %v475 = vld [vmem:[%s7 + $0x88] sm:$0xff]
  %v476 = vld [vmem:[%s7 + $0x90] sm:$0xff]
  %v477 = vld [vmem:[%s7 + $0x98] sm:$0xff]
  %v478 = vld [vmem:[%s7 + $0xa0] sm:$0xff]
  %v479 = vld [vmem:[%s7 + $0xa8] sm:$0xff]
  %v480 = vld [vmem:[%s7 + $0xb0] sm:$0xff]
  %v481 = vld [vmem:[%s7 + $0xb8] sm:$0xff]
  %v482 = vld [vmem:[%s7 + $0xc0] sm:$0xff]
  %v483 = vld [vmem:[%s7 + $0xc8] sm:$0xff]
  %v484 = vld [vmem:[%s7 + $0xd0] sm:$0xff]
  %v485 = vld [vmem:[%s7 + $0xd8] sm:$0xff]
  %v486 = vld [vmem:[%s7 + $0xe0] sm:$0xff]
  %v487 = vld [vmem:[%s7 + $0xe8] sm:$0xff]
  %v488 = vld [vmem:[%s7 + $0xf0] sm:$0xff]
  %v489 = vld [vmem:[%s7 + $0xf8] sm:$0xff]
  // Predicated region
  $region50: #{rnn_decoder_forward.1} parent=0 // pred_check
    %p490 = pneg %p42
  $region51: #{rnn_decoder_forward.1} parent=0 // pred_check_branch
    %492 = sbr.rel (%p490) target = $region53
  $region52: #{rnn_decoder_forward.1} parent=0 // pred_region
    %v493 = vld [vmem:[#allocation2] sm:$0x3]
    %v494 = vld [vmem:[#allocation3] sm:$0x3]
    %v495 = vld [vmem:[#allocation4] sm:$0xff]
    %v496 = vpack.c.bf16 %v493, %v493
    %v529 = vunpack.c.l.b16 %v458
    %v530 = vunpack.c.h.b16 %v458
    %v531 = vunpack.c.l.b16 %v459
    %v532 = vunpack.c.h.b16 %v459
    %v533 = vunpack.c.l.b16 %v460
    %v534 = vunpack.c.h.b16 %v460
    %v535 = vunpack.c.l.b16 %v461
    %v536 = vunpack.c.h.b16 %v461
    %v537 = vunpack.c.l.b16 %v462
    %v538 = vunpack.c.h.b16 %v462
    %v539 = vunpack.c.l.b16 %v463
    %v540 = vunpack.c.h.b16 %v463
    %v541 = vunpack.c.l.b16 %v464
    %v542 = vunpack.c.h.b16 %v464
    %v543 = vunpack.c.l.b16 %v465
    %v544 = vunpack.c.h.b16 %v465
    %v545 = vunpack.c.l.b16 %v466
    %v546 = vunpack.c.h.b16 %v466
    %v547 = vunpack.c.l.b16 %v467
    %v548 = vunpack.c.h.b16 %v467
    %v549 = vunpack.c.l.b16 %v468
    %v550 = vunpack.c.h.b16 %v468
    %v551 = vunpack.c.l.b16 %v469
    %v552 = vunpack.c.h.b16 %v469
    %v553 = vunpack.c.l.b16 %v470
    %v554 = vunpack.c.h.b16 %v470
    %v555 = vunpack.c.l.b16 %v471
    %v556 = vunpack.c.h.b16 %v471
    %v557 = vunpack.c.l.b16 %v472
    %v558 = vunpack.c.h.b16 %v472
    %v559 = vunpack.c.l.b16 %v473
    %v560 = vunpack.c.h.b16 %v473
    %v561 = vunpack.c.l.b16 %v474
    %v562 = vunpack.c.h.b16 %v474
    %v563 = vunpack.c.l.b16 %v475
    %v564 = vunpack.c.h.b16 %v475
    %v565 = vunpack.c.l.b16 %v476
    %v566 = vunpack.c.h.b16 %v476
    %v567 = vunpack.c.l.b16 %v477
    %v568 = vunpack.c.h.b16 %v477
    %v569 = vunpack.c.l.b16 %v478
    %v570 = vunpack.c.h.b16 %v478
    %v571 = vunpack.c.l.b16 %v479
    %v572 = vunpack.c.h.b16 %v479
    %v573 = vunpack.c.l.b16 %v480
    %v574 = vunpack.c.h.b16 %v480
    %v575 = vunpack.c.l.b16 %v481
    %v576 = vunpack.c.h.b16 %v481
    %v577 = vunpack.c.l.b16 %v482
    %v578 = vunpack.c.h.b16 %v482
    %v579 = vunpack.c.l.b16 %v483
    %v580 = vunpack.c.h.b16 %v483
    %v581 = vunpack.c.l.b16 %v484
    %v582 = vunpack.c.h.b16 %v484
    %v583 = vunpack.c.l.b16 %v485
    %v584 = vunpack.c.h.b16 %v485
    %v585 = vunpack.c.l.b16 %v486
    %v586 = vunpack.c.h.b16 %v486
    %v587 = vunpack.c.l.b16 %v487
    %v588 = vunpack.c.h.b16 %v487
    %v589 = vunpack.c.l.b16 %v488
    %v590 = vunpack.c.h.b16 %v488
    %v591 = vunpack.c.l.b16 %v489
    %v592 = vunpack.c.h.b16 %v489
    %v593 = vpack.c.b16 %v533, %v529
    %v594 = vpack.c.b16 %v534, %v530
    %v595 = vpack.c.b16 %v535, %v531
    %v596 = vpack.c.b16 %v536, %v532
    %v597 = vpack.c.b16 %v541, %v537
    %v598 = vpack.c.b16 %v542, %v538
    %v599 = vpack.c.b16 %v543, %v539
    %v600 = vpack.c.b16 %v544, %v540
    %v601 = vpack.c.b16 %v549, %v545
    %v602 = vpack.c.b16 %v550, %v546
    %v603 = vpack.c.b16 %v551, %v547
    %v604 = vpack.c.b16 %v552, %v548
    %v605 = vpack.c.b16 %v557, %v553
    %v606 = vpack.c.b16 %v558, %v554
    %v607 = vpack.c.b16 %v559, %v555
    %v608 = vpack.c.b16 %v560, %v556
    %v609 = vpack.c.b16 %v565, %v561
    %v610 = vpack.c.b16 %v566, %v562
    %v611 = vpack.c.b16 %v567, %v563
    %v612 = vpack.c.b16 %v568, %v564
    %v613 = vpack.c.b16 %v573, %v569
    %v614 = vpack.c.b16 %v574, %v570
    %v615 = vpack.c.b16 %v575, %v571
    %v616 = vpack.c.b16 %v576, %v572
    %v617 = vpack.c.b16 %v581, %v577
    %v618 = vpack.c.b16 %v582, %v578
    %v619 = vpack.c.b16 %v583, %v579
    %v620 = vpack.c.b16 %v584, %v580
    %v621 = vpack.c.b16 %v589, %v585
    %v622 = vpack.c.b16 %v590, %v586
    %v623 = vpack.c.b16 %v591, %v587
    %v624 = vpack.c.b16 %v592, %v588
    %657 = vmatpush.bf16.msra.mxu0 %v621
    %658 = vmatpush.bf16.msra.mxu0 %v617
    %659 = vmatpush.bf16.msra.mxu0 %v613
    %660 = vmatpush.bf16.msra.mxu0 %v609
    %661 = vmatpush.bf16.msra.mxu0 %v605
    %662 = vmatpush.bf16.msra.mxu0 %v601
    %663 = vmatpush.bf16.msra.mxu0 %v597
    %664 = vmatpush.bf16.msra.mxu0 %v593
    %665 = vmatmul.bf16.gmra.mxu0 %v496
    %v666 = vpop.f32.mrf.mxu0
    %v667 = vadd.f32 0.0, %v666
    %v668 = vpop.f32.mrf.mxu0
    %669 = vdwg.mxu0
    %670 = vmatpush.bf16.msra.mxu0 %v622
    %671 = vmatpush.bf16.msra.mxu0 %v618
    %672 = vmatpush.bf16.msra.mxu0 %v614
    %673 = vmatpush.bf16.msra.mxu0 %v610
    %674 = vmatpush.bf16.msra.mxu0 %v606
    %675 = vmatpush.bf16.msra.mxu0 %v602
    %676 = vmatpush.bf16.msra.mxu0 %v598
    %677 = vmatpush.bf16.msra.mxu0 %v594
    %678 = vmatmul.bf16.gmra.mxu0 %v496
    %v679 = vpop.f32.mrf.mxu0
    %v680 = vadd.f32 0.0, %v679
    %v681 = vpop.f32.mrf.mxu0
    %682 = vdwg.mxu0
    %683 = vmatpush.bf16.msra.mxu0 %v623
    %684 = vmatpush.bf16.msra.mxu0 %v619
    %685 = vmatpush.bf16.msra.mxu0 %v615
    %686 = vmatpush.bf16.msra.mxu0 %v611
    %687 = vmatpush.bf16.msra.mxu0 %v607
    %688 = vmatpush.bf16.msra.mxu0 %v603
    %689 = vmatpush.bf16.msra.mxu0 %v599
    %690 = vmatpush.bf16.msra.mxu0 %v595
    %691 = vmatmul.bf16.gmra.mxu0 %v496
    %v692 = vpop.f32.mrf.mxu0
    %v693 = vadd.f32 0.0, %v692
    %v694 = vpop.f32.mrf.mxu0
    %695 = vdwg.mxu0
    %696 = vmatpush.bf16.msra.mxu0 %v624
    %697 = vmatpush.bf16.msra.mxu0 %v620
    %698 = vmatpush.bf16.msra.mxu0 %v616
    %699 = vmatpush.bf16.msra.mxu0 %v612
    %700 = vmatpush.bf16.msra.mxu0 %v608
    %701 = vmatpush.bf16.msra.mxu0 %v604
    %702 = vmatpush.bf16.msra.mxu0 %v600
    %703 = vmatpush.bf16.msra.mxu0 %v596
    %704 = vmatmul.bf16.gmra.mxu0 %v496
    %v705 = vpop.f32.mrf.mxu0
    %v706 = vadd.f32 0.0, %v705
    %v707 = vpop.f32.mrf.mxu0
    %708 = vdwg.mxu0
    %v713 = vrot.slane %v680, 6
    %v714 = vrot.slane %v693, 4
    %v715 = vrot.slane %v706, 2
    %v716 = vsel %vm320, %v667, %v713
    %v717 = vsel %vm322, %v714, %v715
    %v718 = vsel %vm324, %v716, %v717
    %v720 = vadd.f32 %v495, %v718
    %v721 = vxor.u32 %v720, 2147483648
    %v722 = vmul.f32 %v721, 1.442695
    %v723 = vpow.pop %v722
    %v724 = vadd.f32 %v723, 1.0
    %v725 = vrcp.pop %v724
    %v726 = vmul.f32 %v724, %v725
    %v727 = vsub.f32 1.0, %v726
    %v728 = vmul.f32 %v725, %v727
    %v729 = vadd.f32 %v725, %v728
    %vm730 = vweird.f32 %v724
    %vm731 = vweird.f32 %v725
    %vm732 = vmor %vm730, %vm731
    %v733 = vsel %vm732, %v725, %v729
    %v734 = vand.u32 2147483647, %v724
    %vm735 = vcmp.eq.f32.partialorder %v734, 8.507059e+37
    %v736 = vand.u32 %v724, 2147483648
    %v737 = vor.u32 1.1754944e-38, %v736
    %v738 = vsel %vm735, %v737, %v733
    %v739 = vmul.f32 1.0, %v738
    %v741 = vrot.slane %v720, 2
    %v743 = vxor.u32 %v741, 2147483648
    %v744 = vmul.f32 %v743, 1.442695
    %v745 = vpow.pop %v744
    %v746 = vadd.f32 %v745, 1.0
    %v747 = vrcp.pop %v746
    %v748 = vmul.f32 %v746, %v747
    %v749 = vsub.f32 1.0, %v748
    %v750 = vmul.f32 %v747, %v749
    %v751 = vadd.f32 %v747, %v750
    %vm752 = vweird.f32 %v746
    %vm753 = vweird.f32 %v747
    %vm754 = vmor %vm752, %vm753
    %v755 = vsel %vm754, %v747, %v751
    %v756 = vand.u32 2147483647, %v746
    %vm757 = vcmp.eq.f32.partialorder %v756, 8.507059e+37
    %v758 = vand.u32 %v746, 2147483648
    %v759 = vor.u32 1.1754944e-38, %v758
    %v760 = vsel %vm757, %v759, %v755
    %v761 = vmul.f32 1.0, %v760
    %v762 = vrot.slane %v720, 4
    %v764 = vtanh.pop %v762
    %v765 = vrot.slane %v720, 6
    %v767 = vxor.u32 %v765, 2147483648
    %v768 = vmul.f32 %v767, 1.442695
    %v769 = vpow.pop %v768
    %v770 = vadd.f32 %v769, 1.0
    %v771 = vrcp.pop %v770
    %v772 = vmul.f32 %v770, %v771
    %v773 = vsub.f32 1.0, %v772
    %v774 = vmul.f32 %v771, %v773
    %v775 = vadd.f32 %v771, %v774
    %vm776 = vweird.f32 %v770
    %vm777 = vweird.f32 %v771
    %vm778 = vmor %vm776, %vm777
    %v779 = vsel %vm778, %v771, %v775
    %v780 = vand.u32 2147483647, %v770
    %vm781 = vcmp.eq.f32.partialorder %v780, 8.507059e+37
    %v782 = vand.u32 %v770, 2147483648
    %v783 = vor.u32 1.1754944e-38, %v782
    %v784 = vsel %vm781, %v783, %v779
    %v785 = vmul.f32 1.0, %v784
    %v786 = vmul.f32 %v761, %v494
    %v787 = vmul.f32 %v739, %v764
    %v788 = vadd.f32 %v786, %v787
    %v789 = vtanh.pop %v788
    %v790 = vmul.f32 %v785, %v789
    %791 = vst [vmem:[#allocation5] sm:$0x3] %v790
    %s792 = scalar_lea.vmem [#allocation4], 8
    %v793 = vld [vmem:[%s792] sm:$0xff]
    %v794 = vpack.c.bf16 %v790, %v790
    %795 = vmatpush.bf16.msra.mxu0 %v621
    %796 = vmatpush.bf16.msra.mxu0 %v617
    %797 = vmatpush.bf16.msra.mxu0 %v613
    %798 = vmatpush.bf16.msra.mxu0 %v609
    %799 = vmatpush.bf16.msra.mxu0 %v605
    %800 = vmatpush.bf16.msra.mxu0 %v601
    %801 = vmatpush.bf16.msra.mxu0 %v597
    %802 = vmatpush.bf16.msra.mxu0 %v593
    %803 = vmatmul.bf16.gmra.mxu0 %v794
    %v804 = vpop.f32.mrf.mxu0
    %v805 = vadd.f32 0.0, %v804
    %v806 = vpop.f32.mrf.mxu0
    %807 = vdwg.mxu0
    %808 = vmatpush.bf16.msra.mxu0 %v622
    %809 = vmatpush.bf16.msra.mxu0 %v618
    %810 = vmatpush.bf16.msra.mxu0 %v614
    %811 = vmatpush.bf16.msra.mxu0 %v610
    %812 = vmatpush.bf16.msra.mxu0 %v606
    %813 = vmatpush.bf16.msra.mxu0 %v602
    %814 = vmatpush.bf16.msra.mxu0 %v598
    %815 = vmatpush.bf16.msra.mxu0 %v594
    %816 = vmatmul.bf16.gmra.mxu0 %v794
    %v817 = vpop.f32.mrf.mxu0
    %v818 = vadd.f32 0.0, %v817
    %v819 = vpop.f32.mrf.mxu0
    %820 = vdwg.mxu0
    %821 = vmatpush.bf16.msra.mxu0 %v623
    %822 = vmatpush.bf16.msra.mxu0 %v619
    %823 = vmatpush.bf16.msra.mxu0 %v615
    %824 = vmatpush.bf16.msra.mxu0 %v611
    %825 = vmatpush.bf16.msra.mxu0 %v607
    %826 = vmatpush.bf16.msra.mxu0 %v603
    %827 = vmatpush.bf16.msra.mxu0 %v599
    %828 = vmatpush.bf16.msra.mxu0 %v595
    %829 = vmatmul.bf16.gmra.mxu0 %v794
    %v830 = vpop.f32.mrf.mxu0
    %v831 = vadd.f32 0.0, %v830
    %v832 = vpop.f32.mrf.mxu0
    %833 = vdwg.mxu0
    %834 = vmatpush.bf16.msra.mxu0 %v624
    %835 = vmatpush.bf16.msra.mxu0 %v620
    %836 = vmatpush.bf16.msra.mxu0 %v616
    %837 = vmatpush.bf16.msra.mxu0 %v612
    %838 = vmatpush.bf16.msra.mxu0 %v608
    %839 = vmatpush.bf16.msra.mxu0 %v604
    %840 = vmatpush.bf16.msra.mxu0 %v600
    %841 = vmatpush.bf16.msra.mxu0 %v596
    %842 = vmatmul.bf16.gmra.mxu0 %v794
    %v843 = vpop.f32.mrf.mxu0
    %v844 = vadd.f32 0.0, %v843
    %v845 = vpop.f32.mrf.mxu0
    %846 = vdwg.mxu0
    %v851 = vrot.slane %v818, 6
    %v852 = vrot.slane %v831, 4
    %v853 = vrot.slane %v844, 2
    %v854 = vsel %vm320, %v805, %v851
    %v855 = vsel %vm322, %v852, %v853
    %v856 = vsel %vm324, %v854, %v855
    %v858 = vadd.f32 %v793, %v856
    %v859 = vxor.u32 %v858, 2147483648
    %v860 = vmul.f32 %v859, 1.442695
    %v861 = vpow.pop %v860
    %v862 = vadd.f32 %v861, 1.0
    %v863 = vrcp.pop %v862
    %v864 = vmul.f32 %v862, %v863
    %v865 = vsub.f32 1.0, %v864
    %v866 = vmul.f32 %v863, %v865
    %v867 = vadd.f32 %v863, %v866
    %vm868 = vweird.f32 %v862
    %vm869 = vweird.f32 %v863
    %vm870 = vmor %vm868, %vm869
    %v871 = vsel %vm870, %v863, %v867
    %v872 = vand.u32 2147483647, %v862
    %vm873 = vcmp.eq.f32.partialorder %v872, 8.507059e+37
    %v874 = vand.u32 %v862, 2147483648
    %v875 = vor.u32 1.1754944e-38, %v874
    %v876 = vsel %vm873, %v875, %v871
    %v877 = vmul.f32 1.0, %v876
    %v879 = vrot.slane %v858, 2
    %v881 = vxor.u32 %v879, 2147483648
    %v882 = vmul.f32 %v881, 1.442695
    %v883 = vpow.pop %v882
    %v884 = vadd.f32 %v883, 1.0
    %v885 = vrcp.pop %v884
    %v886 = vmul.f32 %v884, %v885
    %v887 = vsub.f32 1.0, %v886
    %v888 = vmul.f32 %v885, %v887
    %v889 = vadd.f32 %v885, %v888
    %vm890 = vweird.f32 %v884
    %vm891 = vweird.f32 %v885
    %vm892 = vmor %vm890, %vm891
    %v893 = vsel %vm892, %v885, %v889
    %v894 = vand.u32 2147483647, %v884
    %vm895 = vcmp.eq.f32.partialorder %v894, 8.507059e+37
    %v896 = vand.u32 %v884, 2147483648
    %v897 = vor.u32 1.1754944e-38, %v896
    %v898 = vsel %vm895, %v897, %v893
    %v899 = vmul.f32 1.0, %v898
    %v900 = vrot.slane %v858, 4
    %v902 = vtanh.pop %v900
    %v903 = vrot.slane %v858, 6
    %v905 = vxor.u32 %v903, 2147483648
    %v906 = vmul.f32 %v905, 1.442695
    %v907 = vpow.pop %v906
    %v908 = vadd.f32 %v907, 1.0
    %v909 = vrcp.pop %v908
    %v910 = vmul.f32 %v908, %v909
    %v911 = vsub.f32 1.0, %v910
    %v912 = vmul.f32 %v909, %v911
    %v913 = vadd.f32 %v909, %v912
    %vm914 = vweird.f32 %v908
    %vm915 = vweird.f32 %v909
    %vm916 = vmor %vm914, %vm915
    %v917 = vsel %vm916, %v909, %v913
    %v918 = vand.u32 2147483647, %v908
    %vm919 = vcmp.eq.f32.partialorder %v918, 8.507059e+37
    %v920 = vand.u32 %v908, 2147483648
    %v921 = vor.u32 1.1754944e-38, %v920
    %v922 = vsel %vm919, %v921, %v917
    %v923 = vmul.f32 1.0, %v922
    %v924 = vmul.f32 %v899, %v788
    %v925 = vmul.f32 %v877, %v902
    %v926 = vadd.f32 %v924, %v925
    %v927 = vtanh.pop %v926
    %v928 = vmul.f32 %v923, %v927
    %s929 = scalar_lea.vmem [#allocation5], 2
    %930 = vst [vmem:[%s929] sm:$0x3] %v928
    %s931 = scalar_lea.vmem [#allocation4], 16
    %v932 = vld [vmem:[%s931] sm:$0xff]
    %v933 = vpack.c.bf16 %v928, %v928
    %934 = vmatpush.bf16.msra.mxu0 %v621
    %935 = vmatpush.bf16.msra.mxu0 %v617
    %936 = vmatpush.bf16.msra.mxu0 %v613
    %937 = vmatpush.bf16.msra.mxu0 %v609
    %938 = vmatpush.bf16.msra.mxu0 %v605
    %939 = vmatpush.bf16.msra.mxu0 %v601
    %940 = vmatpush.bf16.msra.mxu0 %v597
    %941 = vmatpush.bf16.msra.mxu0 %v593
    %942 = vmatmul.bf16.gmra.mxu0 %v933
    %v943 = vpop.f32.mrf.mxu0
    %v944 = vadd.f32 0.0, %v943
    %v945 = vpop.f32.mrf.mxu0
    %946 = vdwg.mxu0
    %947 = vmatpush.bf16.msra.mxu0 %v622
    %948 = vmatpush.bf16.msra.mxu0 %v618
    %949 = vmatpush.bf16.msra.mxu0 %v614
    %950 = vmatpush.bf16.msra.mxu0 %v610
    %951 = vmatpush.bf16.msra.mxu0 %v606
    %952 = vmatpush.bf16.msra.mxu0 %v602
    %953 = vmatpush.bf16.msra.mxu0 %v598
    %954 = vmatpush.bf16.msra.mxu0 %v594
    %955 = vmatmul.bf16.gmra.mxu0 %v933
    %v956 = vpop.f32.mrf.mxu0
    %v957 = vadd.f32 0.0, %v956
    %v958 = vpop.f32.mrf.mxu0
    %959 = vdwg.mxu0
    %960 = vmatpush.bf16.msra.mxu0 %v623
    %961 = vmatpush.bf16.msra.mxu0 %v619
    %962 = vmatpush.bf16.msra.mxu0 %v615
    %963 = vmatpush.bf16.msra.mxu0 %v611
    %964 = vmatpush.bf16.msra.mxu0 %v607
    %965 = vmatpush.bf16.msra.mxu0 %v603
    %966 = vmatpush.bf16.msra.mxu0 %v599
    %967 = vmatpush.bf16.msra.mxu0 %v595
    %968 = vmatmul.bf16.gmra.mxu0 %v933
    %v969 = vpop.f32.mrf.mxu0
    %v970 = vadd.f32 0.0, %v969
    %v971 = vpop.f32.mrf.mxu0
    %972 = vdwg.mxu0
    %973 = vmatpush.bf16.msra.mxu0 %v624
    %974 = vmatpush.bf16.msra.mxu0 %v620
    %975 = vmatpush.bf16.msra.mxu0 %v616
    %976 = vmatpush.bf16.msra.mxu0 %v612
    %977 = vmatpush.bf16.msra.mxu0 %v608
    %978 = vmatpush.bf16.msra.mxu0 %v604
    %979 = vmatpush.bf16.msra.mxu0 %v600
    %980 = vmatpush.bf16.msra.mxu0 %v596
    %981 = vmatmul.bf16.gmra.mxu0 %v933
    %v982 = vpop.f32.mrf.mxu0
    %v983 = vadd.f32 0.0, %v982
    %v984 = vpop.f32.mrf.mxu0
    %985 = vdwg.mxu0
    %v990 = vrot.slane %v957, 6
    %v991 = vrot.slane %v970, 4
    %v992 = vrot.slane %v983, 2
    %v993 = vsel %vm320, %v944, %v990
    %v994 = vsel %vm322, %v991, %v992
    %v995 = vsel %vm324, %v993, %v994
    %v997 = vadd.f32 %v932, %v995
    %v998 = vxor.u32 %v997, 2147483648
    %v999 = vmul.f32 %v998, 1.442695
    %v1000 = vpow.pop %v999
    %v1001 = vadd.f32 %v1000, 1.0
    %v1002 = vrcp.pop %v1001
    %v1003 = vmul.f32 %v1001, %v1002
    %v1004 = vsub.f32 1.0, %v1003
    %v1005 = vmul.f32 %v1002, %v1004
    %v1006 = vadd.f32 %v1002, %v1005
    %vm1007 = vweird.f32 %v1001
    %vm1008 = vweird.f32 %v1002
    %vm1009 = vmor %vm1007, %vm1008
    %v1010 = vsel %vm1009, %v1002, %v1006
    %v1011 = vand.u32 2147483647, %v1001
    %vm1012 = vcmp.eq.f32.partialorder %v1011, 8.507059e+37
    %v1013 = vand.u32 %v1001, 2147483648
    %v1014 = vor.u32 1.1754944e-38, %v1013
    %v1015 = vsel %vm1012, %v1014, %v1010
    %v1016 = vmul.f32 1.0, %v1015
    %v1018 = vrot.slane %v997, 2
    %v1020 = vxor.u32 %v1018, 2147483648
    %v1021 = vmul.f32 %v1020, 1.442695
    %v1022 = vpow.pop %v1021
    %v1023 = vadd.f32 %v1022, 1.0
    %v1024 = vrcp.pop %v1023
    %v1025 = vmul.f32 %v1023, %v1024
    %v1026 = vsub.f32 1.0, %v1025
    %v1027 = vmul.f32 %v1024, %v1026
    %v1028 = vadd.f32 %v1024, %v1027
    %vm1029 = vweird.f32 %v1023
    %vm1030 = vweird.f32 %v1024
    %vm1031 = vmor %vm1029, %vm1030
    %v1032 = vsel %vm1031, %v1024, %v1028
    %v1033 = vand.u32 2147483647, %v1023
    %vm1034 = vcmp.eq.f32.partialorder %v1033, 8.507059e+37
    %v1035 = vand.u32 %v1023, 2147483648
    %v1036 = vor.u32 1.1754944e-38, %v1035
    %v1037 = vsel %vm1034, %v1036, %v1032
    %v1038 = vmul.f32 1.0, %v1037
    %v1039 = vrot.slane %v997, 4
    %v1041 = vtanh.pop %v1039
    %v1042 = vrot.slane %v997, 6
    %v1044 = vxor.u32 %v1042, 2147483648
    %v1045 = vmul.f32 %v1044, 1.442695
    %v1046 = vpow.pop %v1045
    %v1047 = vadd.f32 %v1046, 1.0
    %v1048 = vrcp.pop %v1047
    %v1049 = vmul.f32 %v1047, %v1048
    %v1050 = vsub.f32 1.0, %v1049
    %v1051 = vmul.f32 %v1048, %v1050
    %v1052 = vadd.f32 %v1048, %v1051
    %vm1053 = vweird.f32 %v1047
    %vm1054 = vweird.f32 %v1048
    %vm1055 = vmor %vm1053, %vm1054
    %v1056 = vsel %vm1055, %v1048, %v1052
    %v1057 = vand.u32 2147483647, %v1047
    %vm1058 = vcmp.eq.f32.partialorder %v1057, 8.507059e+37
    %v1059 = vand.u32 %v1047, 2147483648
    %v1060 = vor.u32 1.1754944e-38, %v1059
    %v1061 = vsel %vm1058, %v1060, %v1056
    %v1062 = vmul.f32 1.0, %v1061
    %v1063 = vmul.f32 %v1038, %v926
    %v1064 = vmul.f32 %v1016, %v1041
    %v1065 = vadd.f32 %v1063, %v1064
    %v1066 = vtanh.pop %v1065
    %v1067 = vmul.f32 %v1062, %v1066
    %s1068 = scalar_lea.vmem [#allocation5], 4
    %1069 = vst [vmem:[%s1068] sm:$0x3] %v1067
    %s1070 = scalar_lea.vmem [#allocation4], 24
    %v1071 = vld [vmem:[%s1070] sm:$0xff]
    %v1072 = vpack.c.bf16 %v1067, %v1067
    %1073 = vmatpush.bf16.msra.mxu0 %v621
    %1074 = vmatpush.bf16.msra.mxu0 %v617
    %1075 = vmatpush.bf16.msra.mxu0 %v613
    %1076 = vmatpush.bf16.msra.mxu0 %v609
    %1077 = vmatpush.bf16.msra.mxu0 %v605
    %1078 = vmatpush.bf16.msra.mxu0 %v601
    %1079 = vmatpush.bf16.msra.mxu0 %v597
    %1080 = vmatpush.bf16.msra.mxu0 %v593
    %1081 = vmatmul.bf16.gmra.mxu0 %v1072
    %v1082 = vpop.f32.mrf.mxu0
    %v1083 = vadd.f32 0.0, %v1082
    %v1084 = vpop.f32.mrf.mxu0
    %1085 = vdwg.mxu0
    %1086 = vmatpush.bf16.msra.mxu0 %v622
    %1087 = vmatpush.bf16.msra.mxu0 %v618
    %1088 = vmatpush.bf16.msra.mxu0 %v614
    %1089 = vmatpush.bf16.msra.mxu0 %v610
    %1090 = vmatpush.bf16.msra.mxu0 %v606
    %1091 = vmatpush.bf16.msra.mxu0 %v602
    %1092 = vmatpush.bf16.msra.mxu0 %v598
    %1093 = vmatpush.bf16.msra.mxu0 %v594
    %1094 = vmatmul.bf16.gmra.mxu0 %v1072
    %v1095 = vpop.f32.mrf.mxu0
    %v1096 = vadd.f32 0.0, %v1095
    %v1097 = vpop.f32.mrf.mxu0
    %1098 = vdwg.mxu0
    %1099 = vmatpush.bf16.msra.mxu0 %v623
    %1100 = vmatpush.bf16.msra.mxu0 %v619
    %1101 = vmatpush.bf16.msra.mxu0 %v615
    %1102 = vmatpush.bf16.msra.mxu0 %v611
    %1103 = vmatpush.bf16.msra.mxu0 %v607
    %1104 = vmatpush.bf16.msra.mxu0 %v603
    %1105 = vmatpush.bf16.msra.mxu0 %v599
    %1106 = vmatpush.bf16.msra.mxu0 %v595
    %1107 = vmatmul.bf16.gmra.mxu0 %v1072
    %v1108 = vpop.f32.mrf.mxu0
    %v1109 = vadd.f32 0.0, %v1108
    %v1110 = vpop.f32.mrf.mxu0
    %1111 = vdwg.mxu0
    %1112 = vmatpush.bf16.msra.mxu0 %v624
    %1113 = vmatpush.bf16.msra.mxu0 %v620
    %1114 = vmatpush.bf16.msra.mxu0 %v616
    %1115 = vmatpush.bf16.msra.mxu0 %v612
    %1116 = vmatpush.bf16.msra.mxu0 %v608
    %1117 = vmatpush.bf16.msra.mxu0 %v604
    %1118 = vmatpush.bf16.msra.mxu0 %v600
    %1119 = vmatpush.bf16.msra.mxu0 %v596
    %1120 = vmatmul.bf16.gmra.mxu0 %v1072
    %v1121 = vpop.f32.mrf.mxu0
    %v1122 = vadd.f32 0.0, %v1121
    %v1123 = vpop.f32.mrf.mxu0
    %1124 = vdwg.mxu0
    %v1129 = vrot.slane %v1096, 6
    %v1130 = vrot.slane %v1109, 4
    %v1131 = vrot.slane %v1122, 2
    %v1132 = vsel %vm320, %v1083, %v1129
    %v1133 = vsel %vm322, %v1130, %v1131
    %v1134 = vsel %vm324, %v1132, %v1133
    %v1136 = vadd.f32 %v1071, %v1134
    %v1137 = vxor.u32 %v1136, 2147483648
    %v1138 = vmul.f32 %v1137, 1.442695
    %v1139 = vpow.pop %v1138
    %v1140 = vadd.f32 %v1139, 1.0
    %v1141 = vrcp.pop %v1140
    %v1142 = vmul.f32 %v1140, %v1141
    %v1143 = vsub.f32 1.0, %v1142
    %v1144 = vmul.f32 %v1141, %v1143
    %v1145 = vadd.f32 %v1141, %v1144
    %vm1146 = vweird.f32 %v1140
    %vm1147 = vweird.f32 %v1141
    %vm1148 = vmor %vm1146, %vm1147
    %v1149 = vsel %vm1148, %v1141, %v1145
    %v1150 = vand.u32 2147483647, %v1140
    %vm1151 = vcmp.eq.f32.partialorder %v1150, 8.507059e+37
    %v1152 = vand.u32 %v1140, 2147483648
    %v1153 = vor.u32 1.1754944e-38, %v1152
    %v1154 = vsel %vm1151, %v1153, %v1149
    %v1155 = vmul.f32 1.0, %v1154
    %v1157 = vrot.slane %v1136, 2
    %v1159 = vxor.u32 %v1157, 2147483648
    %v1160 = vmul.f32 %v1159, 1.442695
    %v1161 = vpow.pop %v1160
    %v1162 = vadd.f32 %v1161, 1.0
    %v1163 = vrcp.pop %v1162
    %v1164 = vmul.f32 %v1162, %v1163
    %v1165 = vsub.f32 1.0, %v1164
    %v1166 = vmul.f32 %v1163, %v1165
    %v1167 = vadd.f32 %v1163, %v1166
    %vm1168 = vweird.f32 %v1162
    %vm1169 = vweird.f32 %v1163
    %vm1170 = vmor %vm1168, %vm1169
    %v1171 = vsel %vm1170, %v1163, %v1167
    %v1172 = vand.u32 2147483647, %v1162
    %vm1173 = vcmp.eq.f32.partialorder %v1172, 8.507059e+37
    %v1174 = vand.u32 %v1162, 2147483648
    %v1175 = vor.u32 1.1754944e-38, %v1174
    %v1176 = vsel %vm1173, %v1175, %v1171
    %v1177 = vmul.f32 1.0, %v1176
    %v1178 = vrot.slane %v1136, 4
    %v1180 = vtanh.pop %v1178
    %v1181 = vrot.slane %v1136, 6
    %v1183 = vxor.u32 %v1181, 2147483648
    %v1184 = vmul.f32 %v1183, 1.442695
    %v1185 = vpow.pop %v1184
    %v1186 = vadd.f32 %v1185, 1.0
    %v1187 = vrcp.pop %v1186
    %v1188 = vmul.f32 %v1186, %v1187
    %v1189 = vsub.f32 1.0, %v1188
    %v1190 = vmul.f32 %v1187, %v1189
    %v1191 = vadd.f32 %v1187, %v1190
    %vm1192 = vweird.f32 %v1186
    %vm1193 = vweird.f32 %v1187
    %vm1194 = vmor %vm1192, %vm1193
    %v1195 = vsel %vm1194, %v1187, %v1191
    %v1196 = vand.u32 2147483647, %v1186
    %vm1197 = vcmp.eq.f32.partialorder %v1196, 8.507059e+37
    %v1198 = vand.u32 %v1186, 2147483648
    %v1199 = vor.u32 1.1754944e-38, %v1198
    %v1200 = vsel %vm1197, %v1199, %v1195
    %v1201 = vmul.f32 1.0, %v1200
    %v1202 = vmul.f32 %v1177, %v1065
    %v1203 = vmul.f32 %v1155, %v1180
    %v1204 = vadd.f32 %v1202, %v1203
    %v1205 = vtanh.pop %v1204
    %v1206 = vmul.f32 %v1201, %v1205
    %s1207 = scalar_lea.vmem [#allocation5], 6
    %1208 = vst [vmem:[%s1207] sm:$0x3] %v1206
    %s1209 = scalar_lea.vmem [#allocation4], 32
    %v1210 = vld [vmem:[%s1209] sm:$0xff]
    %v1211 = vpack.c.bf16 %v1206, %v1206
    %1212 = vmatpush.bf16.msra.mxu0 %v621
    %1213 = vmatpush.bf16.msra.mxu0 %v617
    %1214 = vmatpush.bf16.msra.mxu0 %v613
    %1215 = vmatpush.bf16.msra.mxu0 %v609
    %1216 = vmatpush.bf16.msra.mxu0 %v605
    %1217 = vmatpush.bf16.msra.mxu0 %v601
    %1218 = vmatpush.bf16.msra.mxu0 %v597
    %1219 = vmatpush.bf16.msra.mxu0 %v593
    %1220 = vmatmul.bf16.gmra.mxu0 %v1211
    %v1221 = vpop.f32.mrf.mxu0
    %v1222 = vadd.f32 0.0, %v1221
    %v1223 = vpop.f32.mrf.mxu0
    %1224 = vdwg.mxu0
    %1225 = vmatpush.bf16.msra.mxu0 %v622
    %1226 = vmatpush.bf16.msra.mxu0 %v618
    %1227 = vmatpush.bf16.msra.mxu0 %v614
    %1228 = vmatpush.bf16.msra.mxu0 %v610
    %1229 = vmatpush.bf16.msra.mxu0 %v606
    %1230 = vmatpush.bf16.msra.mxu0 %v602
    %1231 = vmatpush.bf16.msra.mxu0 %v598
    %1232 = vmatpush.bf16.msra.mxu0 %v594
    %1233 = vmatmul.bf16.gmra.mxu0 %v1211
    %v1234 = vpop.f32.mrf.mxu0
    %v1235 = vadd.f32 0.0, %v1234
    %v1236 = vpop.f32.mrf.mxu0
    %1237 = vdwg.mxu0
    %1238 = vmatpush.bf16.msra.mxu0 %v623
    %1239 = vmatpush.bf16.msra.mxu0 %v619
    %1240 = vmatpush.bf16.msra.mxu0 %v615
    %1241 = vmatpush.bf16.msra.mxu0 %v611
    %1242 = vmatpush.bf16.msra.mxu0 %v607
    %1243 = vmatpush.bf16.msra.mxu0 %v603
    %1244 = vmatpush.bf16.msra.mxu0 %v599
    %1245 = vmatpush.bf16.msra.mxu0 %v595
    %1246 = vmatmul.bf16.gmra.mxu0 %v1211
    %v1247 = vpop.f32.mrf.mxu0
    %v1248 = vadd.f32 0.0, %v1247
    %v1249 = vpop.f32.mrf.mxu0
    %1250 = vdwg.mxu0
    %1251 = vmatpush.bf16.msra.mxu0 %v624
    %1252 = vmatpush.bf16.msra.mxu0 %v620
    %1253 = vmatpush.bf16.msra.mxu0 %v616
    %1254 = vmatpush.bf16.msra.mxu0 %v612
    %1255 = vmatpush.bf16.msra.mxu0 %v608
    %1256 = vmatpush.bf16.msra.mxu0 %v604
    %1257 = vmatpush.bf16.msra.mxu0 %v600
    %1258 = vmatpush.bf16.msra.mxu0 %v596
    %1259 = vmatmul.bf16.gmra.mxu0 %v1211
    %v1260 = vpop.f32.mrf.mxu0
    %v1261 = vadd.f32 0.0, %v1260
    %v1262 = vpop.f32.mrf.mxu0
    %1263 = vdwg.mxu0
    %v1268 = vrot.slane %v1235, 6
    %v1269 = vrot.slane %v1248, 4
    %v1270 = vrot.slane %v1261, 2
    %v1271 = vsel %vm320, %v1222, %v1268
    %v1272 = vsel %vm322, %v1269, %v1270
    %v1273 = vsel %vm324, %v1271, %v1272
    %v1275 = vadd.f32 %v1210, %v1273
    %v1276 = vxor.u32 %v1275, 2147483648
    %v1277 = vmul.f32 %v1276, 1.442695
    %v1278 = vpow.pop %v1277
    %v1279 = vadd.f32 %v1278, 1.0
    %v1280 = vrcp.pop %v1279
    %v1281 = vmul.f32 %v1279, %v1280
    %v1282 = vsub.f32 1.0, %v1281
    %v1283 = vmul.f32 %v1280, %v1282
    %v1284 = vadd.f32 %v1280, %v1283
    %vm1285 = vweird.f32 %v1279
    %vm1286 = vweird.f32 %v1280
    %vm1287 = vmor %vm1285, %vm1286
    %v1288 = vsel %vm1287, %v1280, %v1284
    %v1289 = vand.u32 2147483647, %v1279
    %vm1290 = vcmp.eq.f32.partialorder %v1289, 8.507059e+37
    %v1291 = vand.u32 %v1279, 2147483648
    %v1292 = vor.u32 1.1754944e-38, %v1291
    %v1293 = vsel %vm1290, %v1292, %v1288
    %v1294 = vmul.f32 1.0, %v1293
    %v1296 = vrot.slane %v1275, 2
    %v1298 = vxor.u32 %v1296, 2147483648
    %v1299 = vmul.f32 %v1298, 1.442695
    %v1300 = vpow.pop %v1299
    %v1301 = vadd.f32 %v1300, 1.0
    %v1302 = vrcp.pop %v1301
    %v1303 = vmul.f32 %v1301, %v1302
    %v1304 = vsub.f32 1.0, %v1303
    %v1305 = vmul.f32 %v1302, %v1304
    %v1306 = vadd.f32 %v1302, %v1305
    %vm1307 = vweird.f32 %v1301
    %vm1308 = vweird.f32 %v1302
    %vm1309 = vmor %vm1307, %vm1308
    %v1310 = vsel %vm1309, %v1302, %v1306
    %v1311 = vand.u32 2147483647, %v1301
    %vm1312 = vcmp.eq.f32.partialorder %v1311, 8.507059e+37
    %v1313 = vand.u32 %v1301, 2147483648
    %v1314 = vor.u32 1.1754944e-38, %v1313
    %v1315 = vsel %vm1312, %v1314, %v1310
    %v1316 = vmul.f32 1.0, %v1315
    %v1317 = vrot.slane %v1275, 4
    %v1319 = vtanh.pop %v1317
    %v1320 = vrot.slane %v1275, 6
    %v1322 = vxor.u32 %v1320, 2147483648
    %v1323 = vmul.f32 %v1322, 1.442695
    %v1324 = vpow.pop %v1323
    %v1325 = vadd.f32 %v1324, 1.0
    %v1326 = vrcp.pop %v1325
    %v1327 = vmul.f32 %v1325, %v1326
    %v1328 = vsub.f32 1.0, %v1327
    %v1329 = vmul.f32 %v1326, %v1328
    %v1330 = vadd.f32 %v1326, %v1329
    %vm1331 = vweird.f32 %v1325
    %vm1332 = vweird.f32 %v1326
    %vm1333 = vmor %vm1331, %vm1332
    %v1334 = vsel %vm1333, %v1326, %v1330
    %v1335 = vand.u32 2147483647, %v1325
    %vm1336 = vcmp.eq.f32.partialorder %v1335, 8.507059e+37
    %v1337 = vand.u32 %v1325, 2147483648
    %v1338 = vor.u32 1.1754944e-38, %v1337
    %v1339 = vsel %vm1336, %v1338, %v1334
    %v1340 = vmul.f32 1.0, %v1339
    %v1341 = vmul.f32 %v1316, %v1204
    %v1342 = vmul.f32 %v1294, %v1319
    %v1343 = vadd.f32 %v1341, %v1342
    %v1344 = vtanh.pop %v1343
    %v1345 = vmul.f32 %v1340, %v1344
    %s1346 = scalar_lea.vmem [#allocation5], 8
    %1347 = vst [vmem:[%s1346] sm:$0x3] %v1345
    %s1348 = scalar_lea.vmem [#allocation4], 40
    %v1349 = vld [vmem:[%s1348] sm:$0xff]
    %v1350 = vpack.c.bf16 %v1345, %v1345
    %1351 = vmatpush.bf16.msra.mxu0 %v621
    %1352 = vmatpush.bf16.msra.mxu0 %v617
    %1353 = vmatpush.bf16.msra.mxu0 %v613
    %1354 = vmatpush.bf16.msra.mxu0 %v609
    %1355 = vmatpush.bf16.msra.mxu0 %v605
    %1356 = vmatpush.bf16.msra.mxu0 %v601
    %1357 = vmatpush.bf16.msra.mxu0 %v597
    %1358 = vmatpush.bf16.msra.mxu0 %v593
    %1359 = vmatmul.bf16.gmra.mxu0 %v1350
    %v1360 = vpop.f32.mrf.mxu0
    %v1361 = vadd.f32 0.0, %v1360
    %v1362 = vpop.f32.mrf.mxu0
    %1363 = vdwg.mxu0
    %1364 = vmatpush.bf16.msra.mxu0 %v622
    %1365 = vmatpush.bf16.msra.mxu0 %v618
    %1366 = vmatpush.bf16.msra.mxu0 %v614
    %1367 = vmatpush.bf16.msra.mxu0 %v610
    %1368 = vmatpush.bf16.msra.mxu0 %v606
    %1369 = vmatpush.bf16.msra.mxu0 %v602
    %1370 = vmatpush.bf16.msra.mxu0 %v598
    %1371 = vmatpush.bf16.msra.mxu0 %v594
    %1372 = vmatmul.bf16.gmra.mxu0 %v1350
    %v1373 = vpop.f32.mrf.mxu0
    %v1374 = vadd.f32 0.0, %v1373
    %v1375 = vpop.f32.mrf.mxu0
    %1376 = vdwg.mxu0
    %1377 = vmatpush.bf16.msra.mxu0 %v623
    %1378 = vmatpush.bf16.msra.mxu0 %v619
    %1379 = vmatpush.bf16.msra.mxu0 %v615
    %1380 = vmatpush.bf16.msra.mxu0 %v611
    %1381 = vmatpush.bf16.msra.mxu0 %v607
    %1382 = vmatpush.bf16.msra.mxu0 %v603
    %1383 = vmatpush.bf16.msra.mxu0 %v599
    %1384 = vmatpush.bf16.msra.mxu0 %v595
    %1385 = vmatmul.bf16.gmra.mxu0 %v1350
    %v1386 = vpop.f32.mrf.mxu0
    %v1387 = vadd.f32 0.0, %v1386
    %v1388 = vpop.f32.mrf.mxu0
    %1389 = vdwg.mxu0
    %1390 = vmatpush.bf16.msra.mxu0 %v624
    %1391 = vmatpush.bf16.msra.mxu0 %v620
    %1392 = vmatpush.bf16.msra.mxu0 %v616
    %1393 = vmatpush.bf16.msra.mxu0 %v612
    %1394 = vmatpush.bf16.msra.mxu0 %v608
    %1395 = vmatpush.bf16.msra.mxu0 %v604
    %1396 = vmatpush.bf16.msra.mxu0 %v600
    %1397 = vmatpush.bf16.msra.mxu0 %v596
    %1398 = vmatmul.bf16.gmra.mxu0 %v1350
    %v1399 = vpop.f32.mrf.mxu0
    %v1400 = vadd.f32 0.0, %v1399
    %v1401 = vpop.f32.mrf.mxu0
    %1402 = vdwg.mxu0
    %v1407 = vrot.slane %v1374, 6
    %v1408 = vrot.slane %v1387, 4
    %v1409 = vrot.slane %v1400, 2
    %v1410 = vsel %vm320, %v1361, %v1407
    %v1411 = vsel %vm322, %v1408, %v1409
    %v1412 = vsel %vm324, %v1410, %v1411
    %v1414 = vadd.f32 %v1349, %v1412
    %v1415 = vxor.u32 %v1414, 2147483648
    %v1416 = vmul.f32 %v1415, 1.442695
    %v1417 = vpow.pop %v1416
    %v1418 = vadd.f32 %v1417, 1.0
    %v1419 = vrcp.pop %v1418
    %v1420 = vmul.f32 %v1418, %v1419
    %v1421 = vsub.f32 1.0, %v1420
    %v1422 = vmul.f32 %v1419, %v1421
    %v1423 = vadd.f32 %v1419, %v1422
    %vm1424 = vweird.f32 %v1418
    %vm1425 = vweird.f32 %v1419
    %vm1426 = vmor %vm1424, %vm1425
    %v1427 = vsel %vm1426, %v1419, %v1423
    %v1428 = vand.u32 2147483647, %v1418
    %vm1429 = vcmp.eq.f32.partialorder %v1428, 8.507059e+37
    %v1430 = vand.u32 %v1418, 2147483648
    %v1431 = vor.u32 1.1754944e-38, %v1430
    %v1432 = vsel %vm1429, %v1431, %v1427
    %v1433 = vmul.f32 1.0, %v1432
    %v1435 = vrot.slane %v1414, 2
    %v1437 = vxor.u32 %v1435, 2147483648
    %v1438 = vmul.f32 %v1437, 1.442695
    %v1439 = vpow.pop %v1438
    %v1440 = vadd.f32 %v1439, 1.0
    %v1441 = vrcp.pop %v1440
    %v1442 = vmul.f32 %v1440, %v1441
    %v1443 = vsub.f32 1.0, %v1442
    %v1444 = vmul.f32 %v1441, %v1443
    %v1445 = vadd.f32 %v1441, %v1444
    %vm1446 = vweird.f32 %v1440
    %vm1447 = vweird.f32 %v1441
    %vm1448 = vmor %vm1446, %vm1447
    %v1449 = vsel %vm1448, %v1441, %v1445
    %v1450 = vand.u32 2147483647, %v1440
    %vm1451 = vcmp.eq.f32.partialorder %v1450, 8.507059e+37
    %v1452 = vand.u32 %v1440, 2147483648
    %v1453 = vor.u32 1.1754944e-38, %v1452
    %v1454 = vsel %vm1451, %v1453, %v1449
    %v1455 = vmul.f32 1.0, %v1454
    %v1456 = vrot.slane %v1414, 4
    %v1458 = vtanh.pop %v1456
    %v1459 = vrot.slane %v1414, 6
    %v1461 = vxor.u32 %v1459, 2147483648
    %v1462 = vmul.f32 %v1461, 1.442695
    %v1463 = vpow.pop %v1462
    %v1464 = vadd.f32 %v1463, 1.0
    %v1465 = vrcp.pop %v1464
    %v1466 = vmul.f32 %v1464, %v1465
    %v1467 = vsub.f32 1.0, %v1466
    %v1468 = vmul.f32 %v1465, %v1467
    %v1469 = vadd.f32 %v1465, %v1468
    %vm1470 = vweird.f32 %v1464
    %vm1471 = vweird.f32 %v1465
    %vm1472 = vmor %vm1470, %vm1471
    %v1473 = vsel %vm1472, %v1465, %v1469
    %v1474 = vand.u32 2147483647, %v1464
    %vm1475 = vcmp.eq.f32.partialorder %v1474, 8.507059e+37
    %v1476 = vand.u32 %v1464, 2147483648
    %v1477 = vor.u32 1.1754944e-38, %v1476
    %v1478 = vsel %vm1475, %v1477, %v1473
    %v1479 = vmul.f32 1.0, %v1478
    %v1480 = vmul.f32 %v1455, %v1343
    %v1481 = vmul.f32 %v1433, %v1458
    %v1482 = vadd.f32 %v1480, %v1481
    %v1483 = vtanh.pop %v1482
    %v1484 = vmul.f32 %v1479, %v1483
    %s1485 = scalar_lea.vmem [#allocation5], 10
    %1486 = vst [vmem:[%s1485] sm:$0x3] %v1484
    %s1487 = scalar_lea.vmem [#allocation4], 48
    %v1488 = vld [vmem:[%s1487] sm:$0xff]
    %v1489 = vpack.c.bf16 %v1484, %v1484
    %1490 = vmatpush.bf16.msra.mxu0 %v621
    %1491 = vmatpush.bf16.msra.mxu0 %v617
    %1492 = vmatpush.bf16.msra.mxu0 %v613
    %1493 = vmatpush.bf16.msra.mxu0 %v609
    %1494 = vmatpush.bf16.msra.mxu0 %v605
    %1495 = vmatpush.bf16.msra.mxu0 %v601
    %1496 = vmatpush.bf16.msra.mxu0 %v597
    %1497 = vmatpush.bf16.msra.mxu0 %v593
    %1498 = vmatmul.bf16.gmra.mxu0 %v1489
    %v1499 = vpop.f32.mrf.mxu0
    %v1500 = vadd.f32 0.0, %v1499
    %v1501 = vpop.f32.mrf.mxu0
    %1502 = vdwg.mxu0
    %1503 = vmatpush.bf16.msra.mxu0 %v622
    %1504 = vmatpush.bf16.msra.mxu0 %v618
    %1505 = vmatpush.bf16.msra.mxu0 %v614
    %1506 = vmatpush.bf16.msra.mxu0 %v610
    %1507 = vmatpush.bf16.msra.mxu0 %v606
    %1508 = vmatpush.bf16.msra.mxu0 %v602
    %1509 = vmatpush.bf16.msra.mxu0 %v598
    %1510 = vmatpush.bf16.msra.mxu0 %v594
    %1511 = vmatmul.bf16.gmra.mxu0 %v1489
    %v1512 = vpop.f32.mrf.mxu0
    %v1513 = vadd.f32 0.0, %v1512
    %v1514 = vpop.f32.mrf.mxu0
    %1515 = vdwg.mxu0
    %1516 = vmatpush.bf16.msra.mxu0 %v623
    %1517 = vmatpush.bf16.msra.mxu0 %v619
    %1518 = vmatpush.bf16.msra.mxu0 %v615
    %1519 = vmatpush.bf16.msra.mxu0 %v611
    %1520 = vmatpush.bf16.msra.mxu0 %v607
    %1521 = vmatpush.bf16.msra.mxu0 %v603
    %1522 = vmatpush.bf16.msra.mxu0 %v599
    %1523 = vmatpush.bf16.msra.mxu0 %v595
    %1524 = vmatmul.bf16.gmra.mxu0 %v1489
    %v1525 = vpop.f32.mrf.mxu0
    %v1526 = vadd.f32 0.0, %v1525
    %v1527 = vpop.f32.mrf.mxu0
    %1528 = vdwg.mxu0
    %1529 = vmatpush.bf16.msra.mxu0 %v624
    %1530 = vmatpush.bf16.msra.mxu0 %v620
    %1531 = vmatpush.bf16.msra.mxu0 %v616
    %1532 = vmatpush.bf16.msra.mxu0 %v612
    %1533 = vmatpush.bf16.msra.mxu0 %v608
    %1534 = vmatpush.bf16.msra.mxu0 %v604
    %1535 = vmatpush.bf16.msra.mxu0 %v600
    %1536 = vmatpush.bf16.msra.mxu0 %v596
    %1537 = vmatmul.bf16.gmra.mxu0 %v1489
    %v1538 = vpop.f32.mrf.mxu0
    %v1539 = vadd.f32 0.0, %v1538
    %v1540 = vpop.f32.mrf.mxu0
    %1541 = vdwg.mxu0
    %v1546 = vrot.slane %v1513, 6
    %v1547 = vrot.slane %v1526, 4
    %v1548 = vrot.slane %v1539, 2
    %v1549 = vsel %vm320, %v1500, %v1546
    %v1550 = vsel %vm322, %v1547, %v1548
    %v1551 = vsel %vm324, %v1549, %v1550
    %v1553 = vadd.f32 %v1488, %v1551
    %v1554 = vxor.u32 %v1553, 2147483648
    %v1555 = vmul.f32 %v1554, 1.442695
    %v1556 = vpow.pop %v1555
    %v1557 = vadd.f32 %v1556, 1.0
    %v1558 = vrcp.pop %v1557
    %v1559 = vmul.f32 %v1557, %v1558
    %v1560 = vsub.f32 1.0, %v1559
    %v1561 = vmul.f32 %v1558, %v1560
    %v1562 = vadd.f32 %v1558, %v1561
    %vm1563 = vweird.f32 %v1557
    %vm1564 = vweird.f32 %v1558
    %vm1565 = vmor %vm1563, %vm1564
    %v1566 = vsel %vm1565, %v1558, %v1562
    %v1567 = vand.u32 2147483647, %v1557
    %vm1568 = vcmp.eq.f32.partialorder %v1567, 8.507059e+37
    %v1569 = vand.u32 %v1557, 2147483648
    %v1570 = vor.u32 1.1754944e-38, %v1569
    %v1571 = vsel %vm1568, %v1570, %v1566
    %v1572 = vmul.f32 1.0, %v1571
    %v1574 = vrot.slane %v1553, 2
    %v1576 = vxor.u32 %v1574, 2147483648
    %v1577 = vmul.f32 %v1576, 1.442695
    %v1578 = vpow.pop %v1577
    %v1579 = vadd.f32 %v1578, 1.0
    %v1580 = vrcp.pop %v1579
    %v1581 = vmul.f32 %v1579, %v1580
    %v1582 = vsub.f32 1.0, %v1581
    %v1583 = vmul.f32 %v1580, %v1582
    %v1584 = vadd.f32 %v1580, %v1583
    %vm1585 = vweird.f32 %v1579
    %vm1586 = vweird.f32 %v1580
    %vm1587 = vmor %vm1585, %vm1586
    %v1588 = vsel %vm1587, %v1580, %v1584
    %v1589 = vand.u32 2147483647, %v1579
    %vm1590 = vcmp.eq.f32.partialorder %v1589, 8.507059e+37
    %v1591 = vand.u32 %v1579, 2147483648
    %v1592 = vor.u32 1.1754944e-38, %v1591
    %v1593 = vsel %vm1590, %v1592, %v1588
    %v1594 = vmul.f32 1.0, %v1593
    %v1595 = vrot.slane %v1553, 4
    %v1597 = vtanh.pop %v1595
    %v1598 = vrot.slane %v1553, 6
    %v1600 = vxor.u32 %v1598, 2147483648
    %v1601 = vmul.f32 %v1600, 1.442695
    %v1602 = vpow.pop %v1601
    %v1603 = vadd.f32 %v1602, 1.0
    %v1604 = vrcp.pop %v1603
    %v1605 = vmul.f32 %v1603, %v1604
    %v1606 = vsub.f32 1.0, %v1605
    %v1607 = vmul.f32 %v1604, %v1606
    %v1608 = vadd.f32 %v1604, %v1607
    %vm1609 = vweird.f32 %v1603
    %vm1610 = vweird.f32 %v1604
    %vm1611 = vmor %vm1609, %vm1610
    %v1612 = vsel %vm1611, %v1604, %v1608
    %v1613 = vand.u32 2147483647, %v1603
    %vm1614 = vcmp.eq.f32.partialorder %v1613, 8.507059e+37
    %v1615 = vand.u32 %v1603, 2147483648
    %v1616 = vor.u32 1.1754944e-38, %v1615
    %v1617 = vsel %vm1614, %v1616, %v1612
    %v1618 = vmul.f32 1.0, %v1617
    %v1619 = vmul.f32 %v1594, %v1482
    %v1620 = vmul.f32 %v1572, %v1597
    %v1621 = vadd.f32 %v1619, %v1620
    %v1622 = vtanh.pop %v1621
    %v1623 = vmul.f32 %v1618, %v1622
    %s1624 = scalar_lea.vmem [#allocation5], 12
    %1625 = vst [vmem:[%s1624] sm:$0x3] %v1623
    %s1626 = scalar_lea.vmem [#allocation4], 56
    %v1627 = vld [vmem:[%s1626] sm:$0xff]
    %v1628 = vpack.c.bf16 %v1623, %v1623
    %1629 = vmatpush.bf16.msra.mxu0 %v621
    %1630 = vmatpush.bf16.msra.mxu0 %v617
    %1631 = vmatpush.bf16.msra.mxu0 %v613
    %1632 = vmatpush.bf16.msra.mxu0 %v609
    %1633 = vmatpush.bf16.msra.mxu0 %v605
    %1634 = vmatpush.bf16.msra.mxu0 %v601
    %1635 = vmatpush.bf16.msra.mxu0 %v597
    %1636 = vmatpush.bf16.msra.mxu0 %v593
    %1637 = vmatmul.bf16.gmra.mxu0 %v1628
    %v1638 = vpop.f32.mrf.mxu0
    %v1639 = vadd.f32 0.0, %v1638
    %v1640 = vpop.f32.mrf.mxu0
    %1641 = vdwg.mxu0
    %1642 = vmatpush.bf16.msra.mxu0 %v622
    %1643 = vmatpush.bf16.msra.mxu0 %v618
    %1644 = vmatpush.bf16.msra.mxu0 %v614
    %1645 = vmatpush.bf16.msra.mxu0 %v610
    %1646 = vmatpush.bf16.msra.mxu0 %v606
    %1647 = vmatpush.bf16.msra.mxu0 %v602
    %1648 = vmatpush.bf16.msra.mxu0 %v598
    %1649 = vmatpush.bf16.msra.mxu0 %v594
    %1650 = vmatmul.bf16.gmra.mxu0 %v1628
    %v1651 = vpop.f32.mrf.mxu0
    %v1652 = vadd.f32 0.0, %v1651
    %v1653 = vpop.f32.mrf.mxu0
    %1654 = vdwg.mxu0
    %1655 = vmatpush.bf16.msra.mxu0 %v623
    %1656 = vmatpush.bf16.msra.mxu0 %v619
    %1657 = vmatpush.bf16.msra.mxu0 %v615
    %1658 = vmatpush.bf16.msra.mxu0 %v611
    %1659 = vmatpush.bf16.msra.mxu0 %v607
    %1660 = vmatpush.bf16.msra.mxu0 %v603
    %1661 = vmatpush.bf16.msra.mxu0 %v599
    %1662 = vmatpush.bf16.msra.mxu0 %v595
    %1663 = vmatmul.bf16.gmra.mxu0 %v1628
    %v1664 = vpop.f32.mrf.mxu0
    %v1665 = vadd.f32 0.0, %v1664
    %v1666 = vpop.f32.mrf.mxu0
    %1667 = vdwg.mxu0
    %1668 = vmatpush.bf16.msra.mxu0 %v624
    %1669 = vmatpush.bf16.msra.mxu0 %v620
    %1670 = vmatpush.bf16.msra.mxu0 %v616
    %1671 = vmatpush.bf16.msra.mxu0 %v612
    %1672 = vmatpush.bf16.msra.mxu0 %v608
    %1673 = vmatpush.bf16.msra.mxu0 %v604
    %1674 = vmatpush.bf16.msra.mxu0 %v600
    %1675 = vmatpush.bf16.msra.mxu0 %v596
    %1676 = vmatmul.bf16.gmra.mxu0 %v1628
    %v1677 = vpop.f32.mrf.mxu0
    %v1678 = vadd.f32 0.0, %v1677
    %v1679 = vpop.f32.mrf.mxu0
    %1680 = vdwg.mxu0
    %v1685 = vrot.slane %v1652, 6
    %v1686 = vrot.slane %v1665, 4
    %v1687 = vrot.slane %v1678, 2
    %v1688 = vsel %vm320, %v1639, %v1685
    %v1689 = vsel %vm322, %v1686, %v1687
    %v1690 = vsel %vm324, %v1688, %v1689
    %v1692 = vadd.f32 %v1627, %v1690
    %v1693 = vxor.u32 %v1692, 2147483648
    %v1694 = vmul.f32 %v1693, 1.442695
    %v1695 = vpow.pop %v1694
    %v1696 = vadd.f32 %v1695, 1.0
    %v1697 = vrcp.pop %v1696
    %v1698 = vmul.f32 %v1696, %v1697
    %v1699 = vsub.f32 1.0, %v1698
    %v1700 = vmul.f32 %v1697, %v1699
    %v1701 = vadd.f32 %v1697, %v1700
    %vm1702 = vweird.f32 %v1696
    %vm1703 = vweird.f32 %v1697
    %vm1704 = vmor %vm1702, %vm1703
    %v1705 = vsel %vm1704, %v1697, %v1701
    %v1706 = vand.u32 2147483647, %v1696
    %vm1707 = vcmp.eq.f32.partialorder %v1706, 8.507059e+37
    %v1708 = vand.u32 %v1696, 2147483648
    %v1709 = vor.u32 1.1754944e-38, %v1708
    %v1710 = vsel %vm1707, %v1709, %v1705
    %v1711 = vmul.f32 1.0, %v1710
    %v1713 = vrot.slane %v1692, 2
    %v1715 = vxor.u32 %v1713, 2147483648
    %v1716 = vmul.f32 %v1715, 1.442695
    %v1717 = vpow.pop %v1716
    %v1718 = vadd.f32 %v1717, 1.0
    %v1719 = vrcp.pop %v1718
    %v1720 = vmul.f32 %v1718, %v1719
    %v1721 = vsub.f32 1.0, %v1720
    %v1722 = vmul.f32 %v1719, %v1721
    %v1723 = vadd.f32 %v1719, %v1722
    %vm1724 = vweird.f32 %v1718
    %vm1725 = vweird.f32 %v1719
    %vm1726 = vmor %vm1724, %vm1725
    %v1727 = vsel %vm1726, %v1719, %v1723
    %v1728 = vand.u32 2147483647, %v1718
    %vm1729 = vcmp.eq.f32.partialorder %v1728, 8.507059e+37
    %v1730 = vand.u32 %v1718, 2147483648
    %v1731 = vor.u32 1.1754944e-38, %v1730
    %v1732 = vsel %vm1729, %v1731, %v1727
    %v1733 = vmul.f32 1.0, %v1732
    %v1734 = vrot.slane %v1692, 4
    %v1736 = vtanh.pop %v1734
    %v1737 = vrot.slane %v1692, 6
    %v1739 = vxor.u32 %v1737, 2147483648
    %v1740 = vmul.f32 %v1739, 1.442695
    %v1741 = vpow.pop %v1740
    %v1742 = vadd.f32 %v1741, 1.0
    %v1743 = vrcp.pop %v1742
    %v1744 = vmul.f32 %v1742, %v1743
    %v1745 = vsub.f32 1.0, %v1744
    %v1746 = vmul.f32 %v1743, %v1745
    %v1747 = vadd.f32 %v1743, %v1746
    %vm1748 = vweird.f32 %v1742
    %vm1749 = vweird.f32 %v1743
    %vm1750 = vmor %vm1748, %vm1749
    %v1751 = vsel %vm1750, %v1743, %v1747
    %v1752 = vand.u32 2147483647, %v1742
    %vm1753 = vcmp.eq.f32.partialorder %v1752, 8.507059e+37
    %v1754 = vand.u32 %v1742, 2147483648
    %v1755 = vor.u32 1.1754944e-38, %v1754
    %v1756 = vsel %vm1753, %v1755, %v1751
    %v1757 = vmul.f32 1.0, %v1756
    %v1758 = vmul.f32 %v1733, %v1621
    %v1759 = vmul.f32 %v1711, %v1736
    %v1760 = vadd.f32 %v1758, %v1759
    %v1761 = vtanh.pop %v1760
    %v1762 = vmul.f32 %v1757, %v1761
    %s1763 = scalar_lea.vmem [#allocation5], 14
    %1764 = vst [vmem:[%s1763] sm:$0x3] %v1762
    %1765 = vst [vmem:[#allocation2] sm:$0x3] %v1762
    %1766 = vst [vmem:[#allocation3] sm:$0x3] %v1760
    %1767 = vst [vmem:[%s13] sm:$0x3] %v1762
    %1768 = vst [vmem:[%s14] sm:$0x3] %v1760
  $region53: #{rnn_decoder_forward.1} parent=0 // pred_fallthru
    _
  %v1769 = vld [vmem:[#allocation5] sm:$0x3]
  %v1770 = vld [vmem:[#allocation5 + $0x2] sm:$0x3]
  %v1771 = vld [vmem:[#allocation5 + $0x4] sm:$0x3]
  %v1772 = vld [vmem:[#allocation5 + $0x6] sm:$0x3]
  %v1773 = vld [vmem:[#allocation5 + $0x8] sm:$0x3]
  %v1774 = vld [vmem:[#allocation5 + $0xa] sm:$0x3]
  %v1775 = vld [vmem:[#allocation5 + $0xc] sm:$0x3]
  %v1776 = vld [vmem:[#allocation5 + $0xe] sm:$0x3]
  %v1777 = vrot.slane %v1771, 4
  %v1778 = vsel %vm365, %v1777, %v1769
  %v1780 = vunpack.c.l.s4 1983009808
  %v1781 = vunpack.c.0.s8 %v1780
  %v1782 = vperm.slane %v1778, %v1781
  %v1783 = vrot.slane %v1772, 4
  %v1784 = vsel %vm365, %v1783, %v1770
  %v1786 = vunpack.c.l.s4 1983009808
  %v1787 = vunpack.c.0.s8 %v1786
  %v1788 = vperm.slane %v1784, %v1787
  %v1789 = vrot.slane %v1775, 4
  %v1790 = vsel %vm365, %v1789, %v1773
  %v1792 = vunpack.c.l.s4 1983009808
  %v1793 = vunpack.c.0.s8 %v1792
  %v1794 = vperm.slane %v1790, %v1793
  %v1795 = vrot.slane %v1776, 4
  %v1796 = vsel %vm365, %v1795, %v1774
  %v1798 = vunpack.c.l.s4 1983009808
  %v1799 = vunpack.c.0.s8 %v1798
  %v1800 = vperm.slane %v1796, %v1799
  %v1801 = vrot.slane %v1788, 4
  %v1802 = vsel %vm365, %v1801, %v1782
  %v1804 = vunpack.c.l.s4 1934713408
  %v1805 = vunpack.c.0.s8 %v1804
  %v1806 = vperm.slane %v1802, %v1805
  %v1807 = vrot.slane %v1800, 4
  %v1808 = vsel %vm365, %v1807, %v1794
  %v1810 = vunpack.c.l.s4 1934713408
  %v1811 = vunpack.c.0.s8 %v1810
  %v1812 = vperm.slane %v1808, %v1811
  %v1813 = vrot.slane %v1812, 4
  %v1814 = vsel %vm365, %v1813, %v1806
  %v1815 = vrot.slane %v1806, 4
  %v1816 = vsel %vm365, %v1812, %v1815
  %v1817 = vpack.c.bf16 %v1816, %v1814
  %v1818 = vld [vmem:[%s1] sm:$0xf]
  %v1819 = vld [vmem:[%s1 + $0x4] sm:$0xf]
  %v1820 = vld [vmem:[%s1 + $0x8] sm:$0xf]
  %v1821 = vld [vmem:[%s1 + $0xc] sm:$0xf]
  %v1822 = vld [vmem:[%s1 + $0x10] sm:$0xf]
  %v1823 = vld [vmem:[%s1 + $0x14] sm:$0xf]
  %v1824 = vld [vmem:[%s1 + $0x18] sm:$0xf]
  %v1825 = vld [vmem:[%s1 + $0x1c] sm:$0xf]
  %v1826 = vld [vmem:[%s1 + $0x20] sm:$0xf]
  %v1827 = vld [vmem:[%s1 + $0x24] sm:$0xf]
  %v1828 = vld [vmem:[%s1 + $0x28] sm:$0xf]
  %v1829 = vld [vmem:[%s1 + $0x2c] sm:$0xf]
  %v1830 = vld [vmem:[%s1 + $0x30] sm:$0xf]
  %v1831 = vld [vmem:[%s1 + $0x34] sm:$0xf]
  %v1832 = vld [vmem:[%s1 + $0x38] sm:$0xf]
  %v1833 = vld [vmem:[%s1 + $0x3c] sm:$0xf]
  %v1834 = vld [vmem:[%s1 + $0x40] sm:$0xf]
  %v1835 = vld [vmem:[%s1 + $0x44] sm:$0xf]
  %v1836 = vld [vmem:[%s1 + $0x48] sm:$0xf]
  %v1837 = vld [vmem:[%s1 + $0x4c] sm:$0xf]
  %v1838 = vld [vmem:[%s1 + $0x50] sm:$0xf]
  %v1839 = vld [vmem:[%s1 + $0x54] sm:$0xf]
  %v1840 = vld [vmem:[%s1 + $0x58] sm:$0xf]
  %v1841 = vld [vmem:[%s1 + $0x5c] sm:$0xf]
  %v1842 = vld [vmem:[%s1 + $0x60] sm:$0xf]
  %v1843 = vld [vmem:[%s1 + $0x64] sm:$0xf]
  %v1844 = vld [vmem:[%s1 + $0x68] sm:$0xf]
  %v1845 = vld [vmem:[%s1 + $0x6c] sm:$0xf]
  %v1846 = vld [vmem:[%s1 + $0x70] sm:$0xf]
  %v1847 = vld [vmem:[%s1 + $0x74] sm:$0xf]
  %v1848 = vld [vmem:[%s1 + $0x78] sm:$0xf]
  %v1849 = vld [vmem:[%s1 + $0x7c] sm:$0xf]
  %v1850 = vld [vmem:[%s8] sm:$0xf]
  %v1851 = vld [vmem:[%s8 + $0x4] sm:$0xf]
  %v1852 = vld [vmem:[%s8 + $0x8] sm:$0xf]
  %v1853 = vld [vmem:[%s8 + $0xc] sm:$0xf]
  %v1854 = vld [vmem:[%s8 + $0x10] sm:$0xf]
  %v1855 = vld [vmem:[%s8 + $0x14] sm:$0xf]
  %v1856 = vld [vmem:[%s8 + $0x18] sm:$0xf]
  %v1857 = vld [vmem:[%s8 + $0x1c] sm:$0xf]
  %v1858 = vld [vmem:[%s8 + $0x20] sm:$0xf]
  %v1859 = vld [vmem:[%s8 + $0x24] sm:$0xf]
  %v1860 = vld [vmem:[%s8 + $0x28] sm:$0xf]
  %v1861 = vld [vmem:[%s8 + $0x2c] sm:$0xf]
  %v1862 = vld [vmem:[%s8 + $0x30] sm:$0xf]
  %v1863 = vld [vmem:[%s8 + $0x34] sm:$0xf]
  %v1864 = vld [vmem:[%s8 + $0x38] sm:$0xf]
  %v1865 = vld [vmem:[%s8 + $0x3c] sm:$0xf]
  %v1882 = vunpack.c.l.b16 %v1850
  %v1883 = vunpack.c.l.b16 %v1851
  %v1884 = vunpack.c.l.b16 %v1852
  %v1885 = vunpack.c.l.b16 %v1853
  %v1886 = vunpack.c.l.b16 %v1854
  %v1887 = vunpack.c.l.b16 %v1855
  %v1888 = vunpack.c.l.b16 %v1856
  %v1889 = vunpack.c.l.b16 %v1857
  %v1890 = vunpack.c.l.b16 %v1858
  %v1891 = vunpack.c.l.b16 %v1859
  %v1892 = vunpack.c.l.b16 %v1860
  %v1893 = vunpack.c.l.b16 %v1861
  %v1894 = vunpack.c.l.b16 %v1862
  %v1895 = vunpack.c.l.b16 %v1863
  %v1896 = vunpack.c.l.b16 %v1864
  %v1897 = vunpack.c.l.b16 %v1865
  %v1898 = vpack.c.b16 %v1883, %v1882
  %v1899 = vpack.c.b16 %v1885, %v1884
  %v1900 = vpack.c.b16 %v1887, %v1886
  %v1901 = vpack.c.b16 %v1889, %v1888
  %v1902 = vpack.c.b16 %v1891, %v1890
  %v1903 = vpack.c.b16 %v1893, %v1892
  %v1904 = vpack.c.b16 %v1895, %v1894
  %v1905 = vpack.c.b16 %v1897, %v1896
  %1914 = vmatpush.bf16.msra.mxu0 %v1905
  %1915 = vmatpush.bf16.msra.mxu0 %v1904
  %1916 = vmatpush.bf16.msra.mxu0 %v1903
  %1917 = vmatpush.bf16.msra.mxu0 %v1902
  %1918 = vmatpush.bf16.msra.mxu0 %v1901
  %1919 = vmatpush.bf16.msra.mxu0 %v1900
  %1920 = vmatpush.bf16.msra.mxu0 %v1899
  %1921 = vmatpush.bf16.msra.mxu0 %v1898
  %1922 = vmatmul.bf16.gmra.mxu0 %v1817
  %v1923 = vpop.f32.mrf.mxu0
  %v1924 = vadd.f32 0.0, %v1923
  %v1925 = vpop.f32.mrf.mxu0
  %v1926 = vadd.f32 0.0, %v1925
  %1927 = vdwg.mxu0
  %v1928 = vpack.c.bf16 %v1924, %v1924
  %v1929 = vpack.c.bf16 %v1926, %v1926
  %v1930 = vld [vmem:[%s2] sm:$0x3]
  %v1932 = vrot.slane %v1930, 1
  %v1933 = vperm.slane %v1930, 0
  %v1934 = vperm.slane %v1932, 0
  %v1953 = vunpack.c.l.b16 %v1818
  %v1954 = vunpack.c.l.b16 %v1819
  %v1955 = vunpack.c.l.b16 %v1820
  %v1956 = vunpack.c.l.b16 %v1821
  %v1957 = vunpack.c.l.b16 %v1822
  %v1958 = vunpack.c.l.b16 %v1823
  %v1959 = vunpack.c.l.b16 %v1824
  %v1960 = vunpack.c.l.b16 %v1825
  %v1961 = vunpack.c.l.b16 %v1826
  %v1962 = vunpack.c.l.b16 %v1827
  %v1963 = vunpack.c.l.b16 %v1828
  %v1964 = vunpack.c.l.b16 %v1829
  %v1965 = vunpack.c.l.b16 %v1830
  %v1966 = vunpack.c.l.b16 %v1831
  %v1967 = vunpack.c.l.b16 %v1832
  %v1968 = vunpack.c.l.b16 %v1833
  %v1969 = vpack.c.b16 %v1954, %v1953
  %v1970 = vpack.c.b16 %v1956, %v1955
  %v1971 = vpack.c.b16 %v1958, %v1957
  %v1972 = vpack.c.b16 %v1960, %v1959
  %v1973 = vpack.c.b16 %v1962, %v1961
  %v1974 = vpack.c.b16 %v1964, %v1963
  %v1975 = vpack.c.b16 %v1966, %v1965
  %v1976 = vpack.c.b16 %v1968, %v1967
  %1985 = vmatpush.bf16.xpose.msra.mxu0 %v1976
  %1986 = vmatpush.bf16.xpose.msra.mxu0 %v1975
  %1987 = vmatpush.bf16.xpose.msra.mxu0 %v1974
  %1988 = vmatpush.bf16.xpose.msra.mxu0 %v1973
  %1989 = vmatpush.bf16.xpose.msra.mxu0 %v1972
  %1990 = vmatpush.bf16.xpose.msra.mxu0 %v1971
  %1991 = vmatpush.bf16.xpose.msra.mxu0 %v1970
  %1992 = vmatpush.bf16.xpose.msra.mxu0 %v1969
  %1993 = vmatmul.bf16.gmra.mxu0 %v1928
  %v1994 = vpop.f32.mrf.mxu0
  %v1995 = vadd.f32 %v1933, %v1994
  %v1996 = vpop.f32.mrf.mxu0
  %1997 = vdwg.mxu0
  %v2014 = vunpack.c.l.b16 %v1834
  %v2015 = vunpack.c.l.b16 %v1835
  %v2016 = vunpack.c.l.b16 %v1836
  %v2017 = vunpack.c.l.b16 %v1837
  %v2018 = vunpack.c.l.b16 %v1838
  %v2019 = vunpack.c.l.b16 %v1839
  %v2020 = vunpack.c.l.b16 %v1840
  %v2021 = vunpack.c.l.b16 %v1841
  %v2022 = vunpack.c.l.b16 %v1842
  %v2023 = vunpack.c.l.b16 %v1843
  %v2024 = vunpack.c.l.b16 %v1844
  %v2025 = vunpack.c.l.b16 %v1845
  %v2026 = vunpack.c.l.b16 %v1846
  %v2027 = vunpack.c.l.b16 %v1847
  %v2028 = vunpack.c.l.b16 %v1848
  %v2029 = vunpack.c.l.b16 %v1849
  %v2030 = vpack.c.b16 %v2015, %v2014
  %v2031 = vpack.c.b16 %v2017, %v2016
  %v2032 = vpack.c.b16 %v2019, %v2018
  %v2033 = vpack.c.b16 %v2021, %v2020
  %v2034 = vpack.c.b16 %v2023, %v2022
  %v2035 = vpack.c.b16 %v2025, %v2024
  %v2036 = vpack.c.b16 %v2027, %v2026
  %v2037 = vpack.c.b16 %v2029, %v2028
  %2046 = vmatpush.bf16.xpose.msra.mxu0 %v2037
  %2047 = vmatpush.bf16.xpose.msra.mxu0 %v2036
  %2048 = vmatpush.bf16.xpose.msra.mxu0 %v2035
  %2049 = vmatpush.bf16.xpose.msra.mxu0 %v2034
  %2050 = vmatpush.bf16.xpose.msra.mxu0 %v2033
  %2051 = vmatpush.bf16.xpose.msra.mxu0 %v2032
  %2052 = vmatpush.bf16.xpose.msra.mxu0 %v2031
  %2053 = vmatpush.bf16.xpose.msra.mxu0 %v2030
  %2054 = vmatmul.bf16.gmra.mxu0 %v1929
  %v2055 = vpop.f32.mrf.mxu0
  %v2056 = vadd.f32 %v1934, %v2055
  %v2057 = vpop.f32.mrf.mxu0
  %2058 = vdwg.mxu0
  %2059 = vmax.xlane.f32.xlu0 %v1995
  %v2060 = vpop.xlane.xlu0 %2059
  %2061 = vmax.xlane.f32.xlu0 %v2056
  %v2062 = vpop.xlane.xlu0 %2061
  %v2063 = vsub.f32 %v1995, %v2060
  %v2064 = vsub.f32 %v2056, %v2062
  %v2065 = vmul.f32 %v2063, 1.442695
  %v2066 = vpow.pop %v2065
  %v2067 = vmul.f32 %v2064, 1.442695
  %v2068 = vpow.pop %v2067
  %2069 = vadd.xlane.f32.xlu0 %v2066
  %v2070 = vpop.xlane.xlu0 %2069
  %2071 = vadd.xlane.f32.xlu0 %v2068
  %v2072 = vpop.xlane.xlu0 %2071
  %v2073 = vrcp.pop %v2070
  %v2074 = vrcp.pop %v2072
  %v2075 = vmul.f32 %v2066, %v2073
  %v2076 = vmul.f32 %v2068, %v2074
  %v2077 = vpack.c.bf16 %v2075, %v2075
  %v2078 = vpack.c.bf16 %v2076, %v2076
  %2079 = vmatpush.bf16.msra.mxu0 %v1976
  %2080 = vmatpush.bf16.msra.mxu0 %v1975
  %2081 = vmatpush.bf16.msra.mxu0 %v1974
  %2082 = vmatpush.bf16.msra.mxu0 %v1973
  %2083 = vmatpush.bf16.msra.mxu0 %v1972
  %2084 = vmatpush.bf16.msra.mxu0 %v1971
  %2085 = vmatpush.bf16.msra.mxu0 %v1970
  %2086 = vmatpush.bf16.msra.mxu0 %v1969
  %2087 = vmatmul.bf16.gmra.mxu0 %v2077
  %v2088 = vpop.f32.mrf.mxu0
  %v2089 = vadd.f32 0.0, %v2088
  %v2090 = vpop.f32.mrf.mxu0
  %2091 = vdwg.mxu0
  %2092 = vmatpush.bf16.msra.mxu0 %v2037
  %2093 = vmatpush.bf16.msra.mxu0 %v2036
  %2094 = vmatpush.bf16.msra.mxu0 %v2035
  %2095 = vmatpush.bf16.msra.mxu0 %v2034
  %2096 = vmatpush.bf16.msra.mxu0 %v2033
  %2097 = vmatpush.bf16.msra.mxu0 %v2032
  %2098 = vmatpush.bf16.msra.mxu0 %v2031
  %2099 = vmatpush.bf16.msra.mxu0 %v2030
  %2100 = vmatmul.bf16.gmra.mxu0 %v2078
  %v2101 = vpop.f32.mrf.mxu0
  %v2102 = vadd.f32 0.0, %v2101
  %v2103 = vpop.f32.mrf.mxu0
  %2104 = vdwg.mxu0
  %v2105 = vpack.c.bf16 %v2102, %v2089
  %v2106 = vld [vmem:[%s9] sm:$0xf]
  %v2107 = vld [vmem:[%s9 + $0x4] sm:$0xf]
  %v2108 = vld [vmem:[%s9 + $0x8] sm:$0xf]
  %v2109 = vld [vmem:[%s9 + $0xc] sm:$0xf]
  %v2110 = vld [vmem:[%s9 + $0x10] sm:$0xf]
  %v2111 = vld [vmem:[%s9 + $0x14] sm:$0xf]
  %v2112 = vld [vmem:[%s9 + $0x18] sm:$0xf]
  %v2113 = vld [vmem:[%s9 + $0x1c] sm:$0xf]
  %v2114 = vld [vmem:[%s9 + $0x20] sm:$0xf]
  %v2115 = vld [vmem:[%s9 + $0x24] sm:$0xf]
  %v2116 = vld [vmem:[%s9 + $0x28] sm:$0xf]
  %v2117 = vld [vmem:[%s9 + $0x2c] sm:$0xf]
  %v2118 = vld [vmem:[%s9 + $0x30] sm:$0xf]
  %v2119 = vld [vmem:[%s9 + $0x34] sm:$0xf]
  %v2120 = vld [vmem:[%s9 + $0x38] sm:$0xf]
  %v2121 = vld [vmem:[%s9 + $0x3c] sm:$0xf]
  %v2122 = vld [vmem:[%s10] sm:$0xf]
  %v2123 = vld [vmem:[%s10 + $0x4] sm:$0xf]
  %v2124 = vld [vmem:[%s10 + $0x8] sm:$0xf]
  %v2125 = vld [vmem:[%s10 + $0xc] sm:$0xf]
  %v2126 = vld [vmem:[%s10 + $0x10] sm:$0xf]
  %v2127 = vld [vmem:[%s10 + $0x14] sm:$0xf]
  %v2128 = vld [vmem:[%s10 + $0x18] sm:$0xf]
  %v2129 = vld [vmem:[%s10 + $0x1c] sm:$0xf]
  %v2130 = vld [vmem:[%s10 + $0x20] sm:$0xf]
  %v2131 = vld [vmem:[%s10 + $0x24] sm:$0xf]
  %v2132 = vld [vmem:[%s10 + $0x28] sm:$0xf]
  %v2133 = vld [vmem:[%s10 + $0x2c] sm:$0xf]
  %v2134 = vld [vmem:[%s10 + $0x30] sm:$0xf]
  %v2135 = vld [vmem:[%s10 + $0x34] sm:$0xf]
  %v2136 = vld [vmem:[%s10 + $0x38] sm:$0xf]
  %v2137 = vld [vmem:[%s10 + $0x3c] sm:$0xf]
  %v2154 = vunpack.c.l.b16 %v2122
  %v2155 = vunpack.c.l.b16 %v2123
  %v2156 = vunpack.c.l.b16 %v2124
  %v2157 = vunpack.c.l.b16 %v2125
  %v2158 = vunpack.c.l.b16 %v2126
  %v2159 = vunpack.c.l.b16 %v2127
  %v2160 = vunpack.c.l.b16 %v2128
  %v2161 = vunpack.c.l.b16 %v2129
  %v2162 = vunpack.c.l.b16 %v2130
  %v2163 = vunpack.c.l.b16 %v2131
  %v2164 = vunpack.c.l.b16 %v2132
  %v2165 = vunpack.c.l.b16 %v2133
  %v2166 = vunpack.c.l.b16 %v2134
  %v2167 = vunpack.c.l.b16 %v2135
  %v2168 = vunpack.c.l.b16 %v2136
  %v2169 = vunpack.c.l.b16 %v2137
  %v2170 = vpack.c.b16 %v2155, %v2154
  %v2171 = vpack.c.b16 %v2157, %v2156
  %v2172 = vpack.c.b16 %v2159, %v2158
  %v2173 = vpack.c.b16 %v2161, %v2160
  %v2174 = vpack.c.b16 %v2163, %v2162
  %v2175 = vpack.c.b16 %v2165, %v2164
  %v2176 = vpack.c.b16 %v2167, %v2166
  %v2177 = vpack.c.b16 %v2169, %v2168
  %2186 = vmatpush.bf16.msra.mxu0 %v2177
  %2187 = vmatpush.bf16.msra.mxu0 %v2176
  %2188 = vmatpush.bf16.msra.mxu0 %v2175
  %2189 = vmatpush.bf16.msra.mxu0 %v2174
  %2190 = vmatpush.bf16.msra.mxu0 %v2173
  %2191 = vmatpush.bf16.msra.mxu0 %v2172
  %2192 = vmatpush.bf16.msra.mxu0 %v2171
  %2193 = vmatpush.bf16.msra.mxu0 %v2170
  %2194 = vmatmul.bf16.gmra.mxu0 %v1817
  %v2195 = vpop.f32.mrf.mxu0
  %v2196 = vadd.f32 0.0, %v2195
  %v2197 = vpop.f32.mrf.mxu0
  %v2198 = vadd.f32 0.0, %v2197
  %2199 = vdwg.mxu0
  %v2216 = vunpack.c.l.b16 %v2106
  %v2217 = vunpack.c.l.b16 %v2107
  %v2218 = vunpack.c.l.b16 %v2108
  %v2219 = vunpack.c.l.b16 %v2109
  %v2220 = vunpack.c.l.b16 %v2110
  %v2221 = vunpack.c.l.b16 %v2111
  %v2222 = vunpack.c.l.b16 %v2112
  %v2223 = vunpack.c.l.b16 %v2113
  %v2224 = vunpack.c.l.b16 %v2114
  %v2225 = vunpack.c.l.b16 %v2115
  %v2226 = vunpack.c.l.b16 %v2116
  %v2227 = vunpack.c.l.b16 %v2117
  %v2228 = vunpack.c.l.b16 %v2118
  %v2229 = vunpack.c.l.b16 %v2119
  %v2230 = vunpack.c.l.b16 %v2120
  %v2231 = vunpack.c.l.b16 %v2121
  %v2232 = vpack.c.b16 %v2217, %v2216
  %v2233 = vpack.c.b16 %v2219, %v2218
  %v2234 = vpack.c.b16 %v2221, %v2220
  %v2235 = vpack.c.b16 %v2223, %v2222
  %v2236 = vpack.c.b16 %v2225, %v2224
  %v2237 = vpack.c.b16 %v2227, %v2226
  %v2238 = vpack.c.b16 %v2229, %v2228
  %v2239 = vpack.c.b16 %v2231, %v2230
  %2248 = vmatpush.bf16.msra.mxu0 %v2239
  %2249 = vmatpush.bf16.msra.mxu0 %v2238
  %2250 = vmatpush.bf16.msra.mxu0 %v2237
  %2251 = vmatpush.bf16.msra.mxu0 %v2236
  %2252 = vmatpush.bf16.msra.mxu0 %v2235
  %2253 = vmatpush.bf16.msra.mxu0 %v2234
  %2254 = vmatpush.bf16.msra.mxu0 %v2233
  %2255 = vmatpush.bf16.msra.mxu0 %v2232
  %2256 = vmatmul.bf16.gmra.mxu0 %v2105
  %v2257 = vpop.f32.mrf.mxu0
  %v2258 = vadd.f32 %v2196, %v2257
  %v2259 = vpop.f32.mrf.mxu0
  %v2260 = vadd.f32 %v2198, %v2259
  %2261 = vdwg.mxu0
  %v2262 = vtanh.pop %v2258
  %v2263 = vtanh.pop %v2260
  %v2264 = vrot.slane %v2262, 4
  %v2265 = vsel %vm365, 0.0, %v2264
  %v2267 = vunpack.c.l.s4 1983009808
  %v2268 = vunpack.c.0.s8 %v2267
  %v2269 = vperm.slane %v2262, %v2268
  %v2271 = vunpack.c.l.s4 1983009808
  %v2272 = vunpack.c.0.s8 %v2271
  %v2273 = vperm.slane %v2265, %v2272
  %v2274 = vrot.slane %v2263, 4
  %v2275 = vsel %vm365, 0.0, %v2274
  %v2277 = vunpack.c.l.s4 1983009808
  %v2278 = vunpack.c.0.s8 %v2277
  %v2279 = vperm.slane %v2263, %v2278
  %v2281 = vunpack.c.l.s4 1983009808
  %v2282 = vunpack.c.0.s8 %v2281
  %v2283 = vperm.slane %v2275, %v2282
  %v2284 = vrot.slane %v2279, 4
  %v2285 = vsel %vm365, %v2284, %v2269
  %v2286 = vrot.slane %v2269, 4
  %v2287 = vsel %vm365, %v2279, %v2286
  %v2289 = vunpack.c.l.s4 1934713408
  %v2290 = vunpack.c.0.s8 %v2289
  %v2291 = vperm.slane %v2285, %v2290
  %v2293 = vunpack.c.l.s4 1934713408
  %v2294 = vunpack.c.0.s8 %v2293
  %v2295 = vperm.slane %v2287, %v2294
  %v2296 = vrot.slane %v2283, 4
  %v2297 = vsel %vm365, %v2296, %v2273
  %v2298 = vrot.slane %v2273, 4
  %v2299 = vsel %vm365, %v2283, %v2298
  %v2301 = vunpack.c.l.s4 1934713408
  %v2302 = vunpack.c.0.s8 %v2301
  %v2303 = vperm.slane %v2297, %v2302
  %v2305 = vunpack.c.l.s4 1934713408
  %v2306 = vunpack.c.0.s8 %v2305
  %v2307 = vperm.slane %v2299, %v2306
  %v2308 = vrot.slane %v2291, 4
  %v2309 = vsel %vm365, 0.0, %v2308
  %v2310 = vrot.slane %v2295, 4
  %v2311 = vsel %vm365, 0.0, %v2310
  %v2312 = vrot.slane %v2303, 4
  %v2313 = vsel %vm365, 0.0, %v2312
  %v2314 = vrot.slane %v2307, 4
  %v2315 = vsel %vm365, 0.0, %v2314
  %2316 = vst [vmem:[%s11] sm:$0x3] %v2291
  %2317 = vst [vmem:[%s11 + $0x2] sm:$0x3] %v2309
  %2318 = vst [vmem:[%s11 + $0x4] sm:$0x3] %v2295
  %2319 = vst [vmem:[%s11 + $0x6] sm:$0x3] %v2311
  %2320 = vst [vmem:[%s11 + $0x8] sm:$0x3] %v2303
  %2321 = vst [vmem:[%s11 + $0xa] sm:$0x3] %v2313
  %2322 = vst [vmem:[%s11 + $0xc] sm:$0x3] %v2307
  %2323 = vst [vmem:[%s11 + $0xe] sm:$0x3] %v2315
  %v2324 = vrot.slane %v2075, 4
  %v2325 = vsel %vm365, 0.0, %v2324
  %v2327 = vunpack.c.l.s4 1983009808
  %v2328 = vunpack.c.0.s8 %v2327
  %v2329 = vperm.slane %v2075, %v2328
  %v2331 = vunpack.c.l.s4 1983009808
  %v2332 = vunpack.c.0.s8 %v2331
  %v2333 = vperm.slane %v2325, %v2332
  %v2334 = vrot.slane %v2076, 4
  %v2335 = vsel %vm365, 0.0, %v2334
  %v2337 = vunpack.c.l.s4 1983009808
  %v2338 = vunpack.c.0.s8 %v2337
  %v2339 = vperm.slane %v2076, %v2338
  %v2341 = vunpack.c.l.s4 1983009808
  %v2342 = vunpack.c.0.s8 %v2341
  %v2343 = vperm.slane %v2335, %v2342
  %v2344 = vrot.slane %v2339, 4
  %v2345 = vsel %vm365, %v2344, %v2329
  %v2346 = vrot.slane %v2329, 4
  %v2347 = vsel %vm365, %v2339, %v2346
  %v2349 = vunpack.c.l.s4 1934713408
  %v2350 = vunpack.c.0.s8 %v2349
  %v2351 = vperm.slane %v2345, %v2350
  %v2353 = vunpack.c.l.s4 1934713408
  %v2354 = vunpack.c.0.s8 %v2353
  %v2355 = vperm.slane %v2347, %v2354
  %v2356 = vrot.slane %v2343, 4
  %v2357 = vsel %vm365, %v2356, %v2333
  %v2358 = vrot.slane %v2333, 4
  %v2359 = vsel %vm365, %v2343, %v2358
  %v2361 = vunpack.c.l.s4 1934713408
  %v2362 = vunpack.c.0.s8 %v2361
  %v2363 = vperm.slane %v2357, %v2362
  %v2365 = vunpack.c.l.s4 1934713408
  %v2366 = vunpack.c.0.s8 %v2365
  %v2367 = vperm.slane %v2359, %v2366
  %v2368 = vrot.slane %v2351, 4
  %v2369 = vsel %vm365, 0.0, %v2368
  %v2370 = vrot.slane %v2355, 4
  %v2371 = vsel %vm365, 0.0, %v2370
  %v2372 = vrot.slane %v2363, 4
  %v2373 = vsel %vm365, 0.0, %v2372
  %v2374 = vrot.slane %v2367, 4
  %v2375 = vsel %vm365, 0.0, %v2374
  %v2376 = vpack.c.bf16 %v2351, %v2351
  %v2377 = vpack.c.bf16 %v2369, %v2369
  %v2378 = vpack.c.bf16 %v2355, %v2355
  %v2379 = vpack.c.bf16 %v2371, %v2371
  %v2380 = vpack.c.bf16 %v2363, %v2363
  %v2381 = vpack.c.bf16 %v2373, %v2373
  %v2382 = vpack.c.bf16 %v2367, %v2367
  %v2383 = vpack.c.bf16 %v2375, %v2375
  %2384 = vst [vmem:[%s12] sm:$0x1] %v2376
  %2385 = vst [vmem:[%s12 + $0x1] sm:$0x1] %v2377
  %2386 = vst [vmem:[%s12 + $0x2] sm:$0x1] %v2378
  %2387 = vst [vmem:[%s12 + $0x3] sm:$0x1] %v2379
  %2388 = vst [vmem:[%s12 + $0x4] sm:$0x1] %v2380
  %2389 = vst [vmem:[%s12 + $0x5] sm:$0x1] %v2381
  %2390 = vst [vmem:[%s12 + $0x6] sm:$0x1] %v2382
  %2391 = vst [vmem:[%s12 + $0x7] sm:$0x1] %v2383
  // Predicated region
  $region54: #{rnn_decoder_forward.1} parent=0 // pred_check
    _
  $region55: #{rnn_decoder_forward.1} parent=0 // pred_check_branch
    %2393 = sbr.rel (0) target = $region57
  $region56: #{rnn_decoder_forward.1} parent=0 // pred_region
    _
  $region57: #{rnn_decoder_forward.1} parent=0 // pred_fallthru
    _
  // Predicated region
  $region58: #{rnn_decoder_forward.1} parent=0 // pred_check
    _
  $region59: #{rnn_decoder_forward.1} parent=0 // pred_check_branch
    %2395 = sbr.rel (0) target = $region61
  $region60: #{rnn_decoder_forward.1} parent=0 // pred_region
    _
  $region61: #{rnn_decoder_forward.1} parent=0 // pred_fallthru
    _
  // Predicated region
  $region62: #{rnn_decoder_forward.1} parent=0 // pred_check
    _
  $region63: #{rnn_decoder_forward.1} parent=0 // pred_check_branch
    %2397 = sbr.rel (0) target = $region65
  $region64: #{rnn_decoder_forward.1} parent=0 // pred_region
    _
  $region65: #{rnn_decoder_forward.1} parent=0 // pred_fallthru
    _
  // Predicated region
  $region66: #{rnn_decoder_forward.1} parent=0 // pred_check
    _
  $region67: #{rnn_decoder_forward.1} parent=0 // pred_check_branch
    %2399 = sbr.rel (0) target = $region69
  $region68: #{rnn_decoder_forward.1} parent=0 // pred_region
    _
  $region69: #{rnn_decoder_forward.1} parent=0 // pred_fallthru
    _
  // Predicated region
  $region70: #{rnn_decoder_forward.1} parent=0 // pred_check
    _
  $region71: #{rnn_decoder_forward.1} parent=0 // pred_check_branch
    %2401 = sbr.rel (0) target = $region73
  $region72: #{rnn_decoder_forward.1} parent=0 // pred_region
    _
  $region73: #{rnn_decoder_forward.1} parent=0 // pred_fallthru
    _
  // Predicated region
  $region74: #{rnn_decoder_forward.1} parent=0 // pred_check
    _
  $region75: #{rnn_decoder_forward.1} parent=0 // pred_check_branch
    %2403 = sbr.rel (0) target = $region77
  $region76: #{rnn_decoder_forward.1} parent=0 // pred_region
    _
  $region77: #{rnn_decoder_forward.1} parent=0 // pred_fallthru
    _
  // Predicated region
  $region78: #{rnn_decoder_forward.1} parent=0 // pred_check
    _
  $region79: #{rnn_decoder_forward.1} parent=0 // pred_check_branch
    %2405 = sbr.rel (0) target = $region81
  $region80: #{rnn_decoder_forward.1} parent=0 // pred_region
    _
  $region81: #{rnn_decoder_forward.1} parent=0 // pred_fallthru
    _
  // Predicated region
  $region82: #{rnn_decoder_forward.1} parent=0 // pred_check
    _
  $region83: #{rnn_decoder_forward.1} parent=0 // pred_check_branch
    %2407 = sbr.rel (0) target = $region85
  $region84: #{rnn_decoder_forward.1} parent=0 // pred_region
    _
  $region85: #{rnn_decoder_forward.1} parent=0 // pred_fallthru
    _

// kernel: rnn_decoder_forward.1
$region0: #{rnn_decoder_forward.1}
  #allocation0 [shape = 'u32[]', space=smem, size = 0x4, offset = 0x4, fixed_abs, tag = 'smem constant byte address 0x4 - core index']
  #allocation1 [shape = 'u32[72,128]{1,0:T(1,128)}', space=vmem, size = 0x9000, scoped, tag = 'internal scratch']
  #allocation2 [shape = 'f32[2,128]{1,0:T(2,128)}', space=vmem, size = 0x400, scoped, tag = 'scratch operand']
  #allocation3 [shape = 'f32[2,128]{1,0:T(2,128)}', space=vmem, size = 0x400, scoped, tag = 'scratch operand']
  #allocation4 [shape = 'f32[8,2,512]{2,1,0:T(2,128)}', space=vmem, size = 0x8000, scoped, tag = 'scratch operand']
  #allocation5 [shape = 'f32[8,2,128]{2,1,0:T(2,128)}', space=vmem, size = 0x2000, scoped, tag = 'scratch operand']
  %s0 = inlined_call_operand.vmem [shape: bf16[2,8,128], index: 0, kind: input, shape index: {}]
  %s1 = inlined_call_operand.vmem [shape: bf16[2,128,128], index: 1, kind: input, shape index: {}]
  %s2 = inlined_call_operand.vmem [shape: f32[2,128], index: 2, kind: input, shape index: {}]
  %s3 = inlined_call_operand.vmem [shape: f32[2,128], index: 3, kind: input, shape index: {}]
  %s4 = inlined_call_operand.vmem [shape: f32[2,128], index: 4, kind: input, shape index: {}]
  %s5 = inlined_call_operand.vmem [shape: bf16[128,512], index: 5, kind: input, shape index: {}]
  %s6 = inlined_call_operand.vmem [shape: f32[1,512], index: 6, kind: input, shape index: {}]
  %s7 = inlined_call_operand.vmem [shape: bf16[128,512], index: 7, kind: input, shape index: {}]
  %s8 = inlined_call_operand.vmem [shape: bf16[128,128], index: 8, kind: input, shape index: {}]
  %s9 = inlined_call_operand.vmem [shape: bf16[128,128], index: 9, kind: input, shape index: {}]
  %s10 = inlined_call_operand.vmem [shape: bf16[128,128], index: 10, kind: input, shape index: {}]
  %s11 = inlined_call_operand.vmem [shape: f32[8,2,128], index: 11, kind: output, shape index: {0}]
  %s12 = inlined_call_operand.vmem [shape: bf16[8,2,128], index: 12, kind: output, shape index: {1}]
  %s13 = inlined_call_operand.vmem [shape: f32[2,128], index: 13, kind: output, shape index: {2}]
  %s14 = inlined_call_operand.vmem [shape: f32[2,128], index: 14, kind: output, shape index: {3}]
  %15 = xla_tuple %s11, %s12, %s13, %s14
  %s16 = sld [smem:[#allocation0]]
  $region86: #{rnn_decoder_forward.1} parent=0
    _
  %s18 = ssub.s32 1, %s16
  %s19 = scalar_select 0, %s18, %s16
  // Predicated region
  $region2: #{rnn_decoder_forward.1} parent=0 // pred_check
    _
  $region3: #{rnn_decoder_forward.1} parent=0 // pred_check_branch
    %21 = sbr.rel (0) target = $region5
  $region4: #{rnn_decoder_forward.1} parent=0 // pred_region
    _
  $region5: #{rnn_decoder_forward.1} parent=0 // pred_fallthru
    _
  // Predicated region
  $region6: #{rnn_decoder_forward.1} parent=0 // pred_check
    _
  $region7: #{rnn_decoder_forward.1} parent=0 // pred_check_branch
    %23 = sbr.rel (0) target = $region9
  $region8: #{rnn_decoder_forward.1} parent=0 // pred_region
    _
  $region9: #{rnn_decoder_forward.1} parent=0 // pred_fallthru
    _
  // Predicated region
  $region10: #{rnn_decoder_forward.1} parent=0 // pred_check
    _
  $region11: #{rnn_decoder_forward.1} parent=0 // pred_check_branch
    %25 = sbr.rel (0) target = $region13
  $region12: #{rnn_decoder_forward.1} parent=0 // pred_region
    _
  $region13: #{rnn_decoder_forward.1} parent=0 // pred_fallthru
    _
  // Predicated region
  $region14: #{rnn_decoder_forward.1} parent=0 // pred_check
    _
  $region15: #{rnn_decoder_forward.1} parent=0 // pred_check_branch
    %27 = sbr.rel (0) target = $region17
  $region16: #{rnn_decoder_forward.1} parent=0 // pred_region
    _
  $region17: #{rnn_decoder_forward.1} parent=0 // pred_fallthru
    _
  // Predicated region
  $region18: #{rnn_decoder_forward.1} parent=0 // pred_check
    _
  $region19: #{rnn_decoder_forward.1} parent=0 // pred_check_branch
    %29 = sbr.rel (0) target = $region21
  $region20: #{rnn_decoder_forward.1} parent=0 // pred_region
    _
  $region21: #{rnn_decoder_forward.1} parent=0 // pred_fallthru
    _
  // Predicated region
  $region22: #{rnn_decoder_forward.1} parent=0 // pred_check
    _
  $region23: #{rnn_decoder_forward.1} parent=0 // pred_check_branch
    %31 = sbr.rel (0) target = $region25
  $region24: #{rnn_decoder_forward.1} parent=0 // pred_region
    _
  $region25: #{rnn_decoder_forward.1} parent=0 // pred_fallthru
    _
  // Predicated region
  $region26: #{rnn_decoder_forward.1} parent=0 // pred_check
    _
  $region27: #{rnn_decoder_forward.1} parent=0 // pred_check_branch
    %33 = sbr.rel (0) target = $region29
  $region28: #{rnn_decoder_forward.1} parent=0 // pred_region
    _
  $region29: #{rnn_decoder_forward.1} parent=0 // pred_fallthru
    _
  // Predicated region
  $region30: #{rnn_decoder_forward.1} parent=0 // pred_check
    _
  $region31: #{rnn_decoder_forward.1} parent=0 // pred_check_branch
    %35 = sbr.rel (0) target = $region33
  $region32: #{rnn_decoder_forward.1} parent=0 // pred_region
    _
  $region33: #{rnn_decoder_forward.1} parent=0 // pred_fallthru
    _
  // Predicated region
  $region34: #{rnn_decoder_forward.1} parent=0 // pred_check
    _
  $region35: #{rnn_decoder_forward.1} parent=0 // pred_check_branch
    %37 = sbr.rel (0) target = $region37
  $region36: #{rnn_decoder_forward.1} parent=0 // pred_region
    _
  $region37: #{rnn_decoder_forward.1} parent=0 // pred_fallthru
    _
  // Predicated region
  $region38: #{rnn_decoder_forward.1} parent=0 // pred_check
    _
  $region39: #{rnn_decoder_forward.1} parent=0 // pred_check_branch
    %39 = sbr.rel (0) target = $region41
  $region40: #{rnn_decoder_forward.1} parent=0 // pred_region
    _
  $region41: #{rnn_decoder_forward.1} parent=0 // pred_fallthru
    _
  // Predicated region
  $region42: #{rnn_decoder_forward.1} parent=0 // pred_check
    _
  $region43: #{rnn_decoder_forward.1} parent=0 // pred_check_branch
    %41 = sbr.rel (0) target = $region45
  $region44: #{rnn_decoder_forward.1} parent=0 // pred_region
    _
  $region45: #{rnn_decoder_forward.1} parent=0 // pred_fallthru
    _
  %p42 = scmp.eq.s32.totalorder 0, 0
  // Predicated region
  $region46: #{rnn_decoder_forward.1} parent=0 // pred_check
    %p43 = pneg %p42
  $region47: #{rnn_decoder_forward.1} parent=0 // pred_check_branch
    %45 = sbr.rel (%p43) target = $region49
  $region48: #{rnn_decoder_forward.1} parent=0 // pred_region
    %v46 = vld [vmem:[%s3] sm:$0x3]
    %47 = vst [vmem:[#allocation2] sm:$0x3] %v46
    %v48 = vld [vmem:[%s4] sm:$0x3]
    %49 = vst [vmem:[#allocation3] sm:$0x3] %v48
  $region49: #{rnn_decoder_forward.1} parent=0 // pred_fallthru
    _
  %v50 = vld [vmem:[%s0] sm:$0xf]
  %v51 = vld [vmem:[%s0 + $0x4] sm:$0xf]
  %v52 = vld [vmem:[%s5] sm:$0xff]
  %v53 = vld [vmem:[%s5 + $0x8] sm:$0xff]
  %v54 = vld [vmem:[%s5 + $0x10] sm:$0xff]
  %v55 = vld [vmem:[%s5 + $0x18] sm:$0xff]
  %v56 = vld [vmem:[%s5 + $0x20] sm:$0xff]
  %v57 = vld [vmem:[%s5 + $0x28] sm:$0xff]
  %v58 = vld [vmem:[%s5 + $0x30] sm:$0xff]
  %v59 = vld [vmem:[%s5 + $0x38] sm:$0xff]
  %v60 = vld [vmem:[%s5 + $0x40] sm:$0xff]
  %v61 = vld [vmem:[%s5 + $0x48] sm:$0xff]
  %v62 = vld [vmem:[%s5 + $0x50] sm:$0xff]
  %v63 = vld [vmem:[%s5 + $0x58] sm:$0xff]
  %v64 = vld [vmem:[%s5 + $0x60] sm:$0xff]
  %v65 = vld [vmem:[%s5 + $0x68] sm:$0xff]
  %v66 = vld [vmem:[%s5 + $0x70] sm:$0xff]
  %v67 = vld [vmem:[%s5 + $0x78] sm:$0xff]
  %v68 = vld [vmem:[%s5 + $0x80] sm:$0xff]
  %v69 = vld [vmem:[%s5 + $0x88] sm:$0xff]
  %v70 = vld [vmem:[%s5 + $0x90] sm:$0xff]
  %v71 = vld [vmem:[%s5 + $0x98] sm:$0xff]
  %v72 = vld [vmem:[%s5 + $0xa0] sm:$0xff]
  %v73 = vld [vmem:[%s5 + $0xa8] sm:$0xff]
  %v74 = vld [vmem:[%s5 + $0xb0] sm:$0xff]
  %v75 = vld [vmem:[%s5 + $0xb8] sm:$0xff]
  %v76 = vld [vmem:[%s5 + $0xc0] sm:$0xff]
  %v77 = vld [vmem:[%s5 + $0xc8] sm:$0xff]
  %v78 = vld [vmem:[%s5 + $0xd0] sm:$0xff]
  %v79 = vld [vmem:[%s5 + $0xd8] sm:$0xff]
  %v80 = vld [vmem:[%s5 + $0xe0] sm:$0xff]
  %v81 = vld [vmem:[%s5 + $0xe8] sm:$0xff]
  %v82 = vld [vmem:[%s5 + $0xf0] sm:$0xff]
  %v83 = vld [vmem:[%s5 + $0xf8] sm:$0xff]
  %v86 = vunpack.c.l.b16 %v50
  %v87 = vunpack.c.l.b16 %v51
  %v88 = vpack.c.b16 %v87, %v86
  %v122 = vunpack.c.l.b16 %v52
  %v123 = vunpack.c.h.b16 %v52
  %v124 = vunpack.c.l.b16 %v53
  %v125 = vunpack.c.h.b16 %v53
  %v126 = vunpack.c.l.b16 %v54
  %v127 = vunpack.c.h.b16 %v54
  %v128 = vunpack.c.l.b16 %v55
  %v129 = vunpack.c.h.b16 %v55
  %v130 = vunpack.c.l.b16 %v56
  %v131 = vunpack.c.h.b16 %v56
  %v132 = vunpack.c.l.b16 %v57
  %v133 = vunpack.c.h.b16 %v57
  %v134 = vunpack.c.l.b16 %v58
  %v135 = vunpack.c.h.b16 %v58
  %v136 = vunpack.c.l.b16 %v59
  %v137 = vunpack.c.h.b16 %v59
  %v138 = vunpack.c.l.b16 %v60
  %v139 = vunpack.c.h.b16 %v60
  %v140 = vunpack.c.l.b16 %v61
  %v141 = vunpack.c.h.b16 %v61
  %v142 = vunpack.c.l.b16 %v62
  %v143 = vunpack.c.h.b16 %v62
  %v144 = vunpack.c.l.b16 %v63
  %v145 = vunpack.c.h.b16 %v63
  %v146 = vunpack.c.l.b16 %v64
  %v147 = vunpack.c.h.b16 %v64
  %v148 = vunpack.c.l.b16 %v65
  %v149 = vunpack.c.h.b16 %v65
  %v150 = vunpack.c.l.b16 %v66
  %v151 = vunpack.c.h.b16 %v66
  %v152 = vunpack.c.l.b16 %v67
  %v153 = vunpack.c.h.b16 %v67
  %v154 = vunpack.c.l.b16 %v68
  %v155 = vunpack.c.h.b16 %v68
  %v156 = vunpack.c.l.b16 %v69
  %v157 = vunpack.c.h.b16 %v69
  %v158 = vunpack.c.l.b16 %v70
  %v159 = vunpack.c.h.b16 %v70
  %v160 = vunpack.c.l.b16 %v71
  %v161 = vunpack.c.h.b16 %v71
  %v162 = vunpack.c.l.b16 %v72
  %v163 = vunpack.c.h.b16 %v72
  %v164 = vunpack.c.l.b16 %v73
  %v165 = vunpack.c.h.b16 %v73
  %v166 = vunpack.c.l.b16 %v74
  %v167 = vunpack.c.h.b16 %v74
  %v168 = vunpack.c.l.b16 %v75
  %v169 = vunpack.c.h.b16 %v75
  %v170 = vunpack.c.l.b16 %v76
  %v171 = vunpack.c.h.b16 %v76
  %v172 = vunpack.c.l.b16 %v77
  %v173 = vunpack.c.h.b16 %v77
  %v174 = vunpack.c.l.b16 %v78
  %v175 = vunpack.c.h.b16 %v78
  %v176 = vunpack.c.l.b16 %v79
  %v177 = vunpack.c.h.b16 %v79
  %v178 = vunpack.c.l.b16 %v80
  %v179 = vunpack.c.h.b16 %v80
  %v180 = vunpack.c.l.b16 %v81
  %v181 = vunpack.c.h.b16 %v81
  %v182 = vunpack.c.l.b16 %v82
  %v183 = vunpack.c.h.b16 %v82
  %v184 = vunpack.c.l.b16 %v83
  %v185 = vunpack.c.h.b16 %v83
  %v186 = vpack.c.b16 %v126, %v122
  %v187 = vpack.c.b16 %v127, %v123
  %v188 = vpack.c.b16 %v128, %v124
  %v189 = vpack.c.b16 %v129, %v125
  %v190 = vpack.c.b16 %v134, %v130
  %v191 = vpack.c.b16 %v135, %v131
  %v192 = vpack.c.b16 %v136, %v132
  %v193 = vpack.c.b16 %v137, %v133
  %v194 = vpack.c.b16 %v142, %v138
  %v195 = vpack.c.b16 %v143, %v139
  %v196 = vpack.c.b16 %v144, %v140
  %v197 = vpack.c.b16 %v145, %v141
  %v198 = vpack.c.b16 %v150, %v146
  %v199 = vpack.c.b16 %v151, %v147
  %v200 = vpack.c.b16 %v152, %v148
  %v201 = vpack.c.b16 %v153, %v149
  %v202 = vpack.c.b16 %v158, %v154
  %v203 = vpack.c.b16 %v159, %v155
  %v204 = vpack.c.b16 %v160, %v156
  %v205 = vpack.c.b16 %v161, %v157
  %v206 = vpack.c.b16 %v166, %v162
  %v207 = vpack.c.b16 %v167, %v163
  %v208 = vpack.c.b16 %v168, %v164
  %v209 = vpack.c.b16 %v169, %v165
  %v210 = vpack.c.b16 %v174, %v170
  %v211 = vpack.c.b16 %v175, %v171
  %v212 = vpack.c.b16 %v176, %v172
  %v213 = vpack.c.b16 %v177, %v173
  %v214 = vpack.c.b16 %v182, %v178
  %v215 = vpack.c.b16 %v183, %v179
  %v216 = vpack.c.b16 %v184, %v180
  %v217 = vpack.c.b16 %v185, %v181
  %250 = vmatpush.bf16.msra.mxu0 %v214
  %251 = vmatpush.bf16.msra.mxu0 %v210
  %252 = vmatpush.bf16.msra.mxu0 %v206
  %253 = vmatpush.bf16.msra.mxu0 %v202
  %254 = vmatpush.bf16.msra.mxu0 %v198
  %255 = vmatpush.bf16.msra.mxu0 %v194
  %256 = vmatpush.bf16.msra.mxu0 %v190
  %257 = vmatpush.bf16.msra.mxu0 %v186
  %258 = vmatmul.bf16.gmra.mxu0 %v88
  %v259 = vpop.f32.mrf.mxu0
  %v260 = vadd.f32 0.0, %v259
  %v261 = vpop.f32.mrf.mxu0
  %v262 = vadd.f32 0.0, %v261
  %263 = vdwg.mxu0
  %264 = vmatpush.bf16.msra.mxu0 %v215
  %265 = vmatpush.bf16.msra.mxu0 %v211
  %266 = vmatpush.bf16.msra.mxu0 %v207
  %267 = vmatpush.bf16.msra.mxu0 %v203
  %268 = vmatpush.bf16.msra.mxu0 %v199
  %269 = vmatpush.bf16.msra.mxu0 %v195
  %270 = vmatpush.bf16.msra.mxu0 %v191
  %271 = vmatpush.bf16.msra.mxu0 %v187
  %272 = vmatmul.bf16.gmra.mxu0 %v88
  %v273 = vpop.f32.mrf.mxu0
  %v274 = vadd.f32 0.0, %v273
  %v275 = vpop.f32.mrf.mxu0
  %v276 = vadd.f32 0.0, %v275
  %277 = vdwg.mxu0
  %278 = vmatpush.bf16.msra.mxu0 %v216
  %279 = vmatpush.bf16.msra.mxu0 %v212
  %280 = vmatpush.bf16.msra.mxu0 %v208
  %281 = vmatpush.bf16.msra.mxu0 %v204
  %282 = vmatpush.bf16.msra.mxu0 %v200
  %283 = vmatpush.bf16.msra.mxu0 %v196
  %284 = vmatpush.bf16.msra.mxu0 %v192
  %285 = vmatpush.bf16.msra.mxu0 %v188
  %286 = vmatmul.bf16.gmra.mxu0 %v88
  %v287 = vpop.f32.mrf.mxu0
  %v288 = vadd.f32 0.0, %v287
  %v289 = vpop.f32.mrf.mxu0
  %v290 = vadd.f32 0.0, %v289
  %291 = vdwg.mxu0
  %292 = vmatpush.bf16.msra.mxu0 %v217
  %293 = vmatpush.bf16.msra.mxu0 %v213
  %294 = vmatpush.bf16.msra.mxu0 %v209
  %295 = vmatpush.bf16.msra.mxu0 %v205
  %296 = vmatpush.bf16.msra.mxu0 %v201
  %297 = vmatpush.bf16.msra.mxu0 %v197
  %298 = vmatpush.bf16.msra.mxu0 %v193
  %299 = vmatpush.bf16.msra.mxu0 %v189
  %300 = vmatmul.bf16.gmra.mxu0 %v88
  %v301 = vpop.f32.mrf.mxu0
  %v302 = vadd.f32 0.0, %v301
  %v303 = vpop.f32.mrf.mxu0
  %v304 = vadd.f32 0.0, %v303
  %305 = vdwg.mxu0
  %v314 = vrot.slane %v274, 6
  %v315 = vrot.slane %v288, 4
  %v316 = vrot.slane %v302, 2
  %v317 = vrot.slane %v276, 6
  %v318 = vrot.slane %v290, 4
  %v319 = vrot.slane %v304, 2
  %vm320 = vcmask 1041408
  %v321 = vsel %vm320, %v260, %v314
  %vm322 = vcmask 1045508
  %v323 = vsel %vm322, %v315, %v316
  %vm324 = vcmask 1043456
  %v325 = vsel %vm324, %v321, %v323
  %vm326 = vcmask 1043458
  %v327 = vsel %vm326, %v260, %v314
  %vm328 = vcmask 1045504
  %v329 = vsel %vm328, %v316, %v315
  %vm330 = vcmask 1045506
  %v331 = vsel %vm330, %v327, %v329
  %v332 = vrot.slane %v331, 2
  %v333 = vsel %vm322, %v260, %v314
  %v334 = vsel %vm320, %v315, %v316
  %v335 = vsel %vm324, %v334, %v333
  %v336 = vrot.slane %v335, 4
  %v337 = vsel %vm328, %v314, %v260
  %v338 = vsel %vm326, %v315, %v316
  %v339 = vsel %vm330, %v338, %v337
  %v340 = vrot.slane %v339, 6
  %v341 = vsel %vm320, %v262, %v317
  %v342 = vsel %vm322, %v318, %v319
  %v343 = vsel %vm324, %v341, %v342
  %v344 = vsel %vm326, %v262, %v317
  %v345 = vsel %vm328, %v319, %v318
  %v346 = vsel %vm330, %v344, %v345
  %v347 = vrot.slane %v346, 2
  %v348 = vsel %vm322, %v262, %v317
  %v349 = vsel %vm320, %v318, %v319
  %v350 = vsel %vm324, %v349, %v348
  %v351 = vrot.slane %v350, 4
  %v352 = vsel %vm328, %v317, %v262
  %v353 = vsel %vm326, %v318, %v319
  %v354 = vsel %vm330, %v353, %v352
  %v355 = vrot.slane %v354, 6
  %v364 = vrot.slane %v343, 4
  %vm365 = vcmask 1047556
  %v366 = vsel %vm365, %v364, %v325
  %v367 = vrot.slane %v325, 4
  %v368 = vsel %vm365, %v343, %v367
  %v370 = vunpack.c.l.s4 1934713408
  %v371 = vunpack.c.0.s8 %v370
  %v372 = vperm.slane %v366, %v371
  %v374 = vunpack.c.l.s4 1934713408
  %v375 = vunpack.c.0.s8 %v374
  %v376 = vperm.slane %v368, %v375
  %v377 = vrot.slane %v376, 4
  %v378 = vsel %vm365, %v377, %v372
  %v379 = vrot.slane %v372, 4
  %v380 = vsel %vm365, %v376, %v379
  %v381 = vrot.slane %v347, 4
  %v382 = vsel %vm365, %v381, %v332
  %v383 = vrot.slane %v332, 4
  %v384 = vsel %vm365, %v347, %v383
  %v386 = vunpack.c.l.s4 1934713408
  %v387 = vunpack.c.0.s8 %v386
  %v388 = vperm.slane %v382, %v387
  %v390 = vunpack.c.l.s4 1934713408
  %v391 = vunpack.c.0.s8 %v390
  %v392 = vperm.slane %v384, %v391
  %v393 = vrot.slane %v392, 4
  %v394 = vsel %vm365, %v393, %v388
  %v395 = vrot.slane %v388, 4
  %v396 = vsel %vm365, %v392, %v395
  %v397 = vrot.slane %v351, 4
  %v398 = vsel %vm365, %v397, %v336
  %v399 = vrot.slane %v336, 4
  %v400 = vsel %vm365, %v351, %v399
  %v402 = vunpack.c.l.s4 1934713408
  %v403 = vunpack.c.0.s8 %v402
  %v404 = vperm.slane %v398, %v403
  %v406 = vunpack.c.l.s4 1934713408
  %v407 = vunpack.c.0.s8 %v406
  %v408 = vperm.slane %v400, %v407
  %v409 = vrot.slane %v408, 4
  %v410 = vsel %vm365, %v409, %v404
  %v411 = vrot.slane %v404, 4
  %v412 = vsel %vm365, %v408, %v411
  %v413 = vrot.slane %v355, 4
  %v414 = vsel %vm365, %v413, %v340
  %v415 = vrot.slane %v340, 4
  %v416 = vsel %vm365, %v355, %v415
  %v418 = vunpack.c.l.s4 1934713408
  %v419 = vunpack.c.0.s8 %v418
  %v420 = vperm.slane %v414, %v419
  %v422 = vunpack.c.l.s4 1934713408
  %v423 = vunpack.c.0.s8 %v422
  %v424 = vperm.slane %v416, %v423
  %v425 = vrot.slane %v424, 4
  %v426 = vsel %vm365, %v425, %v420
  %v427 = vrot.slane %v420, 4
  %v428 = vsel %vm365, %v424, %v427
  %v429 = vld [vmem:[%s6] sm:$0xf]
  %v431 = vperm.slane %v429, 0
  %v432 = vperm.slane %v429, 1
  %v433 = vperm.slane %v429, 2
  %v434 = vperm.slane %v429, 3
  %v435 = vrot.slane %v432, 6
  %v436 = vrot.slane %v433, 4
  %v437 = vrot.slane %v434, 2
  %v438 = vsel %vm320, %v431, %v435
  %v439 = vsel %vm322, %v436, %v437
  %v440 = vsel %vm324, %v438, %v439
  %v442 = vadd.f32 %v378, %v440
  %v443 = vadd.f32 %v380, %v440
  %v444 = vadd.f32 %v394, %v440
  %v445 = vadd.f32 %v396, %v440
  %v446 = vadd.f32 %v410, %v440
  %v447 = vadd.f32 %v412, %v440
  %v448 = vadd.f32 %v426, %v440
  %v449 = vadd.f32 %v428, %v440
  %450 = vst [vmem:[#allocation4] sm:$0xff] %v442
  %451 = vst [vmem:[#allocation4 + $0x8] sm:$0xff] %v443
  %452 = vst [vmem:[#allocation4 + $0x10] sm:$0xff] %v444
  %453 = vst [vmem:[#allocation4 + $0x18] sm:$0xff] %v445
  %454 = vst [vmem:[#allocation4 + $0x20] sm:$0xff] %v446
  %455 = vst [vmem:[#allocation4 + $0x28] sm:$0xff] %v447
  %456 = vst [vmem:[#allocation4 + $0x30] sm:$0xff] %v448
  %457 = vst [vmem:[#allocation4 + $0x38] sm:$0xff] %v449
  %v458 = vld [vmem:[%s7] sm:$0xff]
  %v459 = vld [vmem:[%s7 + $0x8] sm:$0xff]
  %v460 = vld [vmem:[%s7 + $0x10] sm:$0xff]
  %v461 = vld [vmem:[%s7 + $0x18] sm:$0xff]
  %v462 = vld [vmem:[%s7 + $0x20] sm:$0xff]
  %v463 = vld [vmem:[%s7 + $0x28] sm:$0xff]
  %v464 = vld [vmem:[%s7 + $0x30] sm:$0xff]
  %v465 = vld [vmem:[%s7 + $0x38] sm:$0xff]
  %v466 = vld [vmem:[%s7 + $0x40] sm:$0xff]
  %v467 = vld [vmem:[%s7 + $0x48] sm:$0xff]
  %v468 = vld [vmem:[%s7 + $0x50] sm:$0xff]
  %v469 = vld [vmem:[%s7 + $0x58] sm:$0xff]
  %v470 = vld [vmem:[%s7 + $0x60] sm:$0xff]
  %v471 = vld [vmem:[%s7 + $0x68] sm:$0xff]
  %v472 = vld [vmem:[%s7 + $0x70] sm:$0xff]
  %v473 = vld [vmem:[%s7 + $0x78] sm:$0xff]
  %v474 = vld [vmem:[%s7 + $0x80] sm:$0xff]
  %v475 = vld [vmem:[%s7 + $0x88] sm:$0xff]
  %v476 = vld [vmem:[%s7 + $0x90] sm:$0xff]
  %v477 = vld [vmem:[%s7 + $0x98] sm:$0xff]
  %v478 = vld [vmem:[%s7 + $0xa0] sm:$0xff]
  %v479 = vld [vmem:[%s7 + $0xa8] sm:$0xff]
  %v480 = vld [vmem:[%s7 + $0xb0] sm:$0xff]
  %v481 = vld [vmem:[%s7 + $0xb8] sm:$0xff]
  %v482 = vld [vmem:[%s7 + $0xc0] sm:$0xff]
  %v483 = vld [vmem:[%s7 + $0xc8] sm:$0xff]
  %v484 = vld [vmem:[%s7 + $0xd0] sm:$0xff]
  %v485 = vld [vmem:[%s7 + $0xd8] sm:$0xff]
  %v486 = vld [vmem:[%s7 + $0xe0] sm:$0xff]
  %v487 = vld [vmem:[%s7 + $0xe8] sm:$0xff]
  %v488 = vld [vmem:[%s7 + $0xf0] sm:$0xff]
  %v489 = vld [vmem:[%s7 + $0xf8] sm:$0xff]
  // Predicated region
  $region50: #{rnn_decoder_forward.1} parent=0 // pred_check
    %p490 = pneg %p42
  $region51: #{rnn_decoder_forward.1} parent=0 // pred_check_branch
    %492 = sbr.rel (%p490) target = $region53
  $region52: #{rnn_decoder_forward.1} parent=0 // pred_region
    %v493 = vld [vmem:[#allocation2] sm:$0x3]
    %v494 = vld [vmem:[#allocation3] sm:$0x3]
    %v495 = vld [vmem:[#allocation4] sm:$0xff]
    %v496 = vpack.c.bf16 %v493, %v493
    %v529 = vunpack.c.l.b16 %v458
    %v530 = vunpack.c.h.b16 %v458
    %v531 = vunpack.c.l.b16 %v459
    %v532 = vunpack.c.h.b16 %v459
    %v533 = vunpack.c.l.b16 %v460
    %v534 = vunpack.c.h.b16 %v460
    %v535 = vunpack.c.l.b16 %v461
    %v536 = vunpack.c.h.b16 %v461
    %v537 = vunpack.c.l.b16 %v462
    %v538 = vunpack.c.h.b16 %v462
    %v539 = vunpack.c.l.b16 %v463
    %v540 = vunpack.c.h.b16 %v463
    %v541 = vunpack.c.l.b16 %v464
    %v542 = vunpack.c.h.b16 %v464
    %v543 = vunpack.c.l.b16 %v465
    %v544 = vunpack.c.h.b16 %v465
    %v545 = vunpack.c.l.b16 %v466
    %v546 = vunpack.c.h.b16 %v466
    %v547 = vunpack.c.l.b16 %v467
    %v548 = vunpack.c.h.b16 %v467
    %v549 = vunpack.c.l.b16 %v468
    %v550 = vunpack.c.h.b16 %v468
    %v551 = vunpack.c.l.b16 %v469
    %v552 = vunpack.c.h.b16 %v469
    %v553 = vunpack.c.l.b16 %v470
    %v554 = vunpack.c.h.b16 %v470
    %v555 = vunpack.c.l.b16 %v471
    %v556 = vunpack.c.h.b16 %v471
    %v557 = vunpack.c.l.b16 %v472
    %v558 = vunpack.c.h.b16 %v472
    %v559 = vunpack.c.l.b16 %v473
    %v560 = vunpack.c.h.b16 %v473
    %v561 = vunpack.c.l.b16 %v474
    %v562 = vunpack.c.h.b16 %v474
    %v563 = vunpack.c.l.b16 %v475
    %v564 = vunpack.c.h.b16 %v475
    %v565 = vunpack.c.l.b16 %v476
    %v566 = vunpack.c.h.b16 %v476
    %v567 = vunpack.c.l.b16 %v477
    %v568 = vunpack.c.h.b16 %v477
    %v569 = vunpack.c.l.b16 %v478
    %v570 = vunpack.c.h.b16 %v478
    %v571 = vunpack.c.l.b16 %v479
    %v572 = vunpack.c.h.b16 %v479
    %v573 = vunpack.c.l.b16 %v480
    %v574 = vunpack.c.h.b16 %v480
    %v575 = vunpack.c.l.b16 %v481
    %v576 = vunpack.c.h.b16 %v481
    %v577 = vunpack.c.l.b16 %v482
    %v578 = vunpack.c.h.b16 %v482
    %v579 = vunpack.c.l.b16 %v483
    %v580 = vunpack.c.h.b16 %v483
    %v581 = vunpack.c.l.b16 %v484
    %v582 = vunpack.c.h.b16 %v484
    %v583 = vunpack.c.l.b16 %v485
    %v584 = vunpack.c.h.b16 %v485
    %v585 = vunpack.c.l.b16 %v486
    %v586 = vunpack.c.h.b16 %v486
    %v587 = vunpack.c.l.b16 %v487
    %v588 = vunpack.c.h.b16 %v487
    %v589 = vunpack.c.l.b16 %v488
    %v590 = vunpack.c.h.b16 %v488
    %v591 = vunpack.c.l.b16 %v489
    %v592 = vunpack.c.h.b16 %v489
    %v593 = vpack.c.b16 %v533, %v529
    %v594 = vpack.c.b16 %v534, %v530
    %v595 = vpack.c.b16 %v535, %v531
    %v596 = vpack.c.b16 %v536, %v532
    %v597 = vpack.c.b16 %v541, %v537
    %v598 = vpack.c.b16 %v542, %v538
    %v599 = vpack.c.b16 %v543, %v539
    %v600 = vpack.c.b16 %v544, %v540
    %v601 = vpack.c.b16 %v549, %v545
    %v602 = vpack.c.b16 %v550, %v546
    %v603 = vpack.c.b16 %v551, %v547
    %v604 = vpack.c.b16 %v552, %v548
    %v605 = vpack.c.b16 %v557, %v553
    %v606 = vpack.c.b16 %v558, %v554
    %v607 = vpack.c.b16 %v559, %v555
    %v608 = vpack.c.b16 %v560, %v556
    %v609 = vpack.c.b16 %v565, %v561
    %v610 = vpack.c.b16 %v566, %v562
    %v611 = vpack.c.b16 %v567, %v563
    %v612 = vpack.c.b16 %v568, %v564
    %v613 = vpack.c.b16 %v573, %v569
    %v614 = vpack.c.b16 %v574, %v570
    %v615 = vpack.c.b16 %v575, %v571
    %v616 = vpack.c.b16 %v576, %v572
    %v617 = vpack.c.b16 %v581, %v577
    %v618 = vpack.c.b16 %v582, %v578
    %v619 = vpack.c.b16 %v583, %v579
    %v620 = vpack.c.b16 %v584, %v580
    %v621 = vpack.c.b16 %v589, %v585
    %v622 = vpack.c.b16 %v590, %v586
    %v623 = vpack.c.b16 %v591, %v587
    %v624 = vpack.c.b16 %v592, %v588
    %657 = vmatpush.bf16.msra.mxu0 %v621
    %658 = vmatpush.bf16.msra.mxu0 %v617
    %659 = vmatpush.bf16.msra.mxu0 %v613
    %660 = vmatpush.bf16.msra.mxu0 %v609
    %661 = vmatpush.bf16.msra.mxu0 %v605
    %662 = vmatpush.bf16.msra.mxu0 %v601
    %663 = vmatpush.bf16.msra.mxu0 %v597
    %664 = vmatpush.bf16.msra.mxu0 %v593
    %665 = vmatmul.bf16.gmra.mxu0 %v496
    %v666 = vpop.f32.mrf.mxu0
    %v667 = vadd.f32 0.0, %v666
    %v668 = vpop.f32.mrf.mxu0
    %669 = vdwg.mxu0
    %670 = vmatpush.bf16.msra.mxu0 %v622
    %671 = vmatpush.bf16.msra.mxu0 %v618
    %672 = vmatpush.bf16.msra.mxu0 %v614
    %673 = vmatpush.bf16.msra.mxu0 %v610
    %674 = vmatpush.bf16.msra.mxu0 %v606
    %675 = vmatpush.bf16.msra.mxu0 %v602
    %676 = vmatpush.bf16.msra.mxu0 %v598
    %677 = vmatpush.bf16.msra.mxu0 %v594
    %678 = vmatmul.bf16.gmra.mxu0 %v496
    %v679 = vpop.f32.mrf.mxu0
    %v680 = vadd.f32 0.0, %v679
    %v681 = vpop.f32.mrf.mxu0
    %682 = vdwg.mxu0
    %683 = vmatpush.bf16.msra.mxu0 %v623
    %684 = vmatpush.bf16.msra.mxu0 %v619
    %685 = vmatpush.bf16.msra.mxu0 %v615
    %686 = vmatpush.bf16.msra.mxu0 %v611
    %687 = vmatpush.bf16.msra.mxu0 %v607
    %688 = vmatpush.bf16.msra.mxu0 %v603
    %689 = vmatpush.bf16.msra.mxu0 %v599
    %690 = vmatpush.bf16.msra.mxu0 %v595
    %691 = vmatmul.bf16.gmra.mxu0 %v496
    %v692 = vpop.f32.mrf.mxu0
    %v693 = vadd.f32 0.0, %v692
    %v694 = vpop.f32.mrf.mxu0
    %695 = vdwg.mxu0
    %696 = vmatpush.bf16.msra.mxu0 %v624
    %697 = vmatpush.bf16.msra.mxu0 %v620
    %698 = vmatpush.bf16.msra.mxu0 %v616
    %699 = vmatpush.bf16.msra.mxu0 %v612
    %700 = vmatpush.bf16.msra.mxu0 %v608
    %701 = vmatpush.bf16.msra.mxu0 %v604
    %702 = vmatpush.bf16.msra.mxu0 %v600
    %703 = vmatpush.bf16.msra.mxu0 %v596
    %704 = vmatmul.bf16.gmra.mxu0 %v496
    %v705 = vpop.f32.mrf.mxu0
    %v706 = vadd.f32 0.0, %v705
    %v707 = vpop.f32.mrf.mxu0
    %708 = vdwg.mxu0
    %v713 = vrot.slane %v680, 6
    %v714 = vrot.slane %v693, 4
    %v715 = vrot.slane %v706, 2
    %v716 = vsel %vm320, %v667, %v713
    %v717 = vsel %vm322, %v714, %v715
    %v718 = vsel %vm324, %v716, %v717
    %v720 = vadd.f32 %v495, %v718
    %v721 = vxor.u32 %v720, 2147483648
    %v722 = vmul.f32 %v721, 1.442695
    %v723 = vpow.pop %v722
    %v724 = vadd.f32 %v723, 1.0
    %v725 = vrcp.pop %v724
    %v726 = vmul.f32 %v724, %v725
    %v727 = vsub.f32 1.0, %v726
    %v728 = vmul.f32 %v725, %v727
    %v729 = vadd.f32 %v725, %v728
    %vm730 = vweird.f32 %v724
    %vm731 = vweird.f32 %v725
    %vm732 = vmor %vm730, %vm731
    %v733 = vsel %vm732, %v725, %v729
    %v734 = vand.u32 2147483647, %v724
    %vm735 = vcmp.eq.f32.partialorder %v734, 8.507059e+37
    %v736 = vand.u32 %v724, 2147483648
    %v737 = vor.u32 1.1754944e-38, %v736
    %v738 = vsel %vm735, %v737, %v733
    %v739 = vmul.f32 1.0, %v738
    %v741 = vrot.slane %v720, 2
    %v743 = vxor.u32 %v741, 2147483648
    %v744 = vmul.f32 %v743, 1.442695
    %v745 = vpow.pop %v744
    %v746 = vadd.f32 %v745, 1.0
    %v747 = vrcp.pop %v746
    %v748 = vmul.f32 %v746, %v747
    %v749 = vsub.f32 1.0, %v748
    %v750 = vmul.f32 %v747, %v749
    %v751 = vadd.f32 %v747, %v750
    %vm752 = vweird.f32 %v746
    %vm753 = vweird.f32 %v747
    %vm754 = vmor %vm752, %vm753
    %v755 = vsel %vm754, %v747, %v751
    %v756 = vand.u32 2147483647, %v746
    %vm757 = vcmp.eq.f32.partialorder %v756, 8.507059e+37
    %v758 = vand.u32 %v746, 2147483648
    %v759 = vor.u32 1.1754944e-38, %v758
    %v760 = vsel %vm757, %v759, %v755
    %v761 = vmul.f32 1.0, %v760
    %v762 = vrot.slane %v720, 4
    %v764 = vtanh.pop %v762
    %v765 = vrot.slane %v720, 6
    %v767 = vxor.u32 %v765, 2147483648
    %v768 = vmul.f32 %v767, 1.442695
    %v769 = vpow.pop %v768
    %v770 = vadd.f32 %v769, 1.0
    %v771 = vrcp.pop %v770
    %v772 = vmul.f32 %v770, %v771
    %v773 = vsub.f32 1.0, %v772
    %v774 = vmul.f32 %v771, %v773
    %v775 = vadd.f32 %v771, %v774
    %vm776 = vweird.f32 %v770
    %vm777 = vweird.f32 %v771
    %vm778 = vmor %vm776, %vm777
    %v779 = vsel %vm778, %v771, %v775
    %v780 = vand.u32 2147483647, %v770
    %vm781 = vcmp.eq.f32.partialorder %v780, 8.507059e+37
    %v782 = vand.u32 %v770, 2147483648
    %v783 = vor.u32 1.1754944e-38, %v782
    %v784 = vsel %vm781, %v783, %v779
    %v785 = vmul.f32 1.0, %v784
    %v786 = vmul.f32 %v761, %v494
    %v787 = vmul.f32 %v739, %v764
    %v788 = vadd.f32 %v786, %v787
    %v789 = vtanh.pop %v788
    %v790 = vmul.f32 %v785, %v789
    %791 = vst [vmem:[#allocation5] sm:$0x3] %v790
    %s792 = scalar_lea.vmem [#allocation4], 8
    %v793 = vld [vmem:[%s792] sm:$0xff]
    %v794 = vpack.c.bf16 %v790, %v790
    %795 = vmatpush.bf16.msra.mxu0 %v621
    %796 = vmatpush.bf16.msra.mxu0 %v617
    %797 = vmatpush.bf16.msra.mxu0 %v613
    %798 = vmatpush.bf16.msra.mxu0 %v609
    %799 = vmatpush.bf16.msra.mxu0 %v605
    %800 = vmatpush.bf16.msra.mxu0 %v601
    %801 = vmatpush.bf16.msra.mxu0 %v597
    %802 = vmatpush.bf16.msra.mxu0 %v593
    %803 = vmatmul.bf16.gmra.mxu0 %v794
    %v804 = vpop.f32.mrf.mxu0
    %v805 = vadd.f32 0.0, %v804
    %v806 = vpop.f32.mrf.mxu0
    %807 = vdwg.mxu0
    %808 = vmatpush.bf16.msra.mxu0 %v622
    %809 = vmatpush.bf16.msra.mxu0 %v618
    %810 = vmatpush.bf16.msra.mxu0 %v614
    %811 = vmatpush.bf16.msra.mxu0 %v610
    %812 = vmatpush.bf16.msra.mxu0 %v606
    %813 = vmatpush.bf16.msra.mxu0 %v602
    %814 = vmatpush.bf16.msra.mxu0 %v598
    %815 = vmatpush.bf16.msra.mxu0 %v594
    %816 = vmatmul.bf16.gmra.mxu0 %v794
    %v817 = vpop.f32.mrf.mxu0
    %v818 = vadd.f32 0.0, %v817
    %v819 = vpop.f32.mrf.mxu0
    %820 = vdwg.mxu0
    %821 = vmatpush.bf16.msra.mxu0 %v623
    %822 = vmatpush.bf16.msra.mxu0 %v619
    %823 = vmatpush.bf16.msra.mxu0 %v615
    %824 = vmatpush.bf16.msra.mxu0 %v611
    %825 = vmatpush.bf16.msra.mxu0 %v607
    %826 = vmatpush.bf16.msra.mxu0 %v603
    %827 = vmatpush.bf16.msra.mxu0 %v599
    %828 = vmatpush.bf16.msra.mxu0 %v595
    %829 = vmatmul.bf16.gmra.mxu0 %v794
    %v830 = vpop.f32.mrf.mxu0
    %v831 = vadd.f32 0.0, %v830
    %v832 = vpop.f32.mrf.mxu0
    %833 = vdwg.mxu0
    %834 = vmatpush.bf16.msra.mxu0 %v624
    %835 = vmatpush.bf16.msra.mxu0 %v620
    %836 = vmatpush.bf16.msra.mxu0 %v616
    %837 = vmatpush.bf16.msra.mxu0 %v612
    %838 = vmatpush.bf16.msra.mxu0 %v608
    %839 = vmatpush.bf16.msra.mxu0 %v604
    %840 = vmatpush.bf16.msra.mxu0 %v600
    %841 = vmatpush.bf16.msra.mxu0 %v596
    %842 = vmatmul.bf16.gmra.mxu0 %v794
    %v843 = vpop.f32.mrf.mxu0
    %v844 = vadd.f32 0.0, %v843
    %v845 = vpop.f32.mrf.mxu0
    %846 = vdwg.mxu0
    %v851 = vrot.slane %v818, 6
    %v852 = vrot.slane %v831, 4
    %v853 = vrot.slane %v844, 2
    %v854 = vsel %vm320, %v805, %v851
    %v855 = vsel %vm322, %v852, %v853
    %v856 = vsel %vm324, %v854, %v855
    %v858 = vadd.f32 %v793, %v856
    %v859 = vxor.u32 %v858, 2147483648
    %v860 = vmul.f32 %v859, 1.442695
    %v861 = vpow.pop %v860
    %v862 = vadd.f32 %v861, 1.0
    %v863 = vrcp.pop %v862
    %v864 = vmul.f32 %v862, %v863
    %v865 = vsub.f32 1.0, %v864
    %v866 = vmul.f32 %v863, %v865
    %v867 = vadd.f32 %v863, %v866
    %vm868 = vweird.f32 %v862
    %vm869 = vweird.f32 %v863
    %vm870 = vmor %vm868, %vm869
    %v871 = vsel %vm870, %v863, %v867
    %v872 = vand.u32 2147483647, %v862
    %vm873 = vcmp.eq.f32.partialorder %v872, 8.507059e+37
    %v874 = vand.u32 %v862, 2147483648
    %v875 = vor.u32 1.1754944e-38, %v874
    %v876 = vsel %vm873, %v875, %v871
    %v877 = vmul.f32 1.0, %v876
    %v879 = vrot.slane %v858, 2
    %v881 = vxor.u32 %v879, 2147483648
    %v882 = vmul.f32 %v881, 1.442695
    %v883 = vpow.pop %v882
    %v884 = vadd.f32 %v883, 1.0
    %v885 = vrcp.pop %v884
    %v886 = vmul.f32 %v884, %v885
    %v887 = vsub.f32 1.0, %v886
    %v888 = vmul.f32 %v885, %v887
    %v889 = vadd.f32 %v885, %v888
    %vm890 = vweird.f32 %v884
    %vm891 = vweird.f32 %v885
    %vm892 = vmor %vm890, %vm891
    %v893 = vsel %vm892, %v885, %v889
    %v894 = vand.u32 2147483647, %v884
    %vm895 = vcmp.eq.f32.partialorder %v894, 8.507059e+37
    %v896 = vand.u32 %v884, 2147483648
    %v897 = vor.u32 1.1754944e-38, %v896
    %v898 = vsel %vm895, %v897, %v893
    %v899 = vmul.f32 1.0, %v898
    %v900 = vrot.slane %v858, 4
    %v902 = vtanh.pop %v900
    %v903 = vrot.slane %v858, 6
    %v905 = vxor.u32 %v903, 2147483648
    %v906 = vmul.f32 %v905, 1.442695
    %v907 = vpow.pop %v906
    %v908 = vadd.f32 %v907, 1.0
    %v909 = vrcp.pop %v908
    %v910 = vmul.f32 %v908, %v909
    %v911 = vsub.f32 1.0, %v910
    %v912 = vmul.f32 %v909, %v911
    %v913 = vadd.f32 %v909, %v912
    %vm914 = vweird.f32 %v908
    %vm915 = vweird.f32 %v909
    %vm916 = vmor %vm914, %vm915
    %v917 = vsel %vm916, %v909, %v913
    %v918 = vand.u32 2147483647, %v908
    %vm919 = vcmp.eq.f32.partialorder %v918, 8.507059e+37
    %v920 = vand.u32 %v908, 2147483648
    %v921 = vor.u32 1.1754944e-38, %v920
    %v922 = vsel %vm919, %v921, %v917
    %v923 = vmul.f32 1.0, %v922
    %v924 = vmul.f32 %v899, %v788
    %v925 = vmul.f32 %v877, %v902
    %v926 = vadd.f32 %v924, %v925
    %v927 = vtanh.pop %v926
    %v928 = vmul.f32 %v923, %v927
    %s929 = scalar_lea.vmem [#allocation5], 2
    %930 = vst [vmem:[%s929] sm:$0x3] %v928
    %s931 = scalar_lea.vmem [#allocation4], 16
    %v932 = vld [vmem:[%s931] sm:$0xff]
    %v933 = vpack.c.bf16 %v928, %v928
    %934 = vmatpush.bf16.msra.mxu0 %v621
    %935 = vmatpush.bf16.msra.mxu0 %v617
    %936 = vmatpush.bf16.msra.mxu0 %v613
    %937 = vmatpush.bf16.msra.mxu0 %v609
    %938 = vmatpush.bf16.msra.mxu0 %v605
    %939 = vmatpush.bf16.msra.mxu0 %v601
    %940 = vmatpush.bf16.msra.mxu0 %v597
    %941 = vmatpush.bf16.msra.mxu0 %v593
    %942 = vmatmul.bf16.gmra.mxu0 %v933
    %v943 = vpop.f32.mrf.mxu0
    %v944 = vadd.f32 0.0, %v943
    %v945 = vpop.f32.mrf.mxu0
    %946 = vdwg.mxu0
    %947 = vmatpush.bf16.msra.mxu0 %v622
    %948 = vmatpush.bf16.msra.mxu0 %v618
    %949 = vmatpush.bf16.msra.mxu0 %v614
    %950 = vmatpush.bf16.msra.mxu0 %v610
    %951 = vmatpush.bf16.msra.mxu0 %v606
    %952 = vmatpush.bf16.msra.mxu0 %v602
    %953 = vmatpush.bf16.msra.mxu0 %v598
    %954 = vmatpush.bf16.msra.mxu0 %v594
    %955 = vmatmul.bf16.gmra.mxu0 %v933
    %v956 = vpop.f32.mrf.mxu0
    %v957 = vadd.f32 0.0, %v956
    %v958 = vpop.f32.mrf.mxu0
    %959 = vdwg.mxu0
    %960 = vmatpush.bf16.msra.mxu0 %v623
    %961 = vmatpush.bf16.msra.mxu0 %v619
    %962 = vmatpush.bf16.msra.mxu0 %v615
    %963 = vmatpush.bf16.msra.mxu0 %v611
    %964 = vmatpush.bf16.msra.mxu0 %v607
    %965 = vmatpush.bf16.msra.mxu0 %v603
    %966 = vmatpush.bf16.msra.mxu0 %v599
    %967 = vmatpush.bf16.msra.mxu0 %v595
    %968 = vmatmul.bf16.gmra.mxu0 %v933
    %v969 = vpop.f32.mrf.mxu0
    %v970 = vadd.f32 0.0, %v969
    %v971 = vpop.f32.mrf.mxu0
    %972 = vdwg.mxu0
    %973 = vmatpush.bf16.msra.mxu0 %v624
    %974 = vmatpush.bf16.msra.mxu0 %v620
    %975 = vmatpush.bf16.msra.mxu0 %v616
    %976 = vmatpush.bf16.msra.mxu0 %v612
    %977 = vmatpush.bf16.msra.mxu0 %v608
    %978 = vmatpush.bf16.msra.mxu0 %v604
    %979 = vmatpush.bf16.msra.mxu0 %v600
    %980 = vmatpush.bf16.msra.mxu0 %v596
    %981 = vmatmul.bf16.gmra.mxu0 %v933
    %v982 = vpop.f32.mrf.mxu0
    %v983 = vadd.f32 0.0, %v982
    %v984 = vpop.f32.mrf.mxu0
    %985 = vdwg.mxu0
    %v990 = vrot.slane %v957, 6
    %v991 = vrot.slane %v970, 4
    %v992 = vrot.slane %v983, 2
    %v993 = vsel %vm320, %v944, %v990
    %v994 = vsel %vm322, %v991, %v992
    %v995 = vsel %vm324, %v993, %v994
    %v997 = vadd.f32 %v932, %v995
    %v998 = vxor.u32 %v997, 2147483648
    %v999 = vmul.f32 %v998, 1.442695
    %v1000 = vpow.pop %v999
    %v1001 = vadd.f32 %v1000, 1.0
    %v1002 = vrcp.pop %v1001
    %v1003 = vmul.f32 %v1001, %v1002
    %v1004 = vsub.f32 1.0, %v1003
    %v1005 = vmul.f32 %v1002, %v1004
    %v1006 = vadd.f32 %v1002, %v1005
    %vm1007 = vweird.f32 %v1001
    %vm1008 = vweird.f32 %v1002
    %vm1009 = vmor %vm1007, %vm1008
    %v1010 = vsel %vm1009, %v1002, %v1006
    %v1011 = vand.u32 2147483647, %v1001
    %vm1012 = vcmp.eq.f32.partialorder %v1011, 8.507059e+37
    %v1013 = vand.u32 %v1001, 2147483648
    %v1014 = vor.u32 1.1754944e-38, %v1013
    %v1015 = vsel %vm1012, %v1014, %v1010
    %v1016 = vmul.f32 1.0, %v1015
    %v1018 = vrot.slane %v997, 2
    %v1020 = vxor.u32 %v1018, 2147483648
    %v1021 = vmul.f32 %v1020, 1.442695
    %v1022 = vpow.pop %v1021
    %v1023 = vadd.f32 %v1022, 1.0
    %v1024 = vrcp.pop %v1023
    %v1025 = vmul.f32 %v1023, %v1024
    %v1026 = vsub.f32 1.0, %v1025
    %v1027 = vmul.f32 %v1024, %v1026
    %v1028 = vadd.f32 %v1024, %v1027
    %vm1029 = vweird.f32 %v1023
    %vm1030 = vweird.f32 %v1024
    %vm1031 = vmor %vm1029, %vm1030
    %v1032 = vsel %vm1031, %v1024, %v1028
    %v1033 = vand.u32 2147483647, %v1023
    %vm1034 = vcmp.eq.f32.partialorder %v1033, 8.507059e+37
    %v1035 = vand.u32 %v1023, 2147483648
    %v1036 = vor.u32 1.1754944e-38, %v1035
    %v1037 = vsel %vm1034, %v1036, %v1032
    %v1038 = vmul.f32 1.0, %v1037
    %v1039 = vrot.slane %v997, 4
    %v1041 = vtanh.pop %v1039
    %v1042 = vrot.slane %v997, 6
    %v1044 = vxor.u32 %v1042, 2147483648
    %v1045 = vmul.f32 %v1044, 1.442695
    %v1046 = vpow.pop %v1045
    %v1047 = vadd.f32 %v1046, 1.0
    %v1048 = vrcp.pop %v1047
    %v1049 = vmul.f32 %v1047, %v1048
    %v1050 = vsub.f32 1.0, %v1049
    %v1051 = vmul.f32 %v1048, %v1050
    %v1052 = vadd.f32 %v1048, %v1051
    %vm1053 = vweird.f32 %v1047
    %vm1054 = vweird.f32 %v1048
    %vm1055 = vmor %vm1053, %vm1054
    %v1056 = vsel %vm1055, %v1048, %v1052
    %v1057 = vand.u32 2147483647, %v1047
    %vm1058 = vcmp.eq.f32.partialorder %v1057, 8.507059e+37
    %v1059 = vand.u32 %v1047, 2147483648
    %v1060 = vor.u32 1.1754944e-38, %v1059
    %v1061 = vsel %vm1058, %v1060, %v1056
    %v1062 = vmul.f32 1.0, %v1061
    %v1063 = vmul.f32 %v1038, %v926
    %v1064 = vmul.f32 %v1016, %v1041
    %v1065 = vadd.f32 %v1063, %v1064
    %v1066 = vtanh.pop %v1065
    %v1067 = vmul.f32 %v1062, %v1066
    %s1068 = scalar_lea.vmem [#allocation5], 4
    %1069 = vst [vmem:[%s1068] sm:$0x3] %v1067
    %s1070 = scalar_lea.vmem [#allocation4], 24
    %v1071 = vld [vmem:[%s1070] sm:$0xff]
    %v1072 = vpack.c.bf16 %v1067, %v1067
    %1073 = vmatpush.bf16.msra.mxu0 %v621
    %1074 = vmatpush.bf16.msra.mxu0 %v617
    %1075 = vmatpush.bf16.msra.mxu0 %v613
    %1076 = vmatpush.bf16.msra.mxu0 %v609
    %1077 = vmatpush.bf16.msra.mxu0 %v605
    %1078 = vmatpush.bf16.msra.mxu0 %v601
    %1079 = vmatpush.bf16.msra.mxu0 %v597
    %1080 = vmatpush.bf16.msra.mxu0 %v593
    %1081 = vmatmul.bf16.gmra.mxu0 %v1072
    %v1082 = vpop.f32.mrf.mxu0
    %v1083 = vadd.f32 0.0, %v1082
    %v1084 = vpop.f32.mrf.mxu0
    %1085 = vdwg.mxu0
    %1086 = vmatpush.bf16.msra.mxu0 %v622
    %1087 = vmatpush.bf16.msra.mxu0 %v618
    %1088 = vmatpush.bf16.msra.mxu0 %v614
    %1089 = vmatpush.bf16.msra.mxu0 %v610
    %1090 = vmatpush.bf16.msra.mxu0 %v606
    %1091 = vmatpush.bf16.msra.mxu0 %v602
    %1092 = vmatpush.bf16.msra.mxu0 %v598
    %1093 = vmatpush.bf16.msra.mxu0 %v594
    %1094 = vmatmul.bf16.gmra.mxu0 %v1072
    %v1095 = vpop.f32.mrf.mxu0
    %v1096 = vadd.f32 0.0, %v1095
    %v1097 = vpop.f32.mrf.mxu0
    %1098 = vdwg.mxu0
    %1099 = vmatpush.bf16.msra.mxu0 %v623
    %1100 = vmatpush.bf16.msra.mxu0 %v619
    %1101 = vmatpush.bf16.msra.mxu0 %v615
    %1102 = vmatpush.bf16.msra.mxu0 %v611
    %1103 = vmatpush.bf16.msra.mxu0 %v607
    %1104 = vmatpush.bf16.msra.mxu0 %v603
    %1105 = vmatpush.bf16.msra.mxu0 %v599
    %1106 = vmatpush.bf16.msra.mxu0 %v595
    %1107 = vmatmul.bf16.gmra.mxu0 %v1072
    %v1108 = vpop.f32.mrf.mxu0
    %v1109 = vadd.f32 0.0, %v1108
    %v1110 = vpop.f32.mrf.mxu0
    %1111 = vdwg.mxu0
    %1112 = vmatpush.bf16.msra.mxu0 %v624
    %1113 = vmatpush.bf16.msra.mxu0 %v620
    %1114 = vmatpush.bf16.msra.mxu0 %v616
    %1115 = vmatpush.bf16.msra.mxu0 %v612
    %1116 = vmatpush.bf16.msra.mxu0 %v608
    %1117 = vmatpush.bf16.msra.mxu0 %v604
    %1118 = vmatpush.bf16.msra.mxu0 %v600
    %1119 = vmatpush.bf16.msra.mxu0 %v596
    %1120 = vmatmul.bf16.gmra.mxu0 %v1072
    %v1121 = vpop.f32.mrf.mxu0
    %v1122 = vadd.f32 0.0, %v1121
    %v1123 = vpop.f32.mrf.mxu0
    %1124 = vdwg.mxu0
    %v1129 = vrot.slane %v1096, 6
    %v1130 = vrot.slane %v1109, 4
    %v1131 = vrot.slane %v1122, 2
    %v1132 = vsel %vm320, %v1083, %v1129
    %v1133 = vsel %vm322, %v1130, %v1131
    %v1134 = vsel %vm324, %v1132, %v1133
    %v1136 = vadd.f32 %v1071, %v1134
    %v1137 = vxor.u32 %v1136, 2147483648
    %v1138 = vmul.f32 %v1137, 1.442695
    %v1139 = vpow.pop %v1138
    %v1140 = vadd.f32 %v1139, 1.0
    %v1141 = vrcp.pop %v1140
    %v1142 = vmul.f32 %v1140, %v1141
    %v1143 = vsub.f32 1.0, %v1142
    %v1144 = vmul.f32 %v1141, %v1143
    %v1145 = vadd.f32 %v1141, %v1144
    %vm1146 = vweird.f32 %v1140
    %vm1147 = vweird.f32 %v1141
    %vm1148 = vmor %vm1146, %vm1147
    %v1149 = vsel %vm1148, %v1141, %v1145
    %v1150 = vand.u32 2147483647, %v1140
    %vm1151 = vcmp.eq.f32.partialorder %v1150, 8.507059e+37
    %v1152 = vand.u32 %v1140, 2147483648
    %v1153 = vor.u32 1.1754944e-38, %v1152
    %v1154 = vsel %vm1151, %v1153, %v1149
    %v1155 = vmul.f32 1.0, %v1154
    %v1157 = vrot.slane %v1136, 2
    %v1159 = vxor.u32 %v1157, 2147483648
    %v1160 = vmul.f32 %v1159, 1.442695
    %v1161 = vpow.pop %v1160
    %v1162 = vadd.f32 %v1161, 1.0
    %v1163 = vrcp.pop %v1162
    %v1164 = vmul.f32 %v1162, %v1163
    %v1165 = vsub.f32 1.0, %v1164
    %v1166 = vmul.f32 %v1163, %v1165
    %v1167 = vadd.f32 %v1163, %v1166
    %vm1168 = vweird.f32 %v1162
    %vm1169 = vweird.f32 %v1163
    %vm1170 = vmor %vm1168, %vm1169
    %v1171 = vsel %vm1170, %v1163, %v1167
    %v1172 = vand.u32 2147483647, %v1162
    %vm1173 = vcmp.eq.f32.partialorder %v1172, 8.507059e+37
    %v1174 = vand.u32 %v1162, 2147483648
    %v1175 = vor.u32 1.1754944e-38, %v1174
    %v1176 = vsel %vm1173, %v1175, %v1171
    %v1177 = vmul.f32 1.0, %v1176
    %v1178 = vrot.slane %v1136, 4
    %v1180 = vtanh.pop %v1178
    %v1181 = vrot.slane %v1136, 6
    %v1183 = vxor.u32 %v1181, 2147483648
    %v1184 = vmul.f32 %v1183, 1.442695
    %v1185 = vpow.pop %v1184
    %v1186 = vadd.f32 %v1185, 1.0
    %v1187 = vrcp.pop %v1186
    %v1188 = vmul.f32 %v1186, %v1187
    %v1189 = vsub.f32 1.0, %v1188
    %v1190 = vmul.f32 %v1187, %v1189
    %v1191 = vadd.f32 %v1187, %v1190
    %vm1192 = vweird.f32 %v1186
    %vm1193 = vweird.f32 %v1187
    %vm1194 = vmor %vm1192, %vm1193
    %v1195 = vsel %vm1194, %v1187, %v1191
    %v1196 = vand.u32 2147483647, %v1186
    %vm1197 = vcmp.eq.f32.partialorder %v1196, 8.507059e+37
    %v1198 = vand.u32 %v1186, 2147483648
    %v1199 = vor.u32 1.1754944e-38, %v1198
    %v1200 = vsel %vm1197, %v1199, %v1195
    %v1201 = vmul.f32 1.0, %v1200
    %v1202 = vmul.f32 %v1177, %v1065
    %v1203 = vmul.f32 %v1155, %v1180
    %v1204 = vadd.f32 %v1202, %v1203
    %v1205 = vtanh.pop %v1204
    %v1206 = vmul.f32 %v1201, %v1205
    %s1207 = scalar_lea.vmem [#allocation5], 6
    %1208 = vst [vmem:[%s1207] sm:$0x3] %v1206
    %s1209 = scalar_lea.vmem [#allocation4], 32
    %v1210 = vld [vmem:[%s1209] sm:$0xff]
    %v1211 = vpack.c.bf16 %v1206, %v1206
    %1212 = vmatpush.bf16.msra.mxu0 %v621
    %1213 = vmatpush.bf16.msra.mxu0 %v617
    %1214 = vmatpush.bf16.msra.mxu0 %v613
    %1215 = vmatpush.bf16.msra.mxu0 %v609
    %1216 = vmatpush.bf16.msra.mxu0 %v605
    %1217 = vmatpush.bf16.msra.mxu0 %v601
    %1218 = vmatpush.bf16.msra.mxu0 %v597
    %1219 = vmatpush.bf16.msra.mxu0 %v593
    %1220 = vmatmul.bf16.gmra.mxu0 %v1211
    %v1221 = vpop.f32.mrf.mxu0
    %v1222 = vadd.f32 0.0, %v1221
    %v1223 = vpop.f32.mrf.mxu0
    %1224 = vdwg.mxu0
    %1225 = vmatpush.bf16.msra.mxu0 %v622
    %1226 = vmatpush.bf16.msra.mxu0 %v618
    %1227 = vmatpush.bf16.msra.mxu0 %v614
    %1228 = vmatpush.bf16.msra.mxu0 %v610
    %1229 = vmatpush.bf16.msra.mxu0 %v606
    %1230 = vmatpush.bf16.msra.mxu0 %v602
    %1231 = vmatpush.bf16.msra.mxu0 %v598
    %1232 = vmatpush.bf16.msra.mxu0 %v594
    %1233 = vmatmul.bf16.gmra.mxu0 %v1211
    %v1234 = vpop.f32.mrf.mxu0
    %v1235 = vadd.f32 0.0, %v1234
    %v1236 = vpop.f32.mrf.mxu0
    %1237 = vdwg.mxu0
    %1238 = vmatpush.bf16.msra.mxu0 %v623
    %1239 = vmatpush.bf16.msra.mxu0 %v619
    %1240 = vmatpush.bf16.msra.mxu0 %v615
    %1241 = vmatpush.bf16.msra.mxu0 %v611
    %1242 = vmatpush.bf16.msra.mxu0 %v607
    %1243 = vmatpush.bf16.msra.mxu0 %v603
    %1244 = vmatpush.bf16.msra.mxu0 %v599
    %1245 = vmatpush.bf16.msra.mxu0 %v595
    %1246 = vmatmul.bf16.gmra.mxu0 %v1211
    %v1247 = vpop.f32.mrf.mxu0
    %v1248 = vadd.f32 0.0, %v1247
    %v1249 = vpop.f32.mrf.mxu0
    %1250 = vdwg.mxu0
    %1251 = vmatpush.bf16.msra.mxu0 %v624
    %1252 = vmatpush.bf16.msra.mxu0 %v620
    %1253 = vmatpush.bf16.msra.mxu0 %v616
    %1254 = vmatpush.bf16.msra.mxu0 %v612
    %1255 = vmatpush.bf16.msra.mxu0 %v608
    %1256 = vmatpush.bf16.msra.mxu0 %v604
    %1257 = vmatpush.bf16.msra.mxu0 %v600
    %1258 = vmatpush.bf16.msra.mxu0 %v596
    %1259 = vmatmul.bf16.gmra.mxu0 %v1211
    %v1260 = vpop.f32.mrf.mxu0
    %v1261 = vadd.f32 0.0, %v1260
    %v1262 = vpop.f32.mrf.mxu0
    %1263 = vdwg.mxu0
    %v1268 = vrot.slane %v1235, 6
    %v1269 = vrot.slane %v1248, 4
    %v1270 = vrot.slane %v1261, 2
    %v1271 = vsel %vm320, %v1222, %v1268
    %v1272 = vsel %vm322, %v1269, %v1270
    %v1273 = vsel %vm324, %v1271, %v1272
    %v1275 = vadd.f32 %v1210, %v1273
    %v1276 = vxor.u32 %v1275, 2147483648
    %v1277 = vmul.f32 %v1276, 1.442695
    %v1278 = vpow.pop %v1277
    %v1279 = vadd.f32 %v1278, 1.0
    %v1280 = vrcp.pop %v1279
    %v1281 = vmul.f32 %v1279, %v1280
    %v1282 = vsub.f32 1.0, %v1281
    %v1283 = vmul.f32 %v1280, %v1282
    %v1284 = vadd.f32 %v1280, %v1283
    %vm1285 = vweird.f32 %v1279
    %vm1286 = vweird.f32 %v1280
    %vm1287 = vmor %vm1285, %vm1286
    %v1288 = vsel %vm1287, %v1280, %v1284
    %v1289 = vand.u32 2147483647, %v1279
    %vm1290 = vcmp.eq.f32.partialorder %v1289, 8.507059e+37
    %v1291 = vand.u32 %v1279, 2147483648
    %v1292 = vor.u32 1.1754944e-38, %v1291
    %v1293 = vsel %vm1290, %v1292, %v1288
    %v1294 = vmul.f32 1.0, %v1293
    %v1296 = vrot.slane %v1275, 2
    %v1298 = vxor.u32 %v1296, 2147483648
    %v1299 = vmul.f32 %v1298, 1.442695
    %v1300 = vpow.pop %v1299
    %v1301 = vadd.f32 %v1300, 1.0
    %v1302 = vrcp.pop %v1301
    %v1303 = vmul.f32 %v1301, %v1302
    %v1304 = vsub.f32 1.0, %v1303
    %v1305 = vmul.f32 %v1302, %v1304
    %v1306 = vadd.f32 %v1302, %v1305
    %vm1307 = vweird.f32 %v1301
    %vm1308 = vweird.f32 %v1302
    %vm1309 = vmor %vm1307, %vm1308
    %v1310 = vsel %vm1309, %v1302, %v1306
    %v1311 = vand.u32 2147483647, %v1301
    %vm1312 = vcmp.eq.f32.partialorder %v1311, 8.507059e+37
    %v1313 = vand.u32 %v1301, 2147483648
    %v1314 = vor.u32 1.1754944e-38, %v1313
    %v1315 = vsel %vm1312, %v1314, %v1310
    %v1316 = vmul.f32 1.0, %v1315
    %v1317 = vrot.slane %v1275, 4
    %v1319 = vtanh.pop %v1317
    %v1320 = vrot.slane %v1275, 6
    %v1322 = vxor.u32 %v1320, 2147483648
    %v1323 = vmul.f32 %v1322, 1.442695
    %v1324 = vpow.pop %v1323
    %v1325 = vadd.f32 %v1324, 1.0
    %v1326 = vrcp.pop %v1325
    %v1327 = vmul.f32 %v1325, %v1326
    %v1328 = vsub.f32 1.0, %v1327
    %v1329 = vmul.f32 %v1326, %v1328
    %v1330 = vadd.f32 %v1326, %v1329
    %vm1331 = vweird.f32 %v1325
    %vm1332 = vweird.f32 %v1326
    %vm1333 = vmor %vm1331, %vm1332
    %v1334 = vsel %vm1333, %v1326, %v1330
    %v1335 = vand.u32 2147483647, %v1325
    %vm1336 = vcmp.eq.f32.partialorder %v1335, 8.507059e+37
    %v1337 = vand.u32 %v1325, 2147483648
    %v1338 = vor.u32 1.1754944e-38, %v1337
    %v1339 = vsel %vm1336, %v1338, %v1334
    %v1340 = vmul.f32 1.0, %v1339
    %v1341 = vmul.f32 %v1316, %v1204
    %v1342 = vmul.f32 %v1294, %v1319
    %v1343 = vadd.f32 %v1341, %v1342
    %v1344 = vtanh.pop %v1343
    %v1345 = vmul.f32 %v1340, %v1344
    %s1346 = scalar_lea.vmem [#allocation5], 8
    %1347 = vst [vmem:[%s1346] sm:$0x3] %v1345
    %s1348 = scalar_lea.vmem [#allocation4], 40
    %v1349 = vld [vmem:[%s1348] sm:$0xff]
    %v1350 = vpack.c.bf16 %v1345, %v1345
    %1351 = vmatpush.bf16.msra.mxu0 %v621
    %1352 = vmatpush.bf16.msra.mxu0 %v617
    %1353 = vmatpush.bf16.msra.mxu0 %v613
    %1354 = vmatpush.bf16.msra.mxu0 %v609
    %1355 = vmatpush.bf16.msra.mxu0 %v605
    %1356 = vmatpush.bf16.msra.mxu0 %v601
    %1357 = vmatpush.bf16.msra.mxu0 %v597
    %1358 = vmatpush.bf16.msra.mxu0 %v593
    %1359 = vmatmul.bf16.gmra.mxu0 %v1350
    %v1360 = vpop.f32.mrf.mxu0
    %v1361 = vadd.f32 0.0, %v1360
    %v1362 = vpop.f32.mrf.mxu0
    %1363 = vdwg.mxu0
    %1364 = vmatpush.bf16.msra.mxu0 %v622
    %1365 = vmatpush.bf16.msra.mxu0 %v618
    %1366 = vmatpush.bf16.msra.mxu0 %v614
    %1367 = vmatpush.bf16.msra.mxu0 %v610
    %1368 = vmatpush.bf16.msra.mxu0 %v606
    %1369 = vmatpush.bf16.msra.mxu0 %v602
    %1370 = vmatpush.bf16.msra.mxu0 %v598
    %1371 = vmatpush.bf16.msra.mxu0 %v594
    %1372 = vmatmul.bf16.gmra.mxu0 %v1350
    %v1373 = vpop.f32.mrf.mxu0
    %v1374 = vadd.f32 0.0, %v1373
    %v1375 = vpop.f32.mrf.mxu0
    %1376 = vdwg.mxu0
    %1377 = vmatpush.bf16.msra.mxu0 %v623
    %1378 = vmatpush.bf16.msra.mxu0 %v619
    %1379 = vmatpush.bf16.msra.mxu0 %v615
    %1380 = vmatpush.bf16.msra.mxu0 %v611
    %1381 = vmatpush.bf16.msra.mxu0 %v607
    %1382 = vmatpush.bf16.msra.mxu0 %v603
    %1383 = vmatpush.bf16.msra.mxu0 %v599
    %1384 = vmatpush.bf16.msra.mxu0 %v595
    %1385 = vmatmul.bf16.gmra.mxu0 %v1350
    %v1386 = vpop.f32.mrf.mxu0
    %v1387 = vadd.f32 0.0, %v1386
    %v1388 = vpop.f32.mrf.mxu0
    %1389 = vdwg.mxu0
    %1390 = vmatpush.bf16.msra.mxu0 %v624
    %1391 = vmatpush.bf16.msra.mxu0 %v620
    %1392 = vmatpush.bf16.msra.mxu0 %v616
    %1393 = vmatpush.bf16.msra.mxu0 %v612
    %1394 = vmatpush.bf16.msra.mxu0 %v608
    %1395 = vmatpush.bf16.msra.mxu0 %v604
    %1396 = vmatpush.bf16.msra.mxu0 %v600
    %1397 = vmatpush.bf16.msra.mxu0 %v596
    %1398 = vmatmul.bf16.gmra.mxu0 %v1350
    %v1399 = vpop.f32.mrf.mxu0
    %v1400 = vadd.f32 0.0, %v1399
    %v1401 = vpop.f32.mrf.mxu0
    %1402 = vdwg.mxu0
    %v1407 = vrot.slane %v1374, 6
    %v1408 = vrot.slane %v1387, 4
    %v1409 = vrot.slane %v1400, 2
    %v1410 = vsel %vm320, %v1361, %v1407
    %v1411 = vsel %vm322, %v1408, %v1409
    %v1412 = vsel %vm324, %v1410, %v1411
    %v1414 = vadd.f32 %v1349, %v1412
    %v1415 = vxor.u32 %v1414, 2147483648
    %v1416 = vmul.f32 %v1415, 1.442695
    %v1417 = vpow.pop %v1416
    %v1418 = vadd.f32 %v1417, 1.0
    %v1419 = vrcp.pop %v1418
    %v1420 = vmul.f32 %v1418, %v1419
    %v1421 = vsub.f32 1.0, %v1420
    %v1422 = vmul.f32 %v1419, %v1421
    %v1423 = vadd.f32 %v1419, %v1422
    %vm1424 = vweird.f32 %v1418
    %vm1425 = vweird.f32 %v1419
    %vm1426 = vmor %vm1424, %vm1425
    %v1427 = vsel %vm1426, %v1419, %v1423
    %v1428 = vand.u32 2147483647, %v1418
    %vm1429 = vcmp.eq.f32.partialorder %v1428, 8.507059e+37
    %v1430 = vand.u32 %v1418, 2147483648
    %v1431 = vor.u32 1.1754944e-38, %v1430
    %v1432 = vsel %vm1429, %v1431, %v1427
    %v1433 = vmul.f32 1.0, %v1432
    %v1435 = vrot.slane %v1414, 2
    %v1437 = vxor.u32 %v1435, 2147483648
    %v1438 = vmul.f32 %v1437, 1.442695
    %v1439 = vpow.pop %v1438
    %v1440 = vadd.f32 %v1439, 1.0
    %v1441 = vrcp.pop %v1440
    %v1442 = vmul.f32 %v1440, %v1441
    %v1443 = vsub.f32 1.0, %v1442
    %v1444 = vmul.f32 %v1441, %v1443
    %v1445 = vadd.f32 %v1441, %v1444
    %vm1446 = vweird.f32 %v1440
    %vm1447 = vweird.f32 %v1441
    %vm1448 = vmor %vm1446, %vm1447
    %v1449 = vsel %vm1448, %v1441, %v1445
    %v1450 = vand.u32 2147483647, %v1440
    %vm1451 = vcmp.eq.f32.partialorder %v1450, 8.507059e+37
    %v1452 = vand.u32 %v1440, 2147483648
    %v1453 = vor.u32 1.1754944e-38, %v1452
    %v1454 = vsel %vm1451, %v1453, %v1449
    %v1455 = vmul.f32 1.0, %v1454
    %v1456 = vrot.slane %v1414, 4
    %v1458 = vtanh.pop %v1456
    %v1459 = vrot.slane %v1414, 6
    %v1461 = vxor.u32 %v1459, 2147483648
    %v1462 = vmul.f32 %v1461, 1.442695
    %v1463 = vpow.pop %v1462
    %v1464 = vadd.f32 %v1463, 1.0
    %v1465 = vrcp.pop %v1464
    %v1466 = vmul.f32 %v1464, %v1465
    %v1467 = vsub.f32 1.0, %v1466
    %v1468 = vmul.f32 %v1465, %v1467
    %v1469 = vadd.f32 %v1465, %v1468
    %vm1470 = vweird.f32 %v1464
    %vm1471 = vweird.f32 %v1465
    %vm1472 = vmor %vm1470, %vm1471
    %v1473 = vsel %vm1472, %v1465, %v1469
    %v1474 = vand.u32 2147483647, %v1464
    %vm1475 = vcmp.eq.f32.partialorder %v1474, 8.507059e+37
    %v1476 = vand.u32 %v1464, 2147483648
    %v1477 = vor.u32 1.1754944e-38, %v1476
    %v1478 = vsel %vm1475, %v1477, %v1473
    %v1479 = vmul.f32 1.0, %v1478
    %v1480 = vmul.f32 %v1455, %v1343
    %v1481 = vmul.f32 %v1433, %v1458
    %v1482 = vadd.f32 %v1480, %v1481
    %v1483 = vtanh.pop %v1482
    %v1484 = vmul.f32 %v1479, %v1483
    %s1485 = scalar_lea.vmem [#allocation5], 10
    %1486 = vst [vmem:[%s1485] sm:$0x3] %v1484
    %s1487 = scalar_lea.vmem [#allocation4], 48
    %v1488 = vld [vmem:[%s1487] sm:$0xff]
    %v1489 = vpack.c.bf16 %v1484, %v1484
    %1490 = vmatpush.bf16.msra.mxu0 %v621
    %1491 = vmatpush.bf16.msra.mxu0 %v617
    %1492 = vmatpush.bf16.msra.mxu0 %v613
    %1493 = vmatpush.bf16.msra.mxu0 %v609
    %1494 = vmatpush.bf16.msra.mxu0 %v605
    %1495 = vmatpush.bf16.msra.mxu0 %v601
    %1496 = vmatpush.bf16.msra.mxu0 %v597
    %1497 = vmatpush.bf16.msra.mxu0 %v593
    %1498 = vmatmul.bf16.gmra.mxu0 %v1489
    %v1499 = vpop.f32.mrf.mxu0
    %v1500 = vadd.f32 0.0, %v1499
    %v1501 = vpop.f32.mrf.mxu0
    %1502 = vdwg.mxu0
    %1503 = vmatpush.bf16.msra.mxu0 %v622
    %1504 = vmatpush.bf16.msra.mxu0 %v618
    %1505 = vmatpush.bf16.msra.mxu0 %v614
    %1506 = vmatpush.bf16.msra.mxu0 %v610
    %1507 = vmatpush.bf16.msra.mxu0 %v606
    %1508 = vmatpush.bf16.msra.mxu0 %v602
    %1509 = vmatpush.bf16.msra.mxu0 %v598
    %1510 = vmatpush.bf16.msra.mxu0 %v594
    %1511 = vmatmul.bf16.gmra.mxu0 %v1489
    %v1512 = vpop.f32.mrf.mxu0
    %v1513 = vadd.f32 0.0, %v1512
    %v1514 = vpop.f32.mrf.mxu0
    %1515 = vdwg.mxu0
    %1516 = vmatpush.bf16.msra.mxu0 %v623
    %1517 = vmatpush.bf16.msra.mxu0 %v619
    %1518 = vmatpush.bf16.msra.mxu0 %v615
    %1519 = vmatpush.bf16.msra.mxu0 %v611
    %1520 = vmatpush.bf16.msra.mxu0 %v607
    %1521 = vmatpush.bf16.msra.mxu0 %v603
    %1522 = vmatpush.bf16.msra.mxu0 %v599
    %1523 = vmatpush.bf16.msra.mxu0 %v595
    %1524 = vmatmul.bf16.gmra.mxu0 %v1489
    %v1525 = vpop.f32.mrf.mxu0
    %v1526 = vadd.f32 0.0, %v1525
    %v1527 = vpop.f32.mrf.mxu0
    %1528 = vdwg.mxu0
    %1529 = vmatpush.bf16.msra.mxu0 %v624
    %1530 = vmatpush.bf16.msra.mxu0 %v620
    %1531 = vmatpush.bf16.msra.mxu0 %v616
    %1532 = vmatpush.bf16.msra.mxu0 %v612
    %1533 = vmatpush.bf16.msra.mxu0 %v608
    %1534 = vmatpush.bf16.msra.mxu0 %v604
    %1535 = vmatpush.bf16.msra.mxu0 %v600
    %1536 = vmatpush.bf16.msra.mxu0 %v596
    %1537 = vmatmul.bf16.gmra.mxu0 %v1489
    %v1538 = vpop.f32.mrf.mxu0
    %v1539 = vadd.f32 0.0, %v1538
    %v1540 = vpop.f32.mrf.mxu0
    %1541 = vdwg.mxu0
    %v1546 = vrot.slane %v1513, 6
    %v1547 = vrot.slane %v1526, 4
    %v1548 = vrot.slane %v1539, 2
    %v1549 = vsel %vm320, %v1500, %v1546
    %v1550 = vsel %vm322, %v1547, %v1548
    %v1551 = vsel %vm324, %v1549, %v1550
    %v1553 = vadd.f32 %v1488, %v1551
    %v1554 = vxor.u32 %v1553, 2147483648
    %v1555 = vmul.f32 %v1554, 1.442695
    %v1556 = vpow.pop %v1555
    %v1557 = vadd.f32 %v1556, 1.0
    %v1558 = vrcp.pop %v1557
    %v1559 = vmul.f32 %v1557, %v1558
    %v1560 = vsub.f32 1.0, %v1559
    %v1561 = vmul.f32 %v1558, %v1560
    %v1562 = vadd.f32 %v1558, %v1561
    %vm1563 = vweird.f32 %v1557
    %vm1564 = vweird.f32 %v1558
    %vm1565 = vmor %vm1563, %vm1564
    %v1566 = vsel %vm1565, %v1558, %v1562
    %v1567 = vand.u32 2147483647, %v1557
    %vm1568 = vcmp.eq.f32.partialorder %v1567, 8.507059e+37
    %v1569 = vand.u32 %v1557, 2147483648
    %v1570 = vor.u32 1.1754944e-38, %v1569
    %v1571 = vsel %vm1568, %v1570, %v1566
    %v1572 = vmul.f32 1.0, %v1571
    %v1574 = vrot.slane %v1553, 2
    %v1576 = vxor.u32 %v1574, 2147483648
    %v1577 = vmul.f32 %v1576, 1.442695
    %v1578 = vpow.pop %v1577
    %v1579 = vadd.f32 %v1578, 1.0
    %v1580 = vrcp.pop %v1579
    %v1581 = vmul.f32 %v1579, %v1580
    %v1582 = vsub.f32 1.0, %v1581
    %v1583 = vmul.f32 %v1580, %v1582
    %v1584 = vadd.f32 %v1580, %v1583
    %vm1585 = vweird.f32 %v1579
    %vm1586 = vweird.f32 %v1580
    %vm1587 = vmor %vm1585, %vm1586
    %v1588 = vsel %vm1587, %v1580, %v1584
    %v1589 = vand.u32 2147483647, %v1579
    %vm1590 = vcmp.eq.f32.partialorder %v1589, 8.507059e+37
    %v1591 = vand.u32 %v1579, 2147483648
    %v1592 = vor.u32 1.1754944e-38, %v1591
    %v1593 = vsel %vm1590, %v1592, %v1588
    %v1594 = vmul.f32 1.0, %v1593
    %v1595 = vrot.slane %v1553, 4
    %v1597 = vtanh.pop %v1595
    %v1598 = vrot.slane %v1553, 6
    %v1600 = vxor.u32 %v1598, 2147483648
    %v1601 = vmul.f32 %v1600, 1.442695
    %v1602 = vpow.pop %v1601
    %v1603 = vadd.f32 %v1602, 1.0
    %v1604 = vrcp.pop %v1603
    %v1605 = vmul.f32 %v1603, %v1604
    %v1606 = vsub.f32 1.0, %v1605
    %v1607 = vmul.f32 %v1604, %v1606
    %v1608 = vadd.f32 %v1604, %v1607
    %vm1609 = vweird.f32 %v1603
    %vm1610 = vweird.f32 %v1604
    %vm1611 = vmor %vm1609, %vm1610
    %v1612 = vsel %vm1611, %v1604, %v1608
    %v1613 = vand.u32 2147483647, %v1603
    %vm1614 = vcmp.eq.f32.partialorder %v1613, 8.507059e+37
    %v1615 = vand.u32 %v1603, 2147483648
    %v1616 = vor.u32 1.1754944e-38, %v1615
    %v1617 = vsel %vm1614, %v1616, %v1612
    %v1618 = vmul.f32 1.0, %v1617
    %v1619 = vmul.f32 %v1594, %v1482
    %v1620 = vmul.f32 %v1572, %v1597
    %v1621 = vadd.f32 %v1619, %v1620
    %v1622 = vtanh.pop %v1621
    %v1623 = vmul.f32 %v1618, %v1622
    %s1624 = scalar_lea.vmem [#allocation5], 12
    %1625 = vst [vmem:[%s1624] sm:$0x3] %v1623
    %s1626 = scalar_lea.vmem [#allocation4], 56
    %v1627 = vld [vmem:[%s1626] sm:$0xff]
    %v1628 = vpack.c.bf16 %v1623, %v1623
    %1629 = vmatpush.bf16.msra.mxu0 %v621
    %1630 = vmatpush.bf16.msra.mxu0 %v617
    %1631 = vmatpush.bf16.msra.mxu0 %v613
    %1632 = vmatpush.bf16.msra.mxu0 %v609
    %1633 = vmatpush.bf16.msra.mxu0 %v605
    %1634 = vmatpush.bf16.msra.mxu0 %v601
    %1635 = vmatpush.bf16.msra.mxu0 %v597
    %1636 = vmatpush.bf16.msra.mxu0 %v593
    %1637 = vmatmul.bf16.gmra.mxu0 %v1628
    %v1638 = vpop.f32.mrf.mxu0
    %v1639 = vadd.f32 0.0, %v1638
    %v1640 = vpop.f32.mrf.mxu0
    %1641 = vdwg.mxu0
    %1642 = vmatpush.bf16.msra.mxu0 %v622
    %1643 = vmatpush.bf16.msra.mxu0 %v618
    %1644 = vmatpush.bf16.msra.mxu0 %v614
    %1645 = vmatpush.bf16.msra.mxu0 %v610
    %1646 = vmatpush.bf16.msra.mxu0 %v606
    %1647 = vmatpush.bf16.msra.mxu0 %v602
    %1648 = vmatpush.bf16.msra.mxu0 %v598
    %1649 = vmatpush.bf16.msra.mxu0 %v594
    %1650 = vmatmul.bf16.gmra.mxu0 %v1628
    %v1651 = vpop.f32.mrf.mxu0
    %v1652 = vadd.f32 0.0, %v1651
    %v1653 = vpop.f32.mrf.mxu0
    %1654 = vdwg.mxu0
    %1655 = vmatpush.bf16.msra.mxu0 %v623
    %1656 = vmatpush.bf16.msra.mxu0 %v619
    %1657 = vmatpush.bf16.msra.mxu0 %v615
    %1658 = vmatpush.bf16.msra.mxu0 %v611
    %1659 = vmatpush.bf16.msra.mxu0 %v607
    %1660 = vmatpush.bf16.msra.mxu0 %v603
    %1661 = vmatpush.bf16.msra.mxu0 %v599
    %1662 = vmatpush.bf16.msra.mxu0 %v595
    %1663 = vmatmul.bf16.gmra.mxu0 %v1628
    %v1664 = vpop.f32.mrf.mxu0
    %v1665 = vadd.f32 0.0, %v1664
    %v1666 = vpop.f32.mrf.mxu0
    %1667 = vdwg.mxu0
    %1668 = vmatpush.bf16.msra.mxu0 %v624
    %1669 = vmatpush.bf16.msra.mxu0 %v620
    %1670 = vmatpush.bf16.msra.mxu0 %v616
    %1671 = vmatpush.bf16.msra.mxu0 %v612
    %1672 = vmatpush.bf16.msra.mxu0 %v608
    %1673 = vmatpush.bf16.msra.mxu0 %v604
    %1674 = vmatpush.bf16.msra.mxu0 %v600
    %1675 = vmatpush.bf16.msra.mxu0 %v596
    %1676 = vmatmul.bf16.gmra.mxu0 %v1628
    %v1677 = vpop.f32.mrf.mxu0
    %v1678 = vadd.f32 0.0, %v1677
    %v1679 = vpop.f32.mrf.mxu0
    %1680 = vdwg.mxu0
    %v1685 = vrot.slane %v1652, 6
    %v1686 = vrot.slane %v1665, 4
    %v1687 = vrot.slane %v1678, 2
    %v1688 = vsel %vm320, %v1639, %v1685
    %v1689 = vsel %vm322, %v1686, %v1687
    %v1690 = vsel %vm324, %v1688, %v1689
    %v1692 = vadd.f32 %v1627, %v1690
    %v1693 = vxor.u32 %v1692, 2147483648
    %v1694 = vmul.f32 %v1693, 1.442695
    %v1695 = vpow.pop %v1694
    %v1696 = vadd.f32 %v1695, 1.0
    %v1697 = vrcp.pop %v1696
    %v1698 = vmul.f32 %v1696, %v1697
    %v1699 = vsub.f32 1.0, %v1698
    %v1700 = vmul.f32 %v1697, %v1699
    %v1701 = vadd.f32 %v1697, %v1700
    %vm1702 = vweird.f32 %v1696
    %vm1703 = vweird.f32 %v1697
    %vm1704 = vmor %vm1702, %vm1703
    %v1705 = vsel %vm1704, %v1697, %v1701
    %v1706 = vand.u32 2147483647, %v1696
    %vm1707 = vcmp.eq.f32.partialorder %v1706, 8.507059e+37
    %v1708 = vand.u32 %v1696, 2147483648
    %v1709 = vor.u32 1.1754944e-38, %v1708
    %v1710 = vsel %vm1707, %v1709, %v1705
    %v1711 = vmul.f32 1.0, %v1710
    %v1713 = vrot.slane %v1692, 2
    %v1715 = vxor.u32 %v1713, 2147483648
    %v1716 = vmul.f32 %v1715, 1.442695
    %v1717 = vpow.pop %v1716
    %v1718 = vadd.f32 %v1717, 1.0
    %v1719 = vrcp.pop %v1718
    %v1720 = vmul.f32 %v1718, %v1719
    %v1721 = vsub.f32 1.0, %v1720
    %v1722 = vmul.f32 %v1719, %v1721
    %v1723 = vadd.f32 %v1719, %v1722
    %vm1724 = vweird.f32 %v1718
    %vm1725 = vweird.f32 %v1719
    %vm1726 = vmor %vm1724, %vm1725
    %v1727 = vsel %vm1726, %v1719, %v1723
    %v1728 = vand.u32 2147483647, %v1718
    %vm1729 = vcmp.eq.f32.partialorder %v1728, 8.507059e+37
    %v1730 = vand.u32 %v1718, 2147483648
    %v1731 = vor.u32 1.1754944e-38, %v1730
    %v1732 = vsel %vm1729, %v1731, %v1727
    %v1733 = vmul.f32 1.0, %v1732
    %v1734 = vrot.slane %v1692, 4
    %v1736 = vtanh.pop %v1734
    %v1737 = vrot.slane %v1692, 6
    %v1739 = vxor.u32 %v1737, 2147483648
    %v1740 = vmul.f32 %v1739, 1.442695
    %v1741 = vpow.pop %v1740
    %v1742 = vadd.f32 %v1741, 1.0
    %v1743 = vrcp.pop %v1742
    %v1744 = vmul.f32 %v1742, %v1743
    %v1745 = vsub.f32 1.0, %v1744
    %v1746 = vmul.f32 %v1743, %v1745
    %v1747 = vadd.f32 %v1743, %v1746
    %vm1748 = vweird.f32 %v1742
    %vm1749 = vweird.f32 %v1743
    %vm1750 = vmor %vm1748, %vm1749
    %v1751 = vsel %vm1750, %v1743, %v1747
    %v1752 = vand.u32 2147483647, %v1742
    %vm1753 = vcmp.eq.f32.partialorder %v1752, 8.507059e+37
    %v1754 = vand.u32 %v1742, 2147483648
    %v1755 = vor.u32 1.1754944e-38, %v1754
    %v1756 = vsel %vm1753, %v1755, %v1751
    %v1757 = vmul.f32 1.0, %v1756
    %v1758 = vmul.f32 %v1733, %v1621
    %v1759 = vmul.f32 %v1711, %v1736
    %v1760 = vadd.f32 %v1758, %v1759
    %v1761 = vtanh.pop %v1760
    %v1762 = vmul.f32 %v1757, %v1761
    %s1763 = scalar_lea.vmem [#allocation5], 14
    %1764 = vst [vmem:[%s1763] sm:$0x3] %v1762
    %1765 = vst [vmem:[#allocation2] sm:$0x3] %v1762
    %1766 = vst [vmem:[#allocation3] sm:$0x3] %v1760
    %1767 = vst [vmem:[%s13] sm:$0x3] %v1762
    %1768 = vst [vmem:[%s14] sm:$0x3] %v1760
  $region53: #{rnn_decoder_forward.1} parent=0 // pred_fallthru
    _
  %v1769 = vld [vmem:[#allocation5] sm:$0x3]
  %v1770 = vld [vmem:[#allocation5 + $0x2] sm:$0x3]
  %v1771 = vld [vmem:[#allocation5 + $0x4] sm:$0x3]
  %v1772 = vld [vmem:[#allocation5 + $0x6] sm:$0x3]
  %v1773 = vld [vmem:[#allocation5 + $0x8] sm:$0x3]
  %v1774 = vld [vmem:[#allocation5 + $0xa] sm:$0x3]
  %v1775 = vld [vmem:[#allocation5 + $0xc] sm:$0x3]
  %v1776 = vld [vmem:[#allocation5 + $0xe] sm:$0x3]
  %v1777 = vrot.slane %v1771, 4
  %v1778 = vsel %vm365, %v1777, %v1769
  %v1780 = vunpack.c.l.s4 1983009808
  %v1781 = vunpack.c.0.s8 %v1780
  %v1782 = vperm.slane %v1778, %v1781
  %v1783 = vrot.slane %v1772, 4
  %v1784 = vsel %vm365, %v1783, %v1770
  %v1786 = vunpack.c.l.s4 1983009808
  %v1787 = vunpack.c.0.s8 %v1786
  %v1788 = vperm.slane %v1784, %v1787
  %v1789 = vrot.slane %v1775, 4
  %v1790 = vsel %vm365, %v1789, %v1773
  %v1792 = vunpack.c.l.s4 1983009808
  %v1793 = vunpack.c.0.s8 %v1792
  %v1794 = vperm.slane %v1790, %v1793
  %v1795 = vrot.slane %v1776, 4
  %v1796 = vsel %vm365, %v1795, %v1774
  %v1798 = vunpack.c.l.s4 1983009808
  %v1799 = vunpack.c.0.s8 %v1798
  %v1800 = vperm.slane %v1796, %v1799
  %v1801 = vrot.slane %v1788, 4
  %v1802 = vsel %vm365, %v1801, %v1782
  %v1804 = vunpack.c.l.s4 1934713408
  %v1805 = vunpack.c.0.s8 %v1804
  %v1806 = vperm.slane %v1802, %v1805
  %v1807 = vrot.slane %v1800, 4
  %v1808 = vsel %vm365, %v1807, %v1794
  %v1810 = vunpack.c.l.s4 1934713408
  %v1811 = vunpack.c.0.s8 %v1810
  %v1812 = vperm.slane %v1808, %v1811
  %v1813 = vrot.slane %v1812, 4
  %v1814 = vsel %vm365, %v1813, %v1806
  %v1815 = vrot.slane %v1806, 4
  %v1816 = vsel %vm365, %v1812, %v1815
  %v1817 = vpack.c.bf16 %v1816, %v1814
  %v1818 = vld [vmem:[%s1] sm:$0xf]
  %v1819 = vld [vmem:[%s1 + $0x4] sm:$0xf]
  %v1820 = vld [vmem:[%s1 + $0x8] sm:$0xf]
  %v1821 = vld [vmem:[%s1 + $0xc] sm:$0xf]
  %v1822 = vld [vmem:[%s1 + $0x10] sm:$0xf]
  %v1823 = vld [vmem:[%s1 + $0x14] sm:$0xf]
  %v1824 = vld [vmem:[%s1 + $0x18] sm:$0xf]
  %v1825 = vld [vmem:[%s1 + $0x1c] sm:$0xf]
  %v1826 = vld [vmem:[%s1 + $0x20] sm:$0xf]
  %v1827 = vld [vmem:[%s1 + $0x24] sm:$0xf]
  %v1828 = vld [vmem:[%s1 + $0x28] sm:$0xf]
  %v1829 = vld [vmem:[%s1 + $0x2c] sm:$0xf]
  %v1830 = vld [vmem:[%s1 + $0x30] sm:$0xf]
  %v1831 = vld [vmem:[%s1 + $0x34] sm:$0xf]
  %v1832 = vld [vmem:[%s1 + $0x38] sm:$0xf]
  %v1833 = vld [vmem:[%s1 + $0x3c] sm:$0xf]
  %v1834 = vld [vmem:[%s1 + $0x40] sm:$0xf]
  %v1835 = vld [vmem:[%s1 + $0x44] sm:$0xf]
  %v1836 = vld [vmem:[%s1 + $0x48] sm:$0xf]
  %v1837 = vld [vmem:[%s1 + $0x4c] sm:$0xf]
  %v1838 = vld [vmem:[%s1 + $0x50] sm:$0xf]
  %v1839 = vld [vmem:[%s1 + $0x54] sm:$0xf]
  %v1840 = vld [vmem:[%s1 + $0x58] sm:$0xf]
  %v1841 = vld [vmem:[%s1 + $0x5c] sm:$0xf]
  %v1842 = vld [vmem:[%s1 + $0x60] sm:$0xf]
  %v1843 = vld [vmem:[%s1 + $0x64] sm:$0xf]
  %v1844 = vld [vmem:[%s1 + $0x68] sm:$0xf]
  %v1845 = vld [vmem:[%s1 + $0x6c] sm:$0xf]
  %v1846 = vld [vmem:[%s1 + $0x70] sm:$0xf]
  %v1847 = vld [vmem:[%s1 + $0x74] sm:$0xf]
  %v1848 = vld [vmem:[%s1 + $0x78] sm:$0xf]
  %v1849 = vld [vmem:[%s1 + $0x7c] sm:$0xf]
  %v1850 = vld [vmem:[%s8] sm:$0xf]
  %v1851 = vld [vmem:[%s8 + $0x4] sm:$0xf]
  %v1852 = vld [vmem:[%s8 + $0x8] sm:$0xf]
  %v1853 = vld [vmem:[%s8 + $0xc] sm:$0xf]
  %v1854 = vld [vmem:[%s8 + $0x10] sm:$0xf]
  %v1855 = vld [vmem:[%s8 + $0x14] sm:$0xf]
  %v1856 = vld [vmem:[%s8 + $0x18] sm:$0xf]
  %v1857 = vld [vmem:[%s8 + $0x1c] sm:$0xf]
  %v1858 = vld [vmem:[%s8 + $0x20] sm:$0xf]
  %v1859 = vld [vmem:[%s8 + $0x24] sm:$0xf]
  %v1860 = vld [vmem:[%s8 + $0x28] sm:$0xf]
  %v1861 = vld [vmem:[%s8 + $0x2c] sm:$0xf]
  %v1862 = vld [vmem:[%s8 + $0x30] sm:$0xf]
  %v1863 = vld [vmem:[%s8 + $0x34] sm:$0xf]
  %v1864 = vld [vmem:[%s8 + $0x38] sm:$0xf]
  %v1865 = vld [vmem:[%s8 + $0x3c] sm:$0xf]
  %v1882 = vunpack.c.l.b16 %v1850
  %v1883 = vunpack.c.l.b16 %v1851
  %v1884 = vunpack.c.l.b16 %v1852
  %v1885 = vunpack.c.l.b16 %v1853
  %v1886 = vunpack.c.l.b16 %v1854
  %v1887 = vunpack.c.l.b16 %v1855
  %v1888 = vunpack.c.l.b16 %v1856
  %v1889 = vunpack.c.l.b16 %v1857
  %v1890 = vunpack.c.l.b16 %v1858
  %v1891 = vunpack.c.l.b16 %v1859
  %v1892 = vunpack.c.l.b16 %v1860
  %v1893 = vunpack.c.l.b16 %v1861
  %v1894 = vunpack.c.l.b16 %v1862
  %v1895 = vunpack.c.l.b16 %v1863
  %v1896 = vunpack.c.l.b16 %v1864
  %v1897 = vunpack.c.l.b16 %v1865
  %v1898 = vpack.c.b16 %v1883, %v1882
  %v1899 = vpack.c.b16 %v1885, %v1884
  %v1900 = vpack.c.b16 %v1887, %v1886
  %v1901 = vpack.c.b16 %v1889, %v1888
  %v1902 = vpack.c.b16 %v1891, %v1890
  %v1903 = vpack.c.b16 %v1893, %v1892
  %v1904 = vpack.c.b16 %v1895, %v1894
  %v1905 = vpack.c.b16 %v1897, %v1896
  %1914 = vmatpush.bf16.msra.mxu0 %v1905
  %1915 = vmatpush.bf16.msra.mxu0 %v1904
  %1916 = vmatpush.bf16.msra.mxu0 %v1903
  %1917 = vmatpush.bf16.msra.mxu0 %v1902
  %1918 = vmatpush.bf16.msra.mxu0 %v1901
  %1919 = vmatpush.bf16.msra.mxu0 %v1900
  %1920 = vmatpush.bf16.msra.mxu0 %v1899
  %1921 = vmatpush.bf16.msra.mxu0 %v1898
  %1922 = vmatmul.bf16.gmra.mxu0 %v1817
  %v1923 = vpop.f32.mrf.mxu0
  %v1924 = vadd.f32 0.0, %v1923
  %v1925 = vpop.f32.mrf.mxu0
  %v1926 = vadd.f32 0.0, %v1925
  %1927 = vdwg.mxu0
  %v1928 = vpack.c.bf16 %v1924, %v1924
  %v1929 = vpack.c.bf16 %v1926, %v1926
  %v1930 = vld [vmem:[%s2] sm:$0x3]
  %v1932 = vrot.slane %v1930, 1
  %v1933 = vperm.slane %v1930, 0
  %v1934 = vperm.slane %v1932, 0
  %v1953 = vunpack.c.l.b16 %v1818
  %v1954 = vunpack.c.l.b16 %v1819
  %v1955 = vunpack.c.l.b16 %v1820
  %v1956 = vunpack.c.l.b16 %v1821
  %v1957 = vunpack.c.l.b16 %v1822
  %v1958 = vunpack.c.l.b16 %v1823
  %v1959 = vunpack.c.l.b16 %v1824
  %v1960 = vunpack.c.l.b16 %v1825
  %v1961 = vunpack.c.l.b16 %v1826
  %v1962 = vunpack.c.l.b16 %v1827
  %v1963 = vunpack.c.l.b16 %v1828
  %v1964 = vunpack.c.l.b16 %v1829
  %v1965 = vunpack.c.l.b16 %v1830
  %v1966 = vunpack.c.l.b16 %v1831
  %v1967 = vunpack.c.l.b16 %v1832
  %v1968 = vunpack.c.l.b16 %v1833
  %v1969 = vpack.c.b16 %v1954, %v1953
  %v1970 = vpack.c.b16 %v1956, %v1955
  %v1971 = vpack.c.b16 %v1958, %v1957
  %v1972 = vpack.c.b16 %v1960, %v1959
  %v1973 = vpack.c.b16 %v1962, %v1961
  %v1974 = vpack.c.b16 %v1964, %v1963
  %v1975 = vpack.c.b16 %v1966, %v1965
  %v1976 = vpack.c.b16 %v1968, %v1967
  %1985 = vmatpush.bf16.xpose.msra.mxu0 %v1976
  %1986 = vmatpush.bf16.xpose.msra.mxu0 %v1975
  %1987 = vmatpush.bf16.xpose.msra.mxu0 %v1974
  %1988 = vmatpush.bf16.xpose.msra.mxu0 %v1973
  %1989 = vmatpush.bf16.xpose.msra.mxu0 %v1972
  %1990 = vmatpush.bf16.xpose.msra.mxu0 %v1971
  %1991 = vmatpush.bf16.xpose.msra.mxu0 %v1970
  %1992 = vmatpush.bf16.xpose.msra.mxu0 %v1969
  %1993 = vmatmul.bf16.gmra.mxu0 %v1928
  %v1994 = vpop.f32.mrf.mxu0
  %v1995 = vadd.f32 %v1933, %v1994
  %v1996 = vpop.f32.mrf.mxu0
  %1997 = vdwg.mxu0
  %v2014 = vunpack.c.l.b16 %v1834
  %v2015 = vunpack.c.l.b16 %v1835
  %v2016 = vunpack.c.l.b16 %v1836
  %v2017 = vunpack.c.l.b16 %v1837
  %v2018 = vunpack.c.l.b16 %v1838
  %v2019 = vunpack.c.l.b16 %v1839
  %v2020 = vunpack.c.l.b16 %v1840
  %v2021 = vunpack.c.l.b16 %v1841
  %v2022 = vunpack.c.l.b16 %v1842
  %v2023 = vunpack.c.l.b16 %v1843
  %v2024 = vunpack.c.l.b16 %v1844
  %v2025 = vunpack.c.l.b16 %v1845
  %v2026 = vunpack.c.l.b16 %v1846
  %v2027 = vunpack.c.l.b16 %v1847
  %v2028 = vunpack.c.l.b16 %v1848
  %v2029 = vunpack.c.l.b16 %v1849
  %v2030 = vpack.c.b16 %v2015, %v2014
  %v2031 = vpack.c.b16 %v2017, %v2016
  %v2032 = vpack.c.b16 %v2019, %v2018
  %v2033 = vpack.c.b16 %v2021, %v2020
  %v2034 = vpack.c.b16 %v2023, %v2022
  %v2035 = vpack.c.b16 %v2025, %v2024
  %v2036 = vpack.c.b16 %v2027, %v2026
  %v2037 = vpack.c.b16 %v2029, %v2028
  %2046 = vmatpush.bf16.xpose.msra.mxu0 %v2037
  %2047 = vmatpush.bf16.xpose.msra.mxu0 %v2036
  %2048 = vmatpush.bf16.xpose.msra.mxu0 %v2035
  %2049 = vmatpush.bf16.xpose.msra.mxu0 %v2034
  %2050 = vmatpush.bf16.xpose.msra.mxu0 %v2033
  %2051 = vmatpush.bf16.xpose.msra.mxu0 %v2032
  %2052 = vmatpush.bf16.xpose.msra.mxu0 %v2031
  %2053 = vmatpush.bf16.xpose.msra.mxu0 %v2030
  %2054 = vmatmul.bf16.gmra.mxu0 %v1929
  %v2055 = vpop.f32.mrf.mxu0
  %v2056 = vadd.f32 %v1934, %v2055
  %v2057 = vpop.f32.mrf.mxu0
  %2058 = vdwg.mxu0
  %2059 = vmax.xlane.f32.xlu0 %v1995
  %v2060 = vpop.xlane.xlu0 %2059
  %2061 = vmax.xlane.f32.xlu0 %v2056
  %v2062 = vpop.xlane.xlu0 %2061
  %v2063 = vsub.f32 %v1995, %v2060
  %v2064 = vsub.f32 %v2056, %v2062
  %v2065 = vmul.f32 %v2063, 1.442695
  %v2066 = vpow.pop %v2065
  %v2067 = vmul.f32 %v2064, 1.442695
  %v2068 = vpow.pop %v2067
  %2069 = vadd.xlane.f32.xlu0 %v2066
  %v2070 = vpop.xlane.xlu0 %2069
  %2071 = vadd.xlane.f32.xlu0 %v2068
  %v2072 = vpop.xlane.xlu0 %2071
  %v2073 = vrcp.pop %v2070
  %v2074 = vrcp.pop %v2072
  %v2075 = vmul.f32 %v2066, %v2073
  %v2076 = vmul.f32 %v2068, %v2074
  %v2077 = vpack.c.bf16 %v2075, %v2075
  %v2078 = vpack.c.bf16 %v2076, %v2076
  %2079 = vmatpush.bf16.msra.mxu0 %v1976
  %2080 = vmatpush.bf16.msra.mxu0 %v1975
  %2081 = vmatpush.bf16.msra.mxu0 %v1974
  %2082 = vmatpush.bf16.msra.mxu0 %v1973
  %2083 = vmatpush.bf16.msra.mxu0 %v1972
  %2084 = vmatpush.bf16.msra.mxu0 %v1971
  %2085 = vmatpush.bf16.msra.mxu0 %v1970
  %2086 = vmatpush.bf16.msra.mxu0 %v1969
  %2087 = vmatmul.bf16.gmra.mxu0 %v2077
  %v2088 = vpop.f32.mrf.mxu0
  %v2089 = vadd.f32 0.0, %v2088
  %v2090 = vpop.f32.mrf.mxu0
  %2091 = vdwg.mxu0
  %2092 = vmatpush.bf16.msra.mxu0 %v2037
  %2093 = vmatpush.bf16.msra.mxu0 %v2036
  %2094 = vmatpush.bf16.msra.mxu0 %v2035
  %2095 = vmatpush.bf16.msra.mxu0 %v2034
  %2096 = vmatpush.bf16.msra.mxu0 %v2033
  %2097 = vmatpush.bf16.msra.mxu0 %v2032
  %2098 = vmatpush.bf16.msra.mxu0 %v2031
  %2099 = vmatpush.bf16.msra.mxu0 %v2030
  %2100 = vmatmul.bf16.gmra.mxu0 %v2078
  %v2101 = vpop.f32.mrf.mxu0
  %v2102 = vadd.f32 0.0, %v2101
  %v2103 = vpop.f32.mrf.mxu0
  %2104 = vdwg.mxu0
  %v2105 = vpack.c.bf16 %v2102, %v2089
  %v2106 = vld [vmem:[%s9] sm:$0xf]
  %v2107 = vld [vmem:[%s9 + $0x4] sm:$0xf]
  %v2108 = vld [vmem:[%s9 + $0x8] sm:$0xf]
  %v2109 = vld [vmem:[%s9 + $0xc] sm:$0xf]
  %v2110 = vld [vmem:[%s9 + $0x10] sm:$0xf]
  %v2111 = vld [vmem:[%s9 + $0x14] sm:$0xf]
  %v2112 = vld [vmem:[%s9 + $0x18] sm:$0xf]
  %v2113 = vld [vmem:[%s9 + $0x1c] sm:$0xf]
  %v2114 = vld [vmem:[%s9 + $0x20] sm:$0xf]
  %v2115 = vld [vmem:[%s9 + $0x24] sm:$0xf]
  %v2116 = vld [vmem:[%s9 + $0x28] sm:$0xf]
  %v2117 = vld [vmem:[%s9 + $0x2c] sm:$0xf]
  %v2118 = vld [vmem:[%s9 + $0x30] sm:$0xf]
  %v2119 = vld [vmem:[%s9 + $0x34] sm:$0xf]
  %v2120 = vld [vmem:[%s9 + $0x38] sm:$0xf]
  %v2121 = vld [vmem:[%s9 + $0x3c] sm:$0xf]
  %v2122 = vld [vmem:[%s10] sm:$0xf]
  %v2123 = vld [vmem:[%s10 + $0x4] sm:$0xf]
  %v2124 = vld [vmem:[%s10 + $0x8] sm:$0xf]
  %v2125 = vld [vmem:[%s10 + $0xc] sm:$0xf]
  %v2126 = vld [vmem:[%s10 + $0x10] sm:$0xf]
  %v2127 = vld [vmem:[%s10 + $0x14] sm:$0xf]
  %v2128 = vld [vmem:[%s10 + $0x18] sm:$0xf]
  %v2129 = vld [vmem:[%s10 + $0x1c] sm:$0xf]
  %v2130 = vld [vmem:[%s10 + $0x20] sm:$0xf]
  %v2131 = vld [vmem:[%s10 + $0x24] sm:$0xf]
  %v2132 = vld [vmem:[%s10 + $0x28] sm:$0xf]
  %v2133 = vld [vmem:[%s10 + $0x2c] sm:$0xf]
  %v2134 = vld [vmem:[%s10 + $0x30] sm:$0xf]
  %v2135 = vld [vmem:[%s10 + $0x34] sm:$0xf]
  %v2136 = vld [vmem:[%s10 + $0x38] sm:$0xf]
  %v2137 = vld [vmem:[%s10 + $0x3c] sm:$0xf]
  %v2154 = vunpack.c.l.b16 %v2122
  %v2155 = vunpack.c.l.b16 %v2123
  %v2156 = vunpack.c.l.b16 %v2124
  %v2157 = vunpack.c.l.b16 %v2125
  %v2158 = vunpack.c.l.b16 %v2126
  %v2159 = vunpack.c.l.b16 %v2127
  %v2160 = vunpack.c.l.b16 %v2128
  %v2161 = vunpack.c.l.b16 %v2129
  %v2162 = vunpack.c.l.b16 %v2130
  %v2163 = vunpack.c.l.b16 %v2131
  %v2164 = vunpack.c.l.b16 %v2132
  %v2165 = vunpack.c.l.b16 %v2133
  %v2166 = vunpack.c.l.b16 %v2134
  %v2167 = vunpack.c.l.b16 %v2135
  %v2168 = vunpack.c.l.b16 %v2136
  %v2169 = vunpack.c.l.b16 %v2137
  %v2170 = vpack.c.b16 %v2155, %v2154
  %v2171 = vpack.c.b16 %v2157, %v2156
  %v2172 = vpack.c.b16 %v2159, %v2158
  %v2173 = vpack.c.b16 %v2161, %v2160
  %v2174 = vpack.c.b16 %v2163, %v2162
  %v2175 = vpack.c.b16 %v2165, %v2164
  %v2176 = vpack.c.b16 %v2167, %v2166
  %v2177 = vpack.c.b16 %v2169, %v2168
  %2186 = vmatpush.bf16.msra.mxu0 %v2177
  %2187 = vmatpush.bf16.msra.mxu0 %v2176
  %2188 = vmatpush.bf16.msra.mxu0 %v2175
  %2189 = vmatpush.bf16.msra.mxu0 %v2174
  %2190 = vmatpush.bf16.msra.mxu0 %v2173
  %2191 = vmatpush.bf16.msra.mxu0 %v2172
  %2192 = vmatpush.bf16.msra.mxu0 %v2171
  %2193 = vmatpush.bf16.msra.mxu0 %v2170
  %2194 = vmatmul.bf16.gmra.mxu0 %v1817
  %v2195 = vpop.f32.mrf.mxu0
  %v2196 = vadd.f32 0.0, %v2195
  %v2197 = vpop.f32.mrf.mxu0
  %v2198 = vadd.f32 0.0, %v2197
  %2199 = vdwg.mxu0
  %v2216 = vunpack.c.l.b16 %v2106
  %v2217 = vunpack.c.l.b16 %v2107
  %v2218 = vunpack.c.l.b16 %v2108
  %v2219 = vunpack.c.l.b16 %v2109
  %v2220 = vunpack.c.l.b16 %v2110
  %v2221 = vunpack.c.l.b16 %v2111
  %v2222 = vunpack.c.l.b16 %v2112
  %v2223 = vunpack.c.l.b16 %v2113
  %v2224 = vunpack.c.l.b16 %v2114
  %v2225 = vunpack.c.l.b16 %v2115
  %v2226 = vunpack.c.l.b16 %v2116
  %v2227 = vunpack.c.l.b16 %v2117
  %v2228 = vunpack.c.l.b16 %v2118
  %v2229 = vunpack.c.l.b16 %v2119
  %v2230 = vunpack.c.l.b16 %v2120
  %v2231 = vunpack.c.l.b16 %v2121
  %v2232 = vpack.c.b16 %v2217, %v2216
  %v2233 = vpack.c.b16 %v2219, %v2218
  %v2234 = vpack.c.b16 %v2221, %v2220
  %v2235 = vpack.c.b16 %v2223, %v2222
  %v2236 = vpack.c.b16 %v2225, %v2224
  %v2237 = vpack.c.b16 %v2227, %v2226
  %v2238 = vpack.c.b16 %v2229, %v2228
  %v2239 = vpack.c.b16 %v2231, %v2230
  %2248 = vmatpush.bf16.msra.mxu0 %v2239
  %2249 = vmatpush.bf16.msra.mxu0 %v2238
  %2250 = vmatpush.bf16.msra.mxu0 %v2237
  %2251 = vmatpush.bf16.msra.mxu0 %v2236
  %2252 = vmatpush.bf16.msra.mxu0 %v2235
  %2253 = vmatpush.bf16.msra.mxu0 %v2234
  %2254 = vmatpush.bf16.msra.mxu0 %v2233
  %2255 = vmatpush.bf16.msra.mxu0 %v2232
  %2256 = vmatmul.bf16.gmra.mxu0 %v2105
  %v2257 = vpop.f32.mrf.mxu0
  %v2258 = vadd.f32 %v2196, %v2257
  %v2259 = vpop.f32.mrf.mxu0
  %v2260 = vadd.f32 %v2198, %v2259
  %2261 = vdwg.mxu0
  %v2262 = vtanh.pop %v2258
  %v2263 = vtanh.pop %v2260
  %v2264 = vrot.slane %v2262, 4
  %v2265 = vsel %vm365, 0.0, %v2264
  %v2267 = vunpack.c.l.s4 1983009808
  %v2268 = vunpack.c.0.s8 %v2267
  %v2269 = vperm.slane %v2262, %v2268
  %v2271 = vunpack.c.l.s4 1983009808
  %v2272 = vunpack.c.0.s8 %v2271
  %v2273 = vperm.slane %v2265, %v2272
  %v2274 = vrot.slane %v2263, 4
  %v2275 = vsel %vm365, 0.0, %v2274
  %v2277 = vunpack.c.l.s4 1983009808
  %v2278 = vunpack.c.0.s8 %v2277
  %v2279 = vperm.slane %v2263, %v2278
  %v2281 = vunpack.c.l.s4 1983009808
  %v2282 = vunpack.c.0.s8 %v2281
  %v2283 = vperm.slane %v2275, %v2282
  %v2284 = vrot.slane %v2279, 4
  %v2285 = vsel %vm365, %v2284, %v2269
  %v2286 = vrot.slane %v2269, 4
  %v2287 = vsel %vm365, %v2279, %v2286
  %v2289 = vunpack.c.l.s4 1934713408
  %v2290 = vunpack.c.0.s8 %v2289
  %v2291 = vperm.slane %v2285, %v2290
  %v2293 = vunpack.c.l.s4 1934713408
  %v2294 = vunpack.c.0.s8 %v2293
  %v2295 = vperm.slane %v2287, %v2294
  %v2296 = vrot.slane %v2283, 4
  %v2297 = vsel %vm365, %v2296, %v2273
  %v2298 = vrot.slane %v2273, 4
  %v2299 = vsel %vm365, %v2283, %v2298
  %v2301 = vunpack.c.l.s4 1934713408
  %v2302 = vunpack.c.0.s8 %v2301
  %v2303 = vperm.slane %v2297, %v2302
  %v2305 = vunpack.c.l.s4 1934713408
  %v2306 = vunpack.c.0.s8 %v2305
  %v2307 = vperm.slane %v2299, %v2306
  %v2308 = vrot.slane %v2291, 4
  %v2309 = vsel %vm365, 0.0, %v2308
  %v2310 = vrot.slane %v2295, 4
  %v2311 = vsel %vm365, 0.0, %v2310
  %v2312 = vrot.slane %v2303, 4
  %v2313 = vsel %vm365, 0.0, %v2312
  %v2314 = vrot.slane %v2307, 4
  %v2315 = vsel %vm365, 0.0, %v2314
  %2316 = vst [vmem:[%s11] sm:$0x3] %v2291
  %2317 = vst [vmem:[%s11 + $0x2] sm:$0x3] %v2309
  %2318 = vst [vmem:[%s11 + $0x4] sm:$0x3] %v2295
  %2319 = vst [vmem:[%s11 + $0x6] sm:$0x3] %v2311
  %2320 = vst [vmem:[%s11 + $0x8] sm:$0x3] %v2303
  %2321 = vst [vmem:[%s11 + $0xa] sm:$0x3] %v2313
  %2322 = vst [vmem:[%s11 + $0xc] sm:$0x3] %v2307
  %2323 = vst [vmem:[%s11 + $0xe] sm:$0x3] %v2315
  %v2324 = vrot.slane %v2075, 4
  %v2325 = vsel %vm365, 0.0, %v2324
  %v2327 = vunpack.c.l.s4 1983009808
  %v2328 = vunpack.c.0.s8 %v2327
  %v2329 = vperm.slane %v2075, %v2328
  %v2331 = vunpack.c.l.s4 1983009808
  %v2332 = vunpack.c.0.s8 %v2331
  %v2333 = vperm.slane %v2325, %v2332
  %v2334 = vrot.slane %v2076, 4
  %v2335 = vsel %vm365, 0.0, %v2334
  %v2337 = vunpack.c.l.s4 1983009808
  %v2338 = vunpack.c.0.s8 %v2337
  %v2339 = vperm.slane %v2076, %v2338
  %v2341 = vunpack.c.l.s4 1983009808
  %v2342 = vunpack.c.0.s8 %v2341
  %v2343 = vperm.slane %v2335, %v2342
  %v2344 = vrot.slane %v2339, 4
  %v2345 = vsel %vm365, %v2344, %v2329
  %v2346 = vrot.slane %v2329, 4
  %v2347 = vsel %vm365, %v2339, %v2346
  %v2349 = vunpack.c.l.s4 1934713408
  %v2350 = vunpack.c.0.s8 %v2349
  %v2351 = vperm.slane %v2345, %v2350
  %v2353 = vunpack.c.l.s4 1934713408
  %v2354 = vunpack.c.0.s8 %v2353
  %v2355 = vperm.slane %v2347, %v2354
  %v2356 = vrot.slane %v2343, 4
  %v2357 = vsel %vm365, %v2356, %v2333
  %v2358 = vrot.slane %v2333, 4
  %v2359 = vsel %vm365, %v2343, %v2358
  %v2361 = vunpack.c.l.s4 1934713408
  %v2362 = vunpack.c.0.s8 %v2361
  %v2363 = vperm.slane %v2357, %v2362
  %v2365 = vunpack.c.l.s4 1934713408
  %v2366 = vunpack.c.0.s8 %v2365
  %v2367 = vperm.slane %v2359, %v2366
  %v2368 = vrot.slane %v2351, 4
  %v2369 = vsel %vm365, 0.0, %v2368
  %v2370 = vrot.slane %v2355, 4
  %v2371 = vsel %vm365, 0.0, %v2370
  %v2372 = vrot.slane %v2363, 4
  %v2373 = vsel %vm365, 0.0, %v2372
  %v2374 = vrot.slane %v2367, 4
  %v2375 = vsel %vm365, 0.0, %v2374
  %v2376 = vpack.c.bf16 %v2351, %v2351
  %v2377 = vpack.c.bf16 %v2369, %v2369
  %v2378 = vpack.c.bf16 %v2355, %v2355
  %v2379 = vpack.c.bf16 %v2371, %v2371
  %v2380 = vpack.c.bf16 %v2363, %v2363
  %v2381 = vpack.c.bf16 %v2373, %v2373
  %v2382 = vpack.c.bf16 %v2367, %v2367
  %v2383 = vpack.c.bf16 %v2375, %v2375
  %2384 = vst [vmem:[%s12] sm:$0x1] %v2376
  %2385 = vst [vmem:[%s12 + $0x1] sm:$0x1] %v2377
  %2386 = vst [vmem:[%s12 + $0x2] sm:$0x1] %v2378
  %2387 = vst [vmem:[%s12 + $0x3] sm:$0x1] %v2379
  %2388 = vst [vmem:[%s12 + $0x4] sm:$0x1] %v2380
  %2389 = vst [vmem:[%s12 + $0x5] sm:$0x1] %v2381
  %2390 = vst [vmem:[%s12 + $0x6] sm:$0x1] %v2382
  %2391 = vst [vmem:[%s12 + $0x7] sm:$0x1] %v2383
  // Predicated region
  $region54: #{rnn_decoder_forward.1} parent=0 // pred_check
    _
  $region55: #{rnn_decoder_forward.1} parent=0 // pred_check_branch
    %2393 = sbr.rel (0) target = $region57
  $region56: #{rnn_decoder_forward.1} parent=0 // pred_region
    _
  $region57: #{rnn_decoder_forward.1} parent=0 // pred_fallthru
    _
  // Predicated region
  $region58: #{rnn_decoder_forward.1} parent=0 // pred_check
    _
  $region59: #{rnn_decoder_forward.1} parent=0 // pred_check_branch
    %2395 = sbr.rel (0) target = $region61
  $region60: #{rnn_decoder_forward.1} parent=0 // pred_region
    _
  $region61: #{rnn_decoder_forward.1} parent=0 // pred_fallthru
    _
  // Predicated region
  $region62: #{rnn_decoder_forward.1} parent=0 // pred_check
    _
  $region63: #{rnn_decoder_forward.1} parent=0 // pred_check_branch
    %2397 = sbr.rel (0) target = $region65
  $region64: #{rnn_decoder_forward.1} parent=0 // pred_region
    _
  $region65: #{rnn_decoder_forward.1} parent=0 // pred_fallthru
    _
  // Predicated region
  $region66: #{rnn_decoder_forward.1} parent=0 // pred_check
    _
  $region67: #{rnn_decoder_forward.1} parent=0 // pred_check_branch
    %2399 = sbr.rel (0) target = $region69
  $region68: #{rnn_decoder_forward.1} parent=0 // pred_region
    _
  $region69: #{rnn_decoder_forward.1} parent=0 // pred_fallthru
    _
  // Predicated region
  $region70: #{rnn_decoder_forward.1} parent=0 // pred_check
    _
  $region71: #{rnn_decoder_forward.1} parent=0 // pred_check_branch
    %2401 = sbr.rel (0) target = $region73
  $region72: #{rnn_decoder_forward.1} parent=0 // pred_region
    _
  $region73: #{rnn_decoder_forward.1} parent=0 // pred_fallthru
    _
  // Predicated region
  $region74: #{rnn_decoder_forward.1} parent=0 // pred_check
    _
  $region75: #{rnn_decoder_forward.1} parent=0 // pred_check_branch
    %2403 = sbr.rel (0) target = $region77
  $region76: #{rnn_decoder_forward.1} parent=0 // pred_region
    _
  $region77: #{rnn_decoder_forward.1} parent=0 // pred_fallthru
    _
  // Predicated region
  $region78: #{rnn_decoder_forward.1} parent=0 // pred_check
    _
  $region79: #{rnn_decoder_forward.1} parent=0 // pred_check_branch
    %2405 = sbr.rel (0) target = $region81
  $region80: #{rnn_decoder_forward.1} parent=0 // pred_region
    _
  $region81: #{rnn_decoder_forward.1} parent=0 // pred_fallthru
    _
  // Predicated region
  $region82: #{rnn_decoder_forward.1} parent=0 // pred_check
    _
  $region83: #{rnn_decoder_forward.1} parent=0 // pred_check_branch
    %2407 = sbr.rel (0) target = $region85
  $region84: #{rnn_decoder_forward.1} parent=0 // pred_region
    _
  $region85: #{rnn_decoder_forward.1} parent=0 // pred_fallthru
    _

</llo_original>
